<compile_context>
chip_gen: v6e
topology: v6e:2x2x1
jax: 0.10.0
libtpu: 0.0.40
codegen_flags: <defaults>
</compile_context>

<pallas_src>
import functools

import jax
import jax.numpy as jnp
from jax.experimental import pallas as pl
from jax.experimental.pallas import tpu as pltpu

_EPS = 1e-5


# ----------------------------------------------------------------------------
# Fully-fused kernel: conv1 -> bn1 -> relu -> conv2 -> bn2 -> relu ->
#                     conv3 -> relu -> (bn3 folded) -> flatten ->
#                     fc (+bn3/bn4 folded) -> relu
#
# Layout inside the kernel:
#   x_ref : (B*75, 48)   rows = (q, b) with q = final position, cols = (j, c)
#   H1_i  : (B*75, 20)   layer-1 output at position p = 4q + i,  i in [0, 4)
#   H2_m  : (B*75, 100)  layer-2 output at position u = 2q + m,  m in [0, 2)
#   Z     : (B*75, 30)   layer-3 output (post-ReLU) at position r = q
#   f_ref : (B, 2250)    per-batch flatten, lane index = q*30 + c
# ----------------------------------------------------------------------------
def _model1_kernel(x_ref, w1_ref, b1_ref, w2_ref, b2_ref, w3_ref, b3_ref,
                   wf_ref, bf_ref, o_ref, z_ref, f_ref, *, batch):
    f32 = jnp.float32
    x = x_ref[...]                                         # (M, 48)

    # ---- layer1 (+bn1 folded) + ReLU : 4 output phases --------------------
    w1 = w1_ref[...]                                       # (12, 20), rows (k, c)
    b1 = b1_ref[...]                                       # (1, 20)
    h1 = []
    for i in range(4):
        z = jnp.dot(x[:, 12 * i:12 * i + 12], w1, preferred_element_type=f32)
        h1.append(jnp.maximum(z + b1, 0.0))                # (M, 20)

    # ---- layer2 (+bn2 folded) + ReLU : 2 output phases --------------------
    w2_0 = w2_ref[0]                                       # (20, 100)
    w2_1 = w2_ref[1]
    b2 = b2_ref[...]                                       # (1, 100)
    h2 = []
    for m in range(2):
        z = (jnp.dot(h1[2 * m], w2_0, preferred_element_type=f32)
             + jnp.dot(h1[2 * m + 1], w2_1, preferred_element_type=f32))
        h2.append(jnp.maximum(z + b2, 0.0))                # (M, 100)

    # ---- layer3 + ReLU (bn3 is folded into the fc weights) ----------------
    z3 = (jnp.dot(h2[0], w3_ref[0], preferred_element_type=f32)
          + jnp.dot(h2[1], w3_ref[1], preferred_element_type=f32)
          + b3_ref[...])
    z_ref[...] = jnp.maximum(z3, 0.0)                      # (M, 30), rows (q, b)

    # ---- flatten: f[b, q*30 + c] = z[(q, b), c]  (static slices only) -----
    for q in range(75):
        f_ref[:, q * 30:(q + 1) * 30] = z_ref[q * batch:(q + 1) * batch, :]

    # ---- fc (+bn3/bn4 folded) + ReLU --------------------------------------
    y = jnp.dot(f_ref[...], wf_ref[...], preferred_element_type=f32)
    o_ref[...] = jnp.maximum(y + bf_ref[...], 0.0)         # (B, 61)


# ----------------------------------------------------------------------------
# Parameter init (PyTorch defaults) and one-time packing / BN folding.
# ----------------------------------------------------------------------------
def init_params(key):
    def uniform(k, shape, bound):
        return jax.random.uniform(k, shape, jnp.float32, -bound, bound)

    ks = jax.random.split(key, 8)
    p = {}
    for name, (o, c, kk), kw, kb in [("1", (20, 6, 2), ks[0], ks[1]),
                                     ("2", (100, 20, 2), ks[2], ks[3]),
                                     ("3", (30, 100, 2), ks[4], ks[5])]:
        bound = 1.0 / (c * kk) ** 0.5
        p[f"w{name}"] = uniform(kw, (o, c, kk), bound)
        p[f"b{name}"] = uniform(kb, (o,), bound)
        p[f"g{name}"] = jnp.ones((o,), jnp.float32)    # bn gamma
        p[f"be{name}"] = jnp.zeros((o,), jnp.float32)  # bn beta
        p[f"m{name}"] = jnp.zeros((o,), jnp.float32)   # bn running_mean
        p[f"v{name}"] = jnp.ones((o,), jnp.float32)    # bn running_var
    bound = 1.0 / (30 * 75) ** 0.5
    p["wf"] = uniform(ks[6], (61, 30 * 75), bound)
    p["bf"] = uniform(ks[7], (61,), bound)
    p["g4"] = jnp.ones((61,), jnp.float32)
    p["be4"] = jnp.zeros((61,), jnp.float32)
    p["m4"] = jnp.zeros((61,), jnp.float32)
    p["v4"] = jnp.ones((61,), jnp.float32)
    return p


def _fold(gamma, beta, mean, var):
    s = gamma * jax.lax.rsqrt(var + _EPS)
    return s, beta - s * mean


def pack_params(p):
    """One-time (trace-time) weight packing + BatchNorm folding."""
    s1, t1 = _fold(p["g1"], p["be1"], p["m1"], p["v1"])
    s2, t2 = _fold(p["g2"], p["be2"], p["m2"], p["v2"])
    s3, t3 = _fold(p["g3"], p["be3"], p["m3"], p["v3"])
    s4, t4 = _fold(p["g4"], p["be4"], p["m4"], p["v4"])

    # conv1 (20,6,2) -> (12,20), row order (k, c); bn1 folded in.
    w1p = jnp.transpose(p["w1"], (2, 1, 0)).reshape(12, 20) * s1[None, :]
    b1f = (p["b1"] * s1 + t1).reshape(1, 20)
    # conv2 (100,20,2) -> (2,20,100) = (k, c, o); bn2 folded in.
    w2p = jnp.transpose(p["w2"], (2, 1, 0)) * s2[None, None, :]
    b2f = (p["b2"] * s2 + t2).reshape(1, 100)
    # conv3 (30,100,2) -> (2,100,30); ReLU precedes bn3, so keep raw.
    w3p = jnp.transpose(p["w3"], (2, 1, 0))
    b3 = p["b3"].reshape(1, 30)
    # fc: fold bn3 (applied before fc) and bn4 (applied after fc); permute
    # columns from PyTorch's (c*75 + q) to the kernel's (q*30 + c) order.
    wr = p["wf"].reshape(61, 30, 75)                     # [n, c, q]
    wfp = jnp.transpose(wr, (2, 1, 0))                   # [q, c, n]
    wfp = wfp * s3[None, :, None] * s4[None, None, :]
    wfp = wfp.reshape(75 * 30, 61)
    bff = ((p["bf"] + jnp.einsum("ncq,c->n", wr, t3)) * s4 + t4).reshape(1, 61)
    return {"w1p": w1p, "b1f": b1f, "w2p": w2p, "b2f": b2f,
            "w3p": w3p, "b3": b3, "wfp": wfp, "bff": bff}


# ----------------------------------------------------------------------------
# Forward pass: decimate input (free XLA glue) + single fused pallas_call.
# ----------------------------------------------------------------------------
def _cost_estimate(batch):
    m = batch * 75
    flops = 2 * (4 * m * 12 * 20 + 4 * m * 20 * 100 + 2 * m * 100 * 30
                 + batch * 2250 * 61)
    bytes_accessed = 4 * (m * 48 + 12 * 20 + 20 + 2 * 20 * 100 + 100
                          + 2 * 100 * 30 + 30 + 2250 * 61 + 61 + batch * 61)
    return pl.CostEstimate(flops=flops, transcendentals=0,
                           bytes_accessed=bytes_accessed)


def model1_forward(x_ncw, pp):
    B = x_ncw.shape[0]
    M = B * 75
    # (B, 6, 600) -> rows (q, b), lanes (j, c)  with t = 8*q + j.
    xr = jnp.transpose(x_ncw, (0, 2, 1)).reshape(B, 75, 8, 6)   # (b, q, j, c)
    xr = jnp.transpose(xr, (1, 0, 2, 3)).reshape(M, 48)          # (q*B+b, j*6+c)
    xr = xr.astype(jnp.float32)

    def full(shape):
        return pl.BlockSpec(shape, lambda i, _n=len(shape): (0,) * _n)

    kernel = functools.partial(_model1_kernel, batch=B)
    return pl.pallas_call(
        kernel,
        out_shape=jax.ShapeDtypeStruct((B, 61), jnp.float32),
        grid=(1,),
        in_specs=[full((M, 48)),
                  full((12, 20)), full((1, 20)),
                  full((2, 20, 100)), full((1, 100)),
                  full((2, 100, 30)), full((1, 30)),
                  full((2250, 61)), full((1, 61))],
        out_specs=full((B, 61)),
        scratch_shapes=[pltpu.VMEM((M, 30), jnp.float32),    # layer-3 output
                        pltpu.VMEM((B, 2250), jnp.float32)], # fc-input flatten
        compiler_params=pltpu.CompilerParams(
            dimension_semantics=("arbitrary",)),
        cost_estimate=_cost_estimate(B),
    )(xr, pp["w1p"], pp["b1f"], pp["w2p"], pp["b2f"],
      pp["w3p"], pp["b3"], pp["wfp"], pp["bff"])


# ----------------------------------------------------------------------------
# Pure-JAX reference (eval-mode BN), used as an in-script numerical check.
# ----------------------------------------------------------------------------
def reference_forward(x, p):
    hi = jax.lax.Precision.HIGHEST

    def bn(h, g, b, m, v):
        s = g * jax.lax.rsqrt(v + _EPS)
        t = b - s * m
        if h.ndim == 3:
            return h * s[None, :, None] + t[None, :, None]
        return h * s[None, :] + t[None, :]

    def conv(h, w, b):
        y = jax.lax.conv_general_dilated(
            h, w, window_strides=(2,), padding="VALID",
            dimension_numbers=("NCH", "OIH", "NCH"), precision=hi)
        return y + b[None, :, None]

    h = jax.nn.relu(bn(conv(x, p["w1"], p["b1"]),
                       p["g1"], p["be1"], p["m1"], p["v1"]))
    h = jax.nn.relu(bn(conv(h, p["w2"], p["b2"]),
                       p["g2"], p["be2"], p["m2"], p["v2"]))
    h = bn(jax.nn.relu(conv(h, p["w3"], p["b3"])),
           p["g3"], p["be3"], p["m3"], p["v3"])
    h = h.reshape(h.shape[0], -1)                            # (B, 30*75) c-major
    h = jnp.dot(h, p["wf"].T, precision=hi) + p["bf"][None, :]
    return jax.nn.relu(bn(h, p["g4"], p["be4"], p["m4"], p["v4"]))


if __name__ == "__main__":
    key = jax.random.PRNGKey(0)
    k_params, k_x = jax.random.split(key)
    params = init_params(k_params)
    packed = pack_params(params)          # one-time packing / BN folding

    # fc expects 30*75 features => input length 600 (three k=2, s=2 convs).
    x = jax.random.normal(k_x, (2, 6, 600), dtype=jnp.float32)  # NCW, batch=2

    fwd = jax.jit(model1_forward)
    out = jax.block_until_ready(fwd(x, packed))

    assert out.shape == (2, 61), out.shape
    assert bool(jnp.all(jnp.isfinite(out)))

    ref = reference_forward(x, params)
    assert bool(jnp.allclose(out, ref, rtol=3e-2, atol=3e-3)), (
        float(jnp.max(jnp.abs(out - ref))))

    print("KERNEL_OK")
</pallas_src>

<mosaic_0001>
module attributes {stable_mosaic.version = 11 : i64} {
  func.func @_model1_kernel(%arg0: i32, %arg1: memref<150x48xf32, #tpu.memory_space<vmem>>, %arg2: memref<12x20xf32, #tpu.memory_space<vmem>>, %arg3: memref<1x20xf32, #tpu.memory_space<vmem>>, %arg4: memref<2x20x100xf32, #tpu.memory_space<vmem>>, %arg5: memref<1x100xf32, #tpu.memory_space<vmem>>, %arg6: memref<2x100x30xf32, #tpu.memory_space<vmem>>, %arg7: memref<1x30xf32, #tpu.memory_space<vmem>>, %arg8: memref<2250x61xf32, #tpu.memory_space<vmem>>, %arg9: memref<1x61xf32, #tpu.memory_space<vmem>>, %arg10: memref<2x61xf32, #tpu.memory_space<vmem>>, %arg11: memref<150x30xf32, #tpu.memory_space<vmem>>, %arg12: memref<2x2250xf32, #tpu.memory_space<vmem>>) attributes {dimension_semantics = [#tpu.dimension_semantics<arbitrary>], iteration_bounds = array<i64: 1>, scalar_prefetch = 0 : i64, scratch_operands = 2 : i64, tpu.core_type = #tpu.core_type<tc>, window_params = [{pipeline_mode = #tpu.pipeline_mode<synchronous>, transform_indices = @transform_0, window_bounds = array<i64: 150, 48>}, {pipeline_mode = #tpu.pipeline_mode<synchronous>, transform_indices = @transform_1, window_bounds = array<i64: 12, 20>}, {pipeline_mode = #tpu.pipeline_mode<synchronous>, transform_indices = @transform_2, window_bounds = array<i64: 1, 20>}, {pipeline_mode = #tpu.pipeline_mode<synchronous>, transform_indices = @transform_3, window_bounds = array<i64: 2, 20, 100>}, {pipeline_mode = #tpu.pipeline_mode<synchronous>, transform_indices = @transform_4, window_bounds = array<i64: 1, 100>}, {pipeline_mode = #tpu.pipeline_mode<synchronous>, transform_indices = @transform_5, window_bounds = array<i64: 2, 100, 30>}, {pipeline_mode = #tpu.pipeline_mode<synchronous>, transform_indices = @transform_6, window_bounds = array<i64: 1, 30>}, {pipeline_mode = #tpu.pipeline_mode<synchronous>, transform_indices = @transform_7, window_bounds = array<i64: 2250, 61>}, {pipeline_mode = #tpu.pipeline_mode<synchronous>, transform_indices = @transform_8, window_bounds = array<i64: 1, 61>}, {pipeline_mode = #tpu.pipeline_mode<synchronous>, transform_indices = @transform_9, window_bounds = array<i64: 2, 61>}]} {
    %c0 = arith.constant 0 : index
    %c0_0 = arith.constant 0 : index
    %0 = vector.load %arg1[%c0, %c0_0] : memref<150x48xf32, #tpu.memory_space<vmem>>, vector<150x48xf32>
    %c0_1 = arith.constant 0 : index
    %c0_2 = arith.constant 0 : index
    %1 = vector.load %arg2[%c0_1, %c0_2] : memref<12x20xf32, #tpu.memory_space<vmem>>, vector<12x20xf32>
    %c0_3 = arith.constant 0 : index
    %c0_4 = arith.constant 0 : index
    %2 = vector.load %arg3[%c0_3, %c0_4] : memref<1x20xf32, #tpu.memory_space<vmem>>, vector<1x20xf32>
    %3 = vector.extract_strided_slice %0 {offsets = [0, 0], sizes = [150, 12], strides = [1, 1]} : vector<150x48xf32> to vector<150x12xf32>
    %cst = arith.constant dense<0.000000e+00> : vector<150x20xf32>
    %4 = tpu.matmul %3, %1, %cst {dimension_numbers = #tpu.dot_dimension_numbers<[1], [0], [0], [1], [0, 0, 1, 1], [], []>} : vector<150x12xf32>, vector<12x20xf32>, vector<150x20xf32> -> vector<150x20xf32>
    %5 = vector.broadcast %2 : vector<1x20xf32> to vector<150x20xf32>
    %6 = arith.addf %4, %5 : vector<150x20xf32>
    %cst_5 = arith.constant 0.000000e+00 : f32
    %7 = vector.broadcast %cst_5 : f32 to vector<150x20xf32>
    %8 = arith.maximumf %6, %7 : vector<150x20xf32>
    %9 = vector.extract_strided_slice %0 {offsets = [0, 12], sizes = [150, 12], strides = [1, 1]} : vector<150x48xf32> to vector<150x12xf32>
    %cst_6 = arith.constant dense<0.000000e+00> : vector<150x20xf32>
    %10 = tpu.matmul %9, %1, %cst_6 {dimension_numbers = #tpu.dot_dimension_numbers<[1], [0], [0], [1], [0, 0, 1, 1], [], []>} : vector<150x12xf32>, vector<12x20xf32>, vector<150x20xf32> -> vector<150x20xf32>
    %11 = vector.broadcast %2 : vector<1x20xf32> to vector<150x20xf32>
    %12 = arith.addf %10, %11 : vector<150x20xf32>
    %cst_7 = arith.constant 0.000000e+00 : f32
    %13 = vector.broadcast %cst_7 : f32 to vector<150x20xf32>
    %14 = arith.maximumf %12, %13 : vector<150x20xf32>
    %15 = vector.extract_strided_slice %0 {offsets = [0, 24], sizes = [150, 12], strides = [1, 1]} : vector<150x48xf32> to vector<150x12xf32>
    %cst_8 = arith.constant dense<0.000000e+00> : vector<150x20xf32>
    %16 = tpu.matmul %15, %1, %cst_8 {dimension_numbers = #tpu.dot_dimension_numbers<[1], [0], [0], [1], [0, 0, 1, 1], [], []>} : vector<150x12xf32>, vector<12x20xf32>, vector<150x20xf32> -> vector<150x20xf32>
    %17 = vector.broadcast %2 : vector<1x20xf32> to vector<150x20xf32>
    %18 = arith.addf %16, %17 : vector<150x20xf32>
    %cst_9 = arith.constant 0.000000e+00 : f32
    %19 = vector.broadcast %cst_9 : f32 to vector<150x20xf32>
    %20 = arith.maximumf %18, %19 : vector<150x20xf32>
    %21 = vector.extract_strided_slice %0 {offsets = [0, 36], sizes = [150, 12], strides = [1, 1]} : vector<150x48xf32> to vector<150x12xf32>
    %cst_10 = arith.constant dense<0.000000e+00> : vector<150x20xf32>
    %22 = tpu.matmul %21, %1, %cst_10 {dimension_numbers = #tpu.dot_dimension_numbers<[1], [0], [0], [1], [0, 0, 1, 1], [], []>} : vector<150x12xf32>, vector<12x20xf32>, vector<150x20xf32> -> vector<150x20xf32>
    %23 = vector.broadcast %2 : vector<1x20xf32> to vector<150x20xf32>
    %24 = arith.addf %22, %23 : vector<150x20xf32>
    %cst_11 = arith.constant 0.000000e+00 : f32
    %25 = vector.broadcast %cst_11 : f32 to vector<150x20xf32>
    %26 = arith.maximumf %24, %25 : vector<150x20xf32>
    %c0_12 = arith.constant 0 : index
    %c0_13 = arith.constant 0 : index
    %c0_14 = arith.constant 0 : index
    %27 = vector.load %arg4[%c0_12, %c0_13, %c0_14] : memref<2x20x100xf32, #tpu.memory_space<vmem>>, vector<1x20x100xf32>
    %28 = vector.shape_cast %27 : vector<1x20x100xf32> to vector<20x100xf32>
    %c1 = arith.constant 1 : index
    %c0_15 = arith.constant 0 : index
    %c0_16 = arith.constant 0 : index
    %29 = vector.load %arg4[%c1, %c0_15, %c0_16] : memref<2x20x100xf32, #tpu.memory_space<vmem>>, vector<1x20x100xf32>
    %30 = vector.shape_cast %29 : vector<1x20x100xf32> to vector<20x100xf32>
    %c0_17 = arith.constant 0 : index
    %c0_18 = arith.constant 0 : index
    %31 = vector.load %arg5[%c0_17, %c0_18] : memref<1x100xf32, #tpu.memory_space<vmem>>, vector<1x100xf32>
    %cst_19 = arith.constant dense<0.000000e+00> : vector<150x100xf32>
    %32 = tpu.matmul %8, %28, %cst_19 {dimension_numbers = #tpu.dot_dimension_numbers<[1], [0], [0], [1], [0, 0, 1, 1], [], []>} : vector<150x20xf32>, vector<20x100xf32>, vector<150x100xf32> -> vector<150x100xf32>
    %cst_20 = arith.constant dense<0.000000e+00> : vector<150x100xf32>
    %33 = tpu.matmul %14, %30, %cst_20 {dimension_numbers = #tpu.dot_dimension_numbers<[1], [0], [0], [1], [0, 0, 1, 1], [], []>} : vector<150x20xf32>, vector<20x100xf32>, vector<150x100xf32> -> vector<150x100xf32>
    %34 = arith.addf %32, %33 : vector<150x100xf32>
    %35 = vector.broadcast %31 : vector<1x100xf32> to vector<150x100xf32>
    %36 = arith.addf %34, %35 : vector<150x100xf32>
    %cst_21 = arith.constant 0.000000e+00 : f32
    %37 = vector.broadcast %cst_21 : f32 to vector<150x100xf32>
    %38 = arith.maximumf %36, %37 : vector<150x100xf32>
    %cst_22 = arith.constant dense<0.000000e+00> : vector<150x100xf32>
    %39 = tpu.matmul %20, %28, %cst_22 {dimension_numbers = #tpu.dot_dimension_numbers<[1], [0], [0], [1], [0, 0, 1, 1], [], []>} : vector<150x20xf32>, vector<20x100xf32>, vector<150x100xf32> -> vector<150x100xf32>
    %cst_23 = arith.constant dense<0.000000e+00> : vector<150x100xf32>
    %40 = tpu.matmul %26, %30, %cst_23 {dimension_numbers = #tpu.dot_dimension_numbers<[1], [0], [0], [1], [0, 0, 1, 1], [], []>} : vector<150x20xf32>, vector<20x100xf32>, vector<150x100xf32> -> vector<150x100xf32>
    %41 = arith.addf %39, %40 : vector<150x100xf32>
    %42 = vector.broadcast %31 : vector<1x100xf32> to vector<150x100xf32>
    %43 = arith.addf %41, %42 : vector<150x100xf32>
    %cst_24 = arith.constant 0.000000e+00 : f32
    %44 = vector.broadcast %cst_24 : f32 to vector<150x100xf32>
    %45 = arith.maximumf %43, %44 : vector<150x100xf32>
    %c0_25 = arith.constant 0 : index
    %c0_26 = arith.constant 0 : index
    %c0_27 = arith.constant 0 : index
    %46 = vector.load %arg6[%c0_25, %c0_26, %c0_27] : memref<2x100x30xf32, #tpu.memory_space<vmem>>, vector<1x100x30xf32>
    %47 = vector.shape_cast %46 : vector<1x100x30xf32> to vector<100x30xf32>
    %cst_28 = arith.constant dense<0.000000e+00> : vector<150x30xf32>
    %48 = tpu.matmul %38, %47, %cst_28 {dimension_numbers = #tpu.dot_dimension_numbers<[1], [0], [0], [1], [0, 0, 1, 1], [], []>} : vector<150x100xf32>, vector<100x30xf32>, vector<150x30xf32> -> vector<150x30xf32>
    %c1_29 = arith.constant 1 : index
    %c0_30 = arith.constant 0 : index
    %c0_31 = arith.constant 0 : index
    %49 = vector.load %arg6[%c1_29, %c0_30, %c0_31] : memref<2x100x30xf32, #tpu.memory_space<vmem>>, vector<1x100x30xf32>
    %50 = vector.shape_cast %49 : vector<1x100x30xf32> to vector<100x30xf32>
    %cst_32 = arith.constant dense<0.000000e+00> : vector<150x30xf32>
    %51 = tpu.matmul %45, %50, %cst_32 {dimension_numbers = #tpu.dot_dimension_numbers<[1], [0], [0], [1], [0, 0, 1, 1], [], []>} : vector<150x100xf32>, vector<100x30xf32>, vector<150x30xf32> -> vector<150x30xf32>
    %52 = arith.addf %48, %51 : vector<150x30xf32>
    %c0_33 = arith.constant 0 : index
    %c0_34 = arith.constant 0 : index
    %53 = vector.load %arg7[%c0_33, %c0_34] : memref<1x30xf32, #tpu.memory_space<vmem>>, vector<1x30xf32>
    %54 = vector.broadcast %53 : vector<1x30xf32> to vector<150x30xf32>
    %55 = arith.addf %52, %54 : vector<150x30xf32>
    %cst_35 = arith.constant 0.000000e+00 : f32
    %56 = vector.broadcast %cst_35 : f32 to vector<150x30xf32>
    %57 = arith.maximumf %55, %56 : vector<150x30xf32>
    %c0_36 = arith.constant 0 : index
    %c0_37 = arith.constant 0 : index
    %58 = vector.load %arg11[%c0_36, %c0_37] : memref<150x30xf32, #tpu.memory_space<vmem>>, vector<150x30xf32>
    tpu.vector_store %arg11[%c0_36, %c0_37], %57 {strides = array<i32>} : memref<150x30xf32, #tpu.memory_space<vmem>>, vector<150x30xf32>,
    %c0_38 = arith.constant 0 : index
    %c0_39 = arith.constant 0 : index
    %59 = vector.load %arg11[%c0_38, %c0_39] : memref<150x30xf32, #tpu.memory_space<vmem>>, vector<2x30xf32>
    %c0_40 = arith.constant 0 : index
    %c0_41 = arith.constant 0 : index
    %60 = vector.load %arg12[%c0_40, %c0_41] : memref<2x2250xf32, #tpu.memory_space<vmem>>, vector<2x30xf32>
    tpu.vector_store %arg12[%c0_40, %c0_41], %59 {strides = array<i32>} : memref<2x2250xf32, #tpu.memory_space<vmem>>, vector<2x30xf32>,
    %c2 = arith.constant 2 : index
    %c0_42 = arith.constant 0 : index
    %61 = vector.load %arg11[%c2, %c0_42] : memref<150x30xf32, #tpu.memory_space<vmem>>, vector<2x30xf32>
    %c0_43 = arith.constant 0 : index
    %c30 = arith.constant 30 : index
    %62 = vector.load %arg12[%c0_43, %c30] : memref<2x2250xf32, #tpu.memory_space<vmem>>, vector<2x30xf32>
    tpu.vector_store %arg12[%c0_43, %c30], %61 {strides = array<i32>} : memref<2x2250xf32, #tpu.memory_space<vmem>>, vector<2x30xf32>,
    %c4 = arith.constant 4 : index
    %c0_44 = arith.constant 0 : index
    %63 = vector.load %arg11[%c4, %c0_44] : memref<150x30xf32, #tpu.memory_space<vmem>>, vector<2x30xf32>
    %c0_45 = arith.constant 0 : index
    %c60 = arith.constant 60 : index
    %64 = vector.load %arg12[%c0_45, %c60] : memref<2x2250xf32, #tpu.memory_space<vmem>>, vector<2x30xf32>
    tpu.vector_store %arg12[%c0_45, %c60], %63 {strides = array<i32>} : memref<2x2250xf32, #tpu.memory_space<vmem>>, vector<2x30xf32>,
    %c6 = arith.constant 6 : index
    %c0_46 = arith.constant 0 : index
    %65 = vector.load %arg11[%c6, %c0_46] : memref<150x30xf32, #tpu.memory_space<vmem>>, vector<2x30xf32>
    %c0_47 = arith.constant 0 : index
    %c90 = arith.constant 90 : index
    %66 = vector.load %arg12[%c0_47, %c90] : memref<2x2250xf32, #tpu.memory_space<vmem>>, vector<2x30xf32>
    tpu.vector_store %arg12[%c0_47, %c90], %65 {strides = array<i32>} : memref<2x2250xf32, #tpu.memory_space<vmem>>, vector<2x30xf32>,
    %c8 = arith.constant 8 : index
    %c0_48 = arith.constant 0 : index
    %67 = vector.load %arg11[%c8, %c0_48] : memref<150x30xf32, #tpu.memory_space<vmem>>, vector<2x30xf32>
    %c0_49 = arith.constant 0 : index
    %c120 = arith.constant 120 : index
    %68 = vector.load %arg12[%c0_49, %c120] : memref<2x2250xf32, #tpu.memory_space<vmem>>, vector<2x30xf32>
    tpu.vector_store %arg12[%c0_49, %c120], %67 {strides = array<i32>} : memref<2x2250xf32, #tpu.memory_space<vmem>>, vector<2x30xf32>,
    %c10 = arith.constant 10 : index
    %c0_50 = arith.constant 0 : index
    %69 = vector.load %arg11[%c10, %c0_50] : memref<150x30xf32, #tpu.memory_space<vmem>>, vector<2x30xf32>
    %c0_51 = arith.constant 0 : index
    %c150 = arith.constant 150 : index
    %70 = vector.load %arg12[%c0_51, %c150] : memref<2x2250xf32, #tpu.memory_space<vmem>>, vector<2x30xf32>
    tpu.vector_store %arg12[%c0_51, %c150], %69 {strides = array<i32>} : memref<2x2250xf32, #tpu.memory_space<vmem>>, vector<2x30xf32>,
    %c12 = arith.constant 12 : index
    %c0_52 = arith.constant 0 : index
    %71 = vector.load %arg11[%c12, %c0_52] : memref<150x30xf32, #tpu.memory_space<vmem>>, vector<2x30xf32>
    %c0_53 = arith.constant 0 : index
    %c180 = arith.constant 180 : index
    %72 = vector.load %arg12[%c0_53, %c180] : memref<2x2250xf32, #tpu.memory_space<vmem>>, vector<2x30xf32>
    tpu.vector_store %arg12[%c0_53, %c180], %71 {strides = array<i32>} : memref<2x2250xf32, #tpu.memory_space<vmem>>, vector<2x30xf32>,
    %c14 = arith.constant 14 : index
    %c0_54 = arith.constant 0 : index
    %73 = vector.load %arg11[%c14, %c0_54] : memref<150x30xf32, #tpu.memory_space<vmem>>, vector<2x30xf32>
    %c0_55 = arith.constant 0 : index
    %c210 = arith.constant 210 : index
    %74 = vector.load %arg12[%c0_55, %c210] : memref<2x2250xf32, #tpu.memory_space<vmem>>, vector<2x30xf32>
    tpu.vector_store %arg12[%c0_55, %c210], %73 {strides = array<i32>} : memref<2x2250xf32, #tpu.memory_space<vmem>>, vector<2x30xf32>,
    %c16 = arith.constant 16 : index
    %c0_56 = arith.constant 0 : index
    %75 = vector.load %arg11[%c16, %c0_56] : memref<150x30xf32, #tpu.memory_space<vmem>>, vector<2x30xf32>
    %c0_57 = arith.constant 0 : index
    %c240 = arith.constant 240 : index
    %76 = vector.load %arg12[%c0_57, %c240] : memref<2x2250xf32, #tpu.memory_space<vmem>>, vector<2x30xf32>
    tpu.vector_store %arg12[%c0_57, %c240], %75 {strides = array<i32>} : memref<2x2250xf32, #tpu.memory_space<vmem>>, vector<2x30xf32>,
    %c18 = arith.constant 18 : index
    %c0_58 = arith.constant 0 : index
    %77 = vector.load %arg11[%c18, %c0_58] : memref<150x30xf32, #tpu.memory_space<vmem>>, vector<2x30xf32>
    %c0_59 = arith.constant 0 : index
    %c270 = arith.constant 270 : index
    %78 = vector.load %arg12[%c0_59, %c270] : memref<2x2250xf32, #tpu.memory_space<vmem>>, vector<2x30xf32>
    tpu.vector_store %arg12[%c0_59, %c270], %77 {strides = array<i32>} : memref<2x2250xf32, #tpu.memory_space<vmem>>, vector<2x30xf32>,
    %c20 = arith.constant 20 : index
    %c0_60 = arith.constant 0 : index
    %79 = vector.load %arg11[%c20, %c0_60] : memref<150x30xf32, #tpu.memory_space<vmem>>, vector<2x30xf32>
    %c0_61 = arith.constant 0 : index
    %c300 = arith.constant 300 : index
    %80 = vector.load %arg12[%c0_61, %c300] : memref<2x2250xf32, #tpu.memory_space<vmem>>, vector<2x30xf32>
    tpu.vector_store %arg12[%c0_61, %c300], %79 {strides = array<i32>} : memref<2x2250xf32, #tpu.memory_space<vmem>>, vector<2x30xf32>,
    %c22 = arith.constant 22 : index
    %c0_62 = arith.constant 0 : index
    %81 = vector.load %arg11[%c22, %c0_62] : memref<150x30xf32, #tpu.memory_space<vmem>>, vector<2x30xf32>
    %c0_63 = arith.constant 0 : index
    %c330 = arith.constant 330 : index
    %82 = vector.load %arg12[%c0_63, %c330] : memref<2x2250xf32, #tpu.memory_space<vmem>>, vector<2x30xf32>
    tpu.vector_store %arg12[%c0_63, %c330], %81 {strides = array<i32>} : memref<2x2250xf32, #tpu.memory_space<vmem>>, vector<2x30xf32>,
    %c24 = arith.constant 24 : index
    %c0_64 = arith.constant 0 : index
    %83 = vector.load %arg11[%c24, %c0_64] : memref<150x30xf32, #tpu.memory_space<vmem>>, vector<2x30xf32>
    %c0_65 = arith.constant 0 : index
    %c360 = arith.constant 360 : index
    %84 = vector.load %arg12[%c0_65, %c360] : memref<2x2250xf32, #tpu.memory_space<vmem>>, vector<2x30xf32>
    tpu.vector_store %arg12[%c0_65, %c360], %83 {strides = array<i32>} : memref<2x2250xf32, #tpu.memory_space<vmem>>, vector<2x30xf32>,
    %c26 = arith.constant 26 : index
    %c0_66 = arith.constant 0 : index
    %85 = vector.load %arg11[%c26, %c0_66] : memref<150x30xf32, #tpu.memory_space<vmem>>, vector<2x30xf32>
    %c0_67 = arith.constant 0 : index
    %c390 = arith.constant 390 : index
    %86 = vector.load %arg12[%c0_67, %c390] : memref<2x2250xf32, #tpu.memory_space<vmem>>, vector<2x30xf32>
    tpu.vector_store %arg12[%c0_67, %c390], %85 {strides = array<i32>} : memref<2x2250xf32, #tpu.memory_space<vmem>>, vector<2x30xf32>,
    %c28 = arith.constant 28 : index
    %c0_68 = arith.constant 0 : index
    %87 = vector.load %arg11[%c28, %c0_68] : memref<150x30xf32, #tpu.memory_space<vmem>>, vector<2x30xf32>
    %c0_69 = arith.constant 0 : index
    %c420 = arith.constant 420 : index
    %88 = vector.load %arg12[%c0_69, %c420] : memref<2x2250xf32, #tpu.memory_space<vmem>>, vector<2x30xf32>
    tpu.vector_store %arg12[%c0_69, %c420], %87 {strides = array<i32>} : memref<2x2250xf32, #tpu.memory_space<vmem>>, vector<2x30xf32>,
    %c30_70 = arith.constant 30 : index
    %c0_71 = arith.constant 0 : index
    %89 = vector.load %arg11[%c30_70, %c0_71] : memref<150x30xf32, #tpu.memory_space<vmem>>, vector<2x30xf32>
    %c0_72 = arith.constant 0 : index
    %c450 = arith.constant 450 : index
    %90 = vector.load %arg12[%c0_72, %c450] : memref<2x2250xf32, #tpu.memory_space<vmem>>, vector<2x30xf32>
    tpu.vector_store %arg12[%c0_72, %c450], %89 {strides = array<i32>} : memref<2x2250xf32, #tpu.memory_space<vmem>>, vector<2x30xf32>,
    %c32 = arith.constant 32 : index
    %c0_73 = arith.constant 0 : index
    %91 = vector.load %arg11[%c32, %c0_73] : memref<150x30xf32, #tpu.memory_space<vmem>>, vector<2x30xf32>
    %c0_74 = arith.constant 0 : index
    %c480 = arith.constant 480 : index
    %92 = vector.load %arg12[%c0_74, %c480] : memref<2x2250xf32, #tpu.memory_space<vmem>>, vector<2x30xf32>
    tpu.vector_store %arg12[%c0_74, %c480], %91 {strides = array<i32>} : memref<2x2250xf32, #tpu.memory_space<vmem>>, vector<2x30xf32>,
    %c34 = arith.constant 34 : index
    %c0_75 = arith.constant 0 : index
    %93 = vector.load %arg11[%c34, %c0_75] : memref<150x30xf32, #tpu.memory_space<vmem>>, vector<2x30xf32>
    %c0_76 = arith.constant 0 : index
    %c510 = arith.constant 510 : index
    %94 = vector.load %arg12[%c0_76, %c510] : memref<2x2250xf32, #tpu.memory_space<vmem>>, vector<2x30xf32>
    tpu.vector_store %arg12[%c0_76, %c510], %93 {strides = array<i32>} : memref<2x2250xf32, #tpu.memory_space<vmem>>, vector<2x30xf32>,
    %c36 = arith.constant 36 : index
    %c0_77 = arith.constant 0 : index
    %95 = vector.load %arg11[%c36, %c0_77] : memref<150x30xf32, #tpu.memory_space<vmem>>, vector<2x30xf32>
    %c0_78 = arith.constant 0 : index
    %c540 = arith.constant 540 : index
    %96 = vector.load %arg12[%c0_78, %c540] : memref<2x2250xf32, #tpu.memory_space<vmem>>, vector<2x30xf32>
    tpu.vector_store %arg12[%c0_78, %c540], %95 {strides = array<i32>} : memref<2x2250xf32, #tpu.memory_space<vmem>>, vector<2x30xf32>,
    %c38 = arith.constant 38 : index
    %c0_79 = arith.constant 0 : index
    %97 = vector.load %arg11[%c38, %c0_79] : memref<150x30xf32, #tpu.memory_space<vmem>>, vector<2x30xf32>
    %c0_80 = arith.constant 0 : index
    %c570 = arith.constant 570 : index
    %98 = vector.load %arg12[%c0_80, %c570] : memref<2x2250xf32, #tpu.memory_space<vmem>>, vector<2x30xf32>
    tpu.vector_store %arg12[%c0_80, %c570], %97 {strides = array<i32>} : memref<2x2250xf32, #tpu.memory_space<vmem>>, vector<2x30xf32>,
    %c40 = arith.constant 40 : index
    %c0_81 = arith.constant 0 : index
    %99 = vector.load %arg11[%c40, %c0_81] : memref<150x30xf32, #tpu.memory_space<vmem>>, vector<2x30xf32>
    %c0_82 = arith.constant 0 : index
    %c600 = arith.constant 600 : index
    %100 = vector.load %arg12[%c0_82, %c600] : memref<2x2250xf32, #tpu.memory_space<vmem>>, vector<2x30xf32>
    tpu.vector_store %arg12[%c0_82, %c600], %99 {strides = array<i32>} : memref<2x2250xf32, #tpu.memory_space<vmem>>, vector<2x30xf32>,
    %c42 = arith.constant 42 : index
    %c0_83 = arith.constant 0 : index
    %101 = vector.load %arg11[%c42, %c0_83] : memref<150x30xf32, #tpu.memory_space<vmem>>, vector<2x30xf32>
    %c0_84 = arith.constant 0 : index
    %c630 = arith.constant 630 : index
    %102 = vector.load %arg12[%c0_84, %c630] : memref<2x2250xf32, #tpu.memory_space<vmem>>, vector<2x30xf32>
    tpu.vector_store %arg12[%c0_84, %c630], %101 {strides = array<i32>} : memref<2x2250xf32, #tpu.memory_space<vmem>>, vector<2x30xf32>,
    %c44 = arith.constant 44 : index
    %c0_85 = arith.constant 0 : index
    %103 = vector.load %arg11[%c44, %c0_85] : memref<150x30xf32, #tpu.memory_space<vmem>>, vector<2x30xf32>
    %c0_86 = arith.constant 0 : index
    %c660 = arith.constant 660 : index
    %104 = vector.load %arg12[%c0_86, %c660] : memref<2x2250xf32, #tpu.memory_space<vmem>>, vector<2x30xf32>
    tpu.vector_store %arg12[%c0_86, %c660], %103 {strides = array<i32>} : memref<2x2250xf32, #tpu.memory_space<vmem>>, vector<2x30xf32>,
    %c46 = arith.constant 46 : index
    %c0_87 = arith.constant 0 : index
    %105 = vector.load %arg11[%c46, %c0_87] : memref<150x30xf32, #tpu.memory_space<vmem>>, vector<2x30xf32>
    %c0_88 = arith.constant 0 : index
    %c690 = arith.constant 690 : index
    %106 = vector.load %arg12[%c0_88, %c690] : memref<2x2250xf32, #tpu.memory_space<vmem>>, vector<2x30xf32>
    tpu.vector_store %arg12[%c0_88, %c690], %105 {strides = array<i32>} : memref<2x2250xf32, #tpu.memory_space<vmem>>, vector<2x30xf32>,
    %c48 = arith.constant 48 : index
    %c0_89 = arith.constant 0 : index
    %107 = vector.load %arg11[%c48, %c0_89] : memref<150x30xf32, #tpu.memory_space<vmem>>, vector<2x30xf32>
    %c0_90 = arith.constant 0 : index
    %c720 = arith.constant 720 : index
    %108 = vector.load %arg12[%c0_90, %c720] : memref<2x2250xf32, #tpu.memory_space<vmem>>, vector<2x30xf32>
    tpu.vector_store %arg12[%c0_90, %c720], %107 {strides = array<i32>} : memref<2x2250xf32, #tpu.memory_space<vmem>>, vector<2x30xf32>,
    %c50 = arith.constant 50 : index
    %c0_91 = arith.constant 0 : index
    %109 = vector.load %arg11[%c50, %c0_91] : memref<150x30xf32, #tpu.memory_space<vmem>>, vector<2x30xf32>
    %c0_92 = arith.constant 0 : index
    %c750 = arith.constant 750 : index
    %110 = vector.load %arg12[%c0_92, %c750] : memref<2x2250xf32, #tpu.memory_space<vmem>>, vector<2x30xf32>
    tpu.vector_store %arg12[%c0_92, %c750], %109 {strides = array<i32>} : memref<2x2250xf32, #tpu.memory_space<vmem>>, vector<2x30xf32>,
    %c52 = arith.constant 52 : index
    %c0_93 = arith.constant 0 : index
    %111 = vector.load %arg11[%c52, %c0_93] : memref<150x30xf32, #tpu.memory_space<vmem>>, vector<2x30xf32>
    %c0_94 = arith.constant 0 : index
    %c780 = arith.constant 780 : index
    %112 = vector.load %arg12[%c0_94, %c780] : memref<2x2250xf32, #tpu.memory_space<vmem>>, vector<2x30xf32>
    tpu.vector_store %arg12[%c0_94, %c780], %111 {strides = array<i32>} : memref<2x2250xf32, #tpu.memory_space<vmem>>, vector<2x30xf32>,
    %c54 = arith.constant 54 : index
    %c0_95 = arith.constant 0 : index
    %113 = vector.load %arg11[%c54, %c0_95] : memref<150x30xf32, #tpu.memory_space<vmem>>, vector<2x30xf32>
    %c0_96 = arith.constant 0 : index
    %c810 = arith.constant 810 : index
    %114 = vector.load %arg12[%c0_96, %c810] : memref<2x2250xf32, #tpu.memory_space<vmem>>, vector<2x30xf32>
    tpu.vector_store %arg12[%c0_96, %c810], %113 {strides = array<i32>} : memref<2x2250xf32, #tpu.memory_space<vmem>>, vector<2x30xf32>,
    %c56 = arith.constant 56 : index
    %c0_97 = arith.constant 0 : index
    %115 = vector.load %arg11[%c56, %c0_97] : memref<150x30xf32, #tpu.memory_space<vmem>>, vector<2x30xf32>
    %c0_98 = arith.constant 0 : index
    %c840 = arith.constant 840 : index
    %116 = vector.load %arg12[%c0_98, %c840] : memref<2x2250xf32, #tpu.memory_space<vmem>>, vector<2x30xf32>
    tpu.vector_store %arg12[%c0_98, %c840], %115 {strides = array<i32>} : memref<2x2250xf32, #tpu.memory_space<vmem>>, vector<2x30xf32>,
    %c58 = arith.constant 58 : index
    %c0_99 = arith.constant 0 : index
    %117 = vector.load %arg11[%c58, %c0_99] : memref<150x30xf32, #tpu.memory_space<vmem>>, vector<2x30xf32>
    %c0_100 = arith.constant 0 : index
    %c870 = arith.constant 870 : index
    %118 = vector.load %arg12[%c0_100, %c870] : memref<2x2250xf32, #tpu.memory_space<vmem>>, vector<2x30xf32>
    tpu.vector_store %arg12[%c0_100, %c870], %117 {strides = array<i32>} : memref<2x2250xf32, #tpu.memory_space<vmem>>, vector<2x30xf32>,
    %c60_101 = arith.constant 60 : index
    %c0_102 = arith.constant 0 : index
    %119 = vector.load %arg11[%c60_101, %c0_102] : memref<150x30xf32, #tpu.memory_space<vmem>>, vector<2x30xf32>
    %c0_103 = arith.constant 0 : index
    %c900 = arith.constant 900 : index
    %120 = vector.load %arg12[%c0_103, %c900] : memref<2x2250xf32, #tpu.memory_space<vmem>>, vector<2x30xf32>
    tpu.vector_store %arg12[%c0_103, %c900], %119 {strides = array<i32>} : memref<2x2250xf32, #tpu.memory_space<vmem>>, vector<2x30xf32>,
    %c62 = arith.constant 62 : index
    %c0_104 = arith.constant 0 : index
    %121 = vector.load %arg11[%c62, %c0_104] : memref<150x30xf32, #tpu.memory_space<vmem>>, vector<2x30xf32>
    %c0_105 = arith.constant 0 : index
    %c930 = arith.constant 930 : index
    %122 = vector.load %arg12[%c0_105, %c930] : memref<2x2250xf32, #tpu.memory_space<vmem>>, vector<2x30xf32>
    tpu.vector_store %arg12[%c0_105, %c930], %121 {strides = array<i32>} : memref<2x2250xf32, #tpu.memory_space<vmem>>, vector<2x30xf32>,
    %c64 = arith.constant 64 : index
    %c0_106 = arith.constant 0 : index
    %123 = vector.load %arg11[%c64, %c0_106] : memref<150x30xf32, #tpu.memory_space<vmem>>, vector<2x30xf32>
    %c0_107 = arith.constant 0 : index
    %c960 = arith.constant 960 : index
    %124 = vector.load %arg12[%c0_107, %c960] : memref<2x2250xf32, #tpu.memory_space<vmem>>, vector<2x30xf32>
    tpu.vector_store %arg12[%c0_107, %c960], %123 {strides = array<i32>} : memref<2x2250xf32, #tpu.memory_space<vmem>>, vector<2x30xf32>,
    %c66 = arith.constant 66 : index
    %c0_108 = arith.constant 0 : index
    %125 = vector.load %arg11[%c66, %c0_108] : memref<150x30xf32, #tpu.memory_space<vmem>>, vector<2x30xf32>
    %c0_109 = arith.constant 0 : index
    %c990 = arith.constant 990 : index
    %126 = vector.load %arg12[%c0_109, %c990] : memref<2x2250xf32, #tpu.memory_space<vmem>>, vector<2x30xf32>
    tpu.vector_store %arg12[%c0_109, %c990], %125 {strides = array<i32>} : memref<2x2250xf32, #tpu.memory_space<vmem>>, vector<2x30xf32>,
    %c68 = arith.constant 68 : index
    %c0_110 = arith.constant 0 : index
    %127 = vector.load %arg11[%c68, %c0_110] : memref<150x30xf32, #tpu.memory_space<vmem>>, vector<2x30xf32>
    %c0_111 = arith.constant 0 : index
    %c1020 = arith.constant 1020 : index
    %128 = vector.load %arg12[%c0_111, %c1020] : memref<2x2250xf32, #tpu.memory_space<vmem>>, vector<2x30xf32>
    tpu.vector_store %arg12[%c0_111, %c1020], %127 {strides = array<i32>} : memref<2x2250xf32, #tpu.memory_space<vmem>>, vector<2x30xf32>,
    %c70 = arith.constant 70 : index
    %c0_112 = arith.constant 0 : index
    %129 = vector.load %arg11[%c70, %c0_112] : memref<150x30xf32, #tpu.memory_space<vmem>>, vector<2x30xf32>
    %c0_113 = arith.constant 0 : index
    %c1050 = arith.constant 1050 : index
    %130 = vector.load %arg12[%c0_113, %c1050] : memref<2x2250xf32, #tpu.memory_space<vmem>>, vector<2x30xf32>
    tpu.vector_store %arg12[%c0_113, %c1050], %129 {strides = array<i32>} : memref<2x2250xf32, #tpu.memory_space<vmem>>, vector<2x30xf32>,
    %c72 = arith.constant 72 : index
    %c0_114 = arith.constant 0 : index
    %131 = vector.load %arg11[%c72, %c0_114] : memref<150x30xf32, #tpu.memory_space<vmem>>, vector<2x30xf32>
    %c0_115 = arith.constant 0 : index
    %c1080 = arith.constant 1080 : index
    %132 = vector.load %arg12[%c0_115, %c1080] : memref<2x2250xf32, #tpu.memory_space<vmem>>, vector<2x30xf32>
    tpu.vector_store %arg12[%c0_115, %c1080], %131 {strides = array<i32>} : memref<2x2250xf32, #tpu.memory_space<vmem>>, vector<2x30xf32>,
    %c74 = arith.constant 74 : index
    %c0_116 = arith.constant 0 : index
    %133 = vector.load %arg11[%c74, %c0_116] : memref<150x30xf32, #tpu.memory_space<vmem>>, vector<2x30xf32>
    %c0_117 = arith.constant 0 : index
    %c1110 = arith.constant 1110 : index
    %134 = vector.load %arg12[%c0_117, %c1110] : memref<2x2250xf32, #tpu.memory_space<vmem>>, vector<2x30xf32>
    tpu.vector_store %arg12[%c0_117, %c1110], %133 {strides = array<i32>} : memref<2x2250xf32, #tpu.memory_space<vmem>>, vector<2x30xf32>,
    %c76 = arith.constant 76 : index
    %c0_118 = arith.constant 0 : index
    %135 = vector.load %arg11[%c76, %c0_118] : memref<150x30xf32, #tpu.memory_space<vmem>>, vector<2x30xf32>
    %c0_119 = arith.constant 0 : index
    %c1140 = arith.constant 1140 : index
    %136 = vector.load %arg12[%c0_119, %c1140] : memref<2x2250xf32, #tpu.memory_space<vmem>>, vector<2x30xf32>
    tpu.vector_store %arg12[%c0_119, %c1140], %135 {strides = array<i32>} : memref<2x2250xf32, #tpu.memory_space<vmem>>, vector<2x30xf32>,
    %c78 = arith.constant 78 : index
    %c0_120 = arith.constant 0 : index
    %137 = vector.load %arg11[%c78, %c0_120] : memref<150x30xf32, #tpu.memory_space<vmem>>, vector<2x30xf32>
    %c0_121 = arith.constant 0 : index
    %c1170 = arith.constant 1170 : index
    %138 = vector.load %arg12[%c0_121, %c1170] : memref<2x2250xf32, #tpu.memory_space<vmem>>, vector<2x30xf32>
    tpu.vector_store %arg12[%c0_121, %c1170], %137 {strides = array<i32>} : memref<2x2250xf32, #tpu.memory_space<vmem>>, vector<2x30xf32>,
    %c80 = arith.constant 80 : index
    %c0_122 = arith.constant 0 : index
    %139 = vector.load %arg11[%c80, %c0_122] : memref<150x30xf32, #tpu.memory_space<vmem>>, vector<2x30xf32>
    %c0_123 = arith.constant 0 : index
    %c1200 = arith.constant 1200 : index
    %140 = vector.load %arg12[%c0_123, %c1200] : memref<2x2250xf32, #tpu.memory_space<vmem>>, vector<2x30xf32>
    tpu.vector_store %arg12[%c0_123, %c1200], %139 {strides = array<i32>} : memref<2x2250xf32, #tpu.memory_space<vmem>>, vector<2x30xf32>,
    %c82 = arith.constant 82 : index
    %c0_124 = arith.constant 0 : index
    %141 = vector.load %arg11[%c82, %c0_124] : memref<150x30xf32, #tpu.memory_space<vmem>>, vector<2x30xf32>
    %c0_125 = arith.constant 0 : index
    %c1230 = arith.constant 1230 : index
    %142 = vector.load %arg12[%c0_125, %c1230] : memref<2x2250xf32, #tpu.memory_space<vmem>>, vector<2x30xf32>
    tpu.vector_store %arg12[%c0_125, %c1230], %141 {strides = array<i32>} : memref<2x2250xf32, #tpu.memory_space<vmem>>, vector<2x30xf32>,
    %c84 = arith.constant 84 : index
    %c0_126 = arith.constant 0 : index
    %143 = vector.load %arg11[%c84, %c0_126] : memref<150x30xf32, #tpu.memory_space<vmem>>, vector<2x30xf32>
    %c0_127 = arith.constant 0 : index
    %c1260 = arith.constant 1260 : index
    %144 = vector.load %arg12[%c0_127, %c1260] : memref<2x2250xf32, #tpu.memory_space<vmem>>, vector<2x30xf32>
    tpu.vector_store %arg12[%c0_127, %c1260], %143 {strides = array<i32>} : memref<2x2250xf32, #tpu.memory_space<vmem>>, vector<2x30xf32>,
    %c86 = arith.constant 86 : index
    %c0_128 = arith.constant 0 : index
    %145 = vector.load %arg11[%c86, %c0_128] : memref<150x30xf32, #tpu.memory_space<vmem>>, vector<2x30xf32>
    %c0_129 = arith.constant 0 : index
    %c1290 = arith.constant 1290 : index
    %146 = vector.load %arg12[%c0_129, %c1290] : memref<2x2250xf32, #tpu.memory_space<vmem>>, vector<2x30xf32>
    tpu.vector_store %arg12[%c0_129, %c1290], %145 {strides = array<i32>} : memref<2x2250xf32, #tpu.memory_space<vmem>>, vector<2x30xf32>,
    %c88 = arith.constant 88 : index
    %c0_130 = arith.constant 0 : index
    %147 = vector.load %arg11[%c88, %c0_130] : memref<150x30xf32, #tpu.memory_space<vmem>>, vector<2x30xf32>
    %c0_131 = arith.constant 0 : index
    %c1320 = arith.constant 1320 : index
    %148 = vector.load %arg12[%c0_131, %c1320] : memref<2x2250xf32, #tpu.memory_space<vmem>>, vector<2x30xf32>
    tpu.vector_store %arg12[%c0_131, %c1320], %147 {strides = array<i32>} : memref<2x2250xf32, #tpu.memory_space<vmem>>, vector<2x30xf32>,
    %c90_132 = arith.constant 90 : index
    %c0_133 = arith.constant 0 : index
    %149 = vector.load %arg11[%c90_132, %c0_133] : memref<150x30xf32, #tpu.memory_space<vmem>>, vector<2x30xf32>
    %c0_134 = arith.constant 0 : index
    %c1350 = arith.constant 1350 : index
    %150 = vector.load %arg12[%c0_134, %c1350] : memref<2x2250xf32, #tpu.memory_space<vmem>>, vector<2x30xf32>
    tpu.vector_store %arg12[%c0_134, %c1350], %149 {strides = array<i32>} : memref<2x2250xf32, #tpu.memory_space<vmem>>, vector<2x30xf32>,
    %c92 = arith.constant 92 : index
    %c0_135 = arith.constant 0 : index
    %151 = vector.load %arg11[%c92, %c0_135] : memref<150x30xf32, #tpu.memory_space<vmem>>, vector<2x30xf32>
    %c0_136 = arith.constant 0 : index
    %c1380 = arith.constant 1380 : index
    %152 = vector.load %arg12[%c0_136, %c1380] : memref<2x2250xf32, #tpu.memory_space<vmem>>, vector<2x30xf32>
    tpu.vector_store %arg12[%c0_136, %c1380], %151 {strides = array<i32>} : memref<2x2250xf32, #tpu.memory_space<vmem>>, vector<2x30xf32>,
    %c94 = arith.constant 94 : index
    %c0_137 = arith.constant 0 : index
    %153 = vector.load %arg11[%c94, %c0_137] : memref<150x30xf32, #tpu.memory_space<vmem>>, vector<2x30xf32>
    %c0_138 = arith.constant 0 : index
    %c1410 = arith.constant 1410 : index
    %154 = vector.load %arg12[%c0_138, %c1410] : memref<2x2250xf32, #tpu.memory_space<vmem>>, vector<2x30xf32>
    tpu.vector_store %arg12[%c0_138, %c1410], %153 {strides = array<i32>} : memref<2x2250xf32, #tpu.memory_space<vmem>>, vector<2x30xf32>,
    %c96 = arith.constant 96 : index
    %c0_139 = arith.constant 0 : index
    %155 = vector.load %arg11[%c96, %c0_139] : memref<150x30xf32, #tpu.memory_space<vmem>>, vector<2x30xf32>
    %c0_140 = arith.constant 0 : index
    %c1440 = arith.constant 1440 : index
    %156 = vector.load %arg12[%c0_140, %c1440] : memref<2x2250xf32, #tpu.memory_space<vmem>>, vector<2x30xf32>
    tpu.vector_store %arg12[%c0_140, %c1440], %155 {strides = array<i32>} : memref<2x2250xf32, #tpu.memory_space<vmem>>, vector<2x30xf32>,
    %c98 = arith.constant 98 : index
    %c0_141 = arith.constant 0 : index
    %157 = vector.load %arg11[%c98, %c0_141] : memref<150x30xf32, #tpu.memory_space<vmem>>, vector<2x30xf32>
    %c0_142 = arith.constant 0 : index
    %c1470 = arith.constant 1470 : index
    %158 = vector.load %arg12[%c0_142, %c1470] : memref<2x2250xf32, #tpu.memory_space<vmem>>, vector<2x30xf32>
    tpu.vector_store %arg12[%c0_142, %c1470], %157 {strides = array<i32>} : memref<2x2250xf32, #tpu.memory_space<vmem>>, vector<2x30xf32>,
    %c100 = arith.constant 100 : index
    %c0_143 = arith.constant 0 : index
    %159 = vector.load %arg11[%c100, %c0_143] : memref<150x30xf32, #tpu.memory_space<vmem>>, vector<2x30xf32>
    %c0_144 = arith.constant 0 : index
    %c1500 = arith.constant 1500 : index
    %160 = vector.load %arg12[%c0_144, %c1500] : memref<2x2250xf32, #tpu.memory_space<vmem>>, vector<2x30xf32>
    tpu.vector_store %arg12[%c0_144, %c1500], %159 {strides = array<i32>} : memref<2x2250xf32, #tpu.memory_space<vmem>>, vector<2x30xf32>,
    %c102 = arith.constant 102 : index
    %c0_145 = arith.constant 0 : index
    %161 = vector.load %arg11[%c102, %c0_145] : memref<150x30xf32, #tpu.memory_space<vmem>>, vector<2x30xf32>
    %c0_146 = arith.constant 0 : index
    %c1530 = arith.constant 1530 : index
    %162 = vector.load %arg12[%c0_146, %c1530] : memref<2x2250xf32, #tpu.memory_space<vmem>>, vector<2x30xf32>
    tpu.vector_store %arg12[%c0_146, %c1530], %161 {strides = array<i32>} : memref<2x2250xf32, #tpu.memory_space<vmem>>, vector<2x30xf32>,
    %c104 = arith.constant 104 : index
    %c0_147 = arith.constant 0 : index
    %163 = vector.load %arg11[%c104, %c0_147] : memref<150x30xf32, #tpu.memory_space<vmem>>, vector<2x30xf32>
    %c0_148 = arith.constant 0 : index
    %c1560 = arith.constant 1560 : index
    %164 = vector.load %arg12[%c0_148, %c1560] : memref<2x2250xf32, #tpu.memory_space<vmem>>, vector<2x30xf32>
    tpu.vector_store %arg12[%c0_148, %c1560], %163 {strides = array<i32>} : memref<2x2250xf32, #tpu.memory_space<vmem>>, vector<2x30xf32>,
    %c106 = arith.constant 106 : index
    %c0_149 = arith.constant 0 : index
    %165 = vector.load %arg11[%c106, %c0_149] : memref<150x30xf32, #tpu.memory_space<vmem>>, vector<2x30xf32>
    %c0_150 = arith.constant 0 : index
    %c1590 = arith.constant 1590 : index
    %166 = vector.load %arg12[%c0_150, %c1590] : memref<2x2250xf32, #tpu.memory_space<vmem>>, vector<2x30xf32>
    tpu.vector_store %arg12[%c0_150, %c1590], %165 {strides = array<i32>} : memref<2x2250xf32, #tpu.memory_space<vmem>>, vector<2x30xf32>,
    %c108 = arith.constant 108 : index
    %c0_151 = arith.constant 0 : index
    %167 = vector.load %arg11[%c108, %c0_151] : memref<150x30xf32, #tpu.memory_space<vmem>>, vector<2x30xf32>
    %c0_152 = arith.constant 0 : index
    %c1620 = arith.constant 1620 : index
    %168 = vector.load %arg12[%c0_152, %c1620] : memref<2x2250xf32, #tpu.memory_space<vmem>>, vector<2x30xf32>
    tpu.vector_store %arg12[%c0_152, %c1620], %167 {strides = array<i32>} : memref<2x2250xf32, #tpu.memory_space<vmem>>, vector<2x30xf32>,
    %c110 = arith.constant 110 : index
    %c0_153 = arith.constant 0 : index
    %169 = vector.load %arg11[%c110, %c0_153] : memref<150x30xf32, #tpu.memory_space<vmem>>, vector<2x30xf32>
    %c0_154 = arith.constant 0 : index
    %c1650 = arith.constant 1650 : index
    %170 = vector.load %arg12[%c0_154, %c1650] : memref<2x2250xf32, #tpu.memory_space<vmem>>, vector<2x30xf32>
    tpu.vector_store %arg12[%c0_154, %c1650], %169 {strides = array<i32>} : memref<2x2250xf32, #tpu.memory_space<vmem>>, vector<2x30xf32>,
    %c112 = arith.constant 112 : index
    %c0_155 = arith.constant 0 : index
    %171 = vector.load %arg11[%c112, %c0_155] : memref<150x30xf32, #tpu.memory_space<vmem>>, vector<2x30xf32>
    %c0_156 = arith.constant 0 : index
    %c1680 = arith.constant 1680 : index
    %172 = vector.load %arg12[%c0_156, %c1680] : memref<2x2250xf32, #tpu.memory_space<vmem>>, vector<2x30xf32>
    tpu.vector_store %arg12[%c0_156, %c1680], %171 {strides = array<i32>} : memref<2x2250xf32, #tpu.memory_space<vmem>>, vector<2x30xf32>,
    %c114 = arith.constant 114 : index
    %c0_157 = arith.constant 0 : index
    %173 = vector.load %arg11[%c114, %c0_157] : memref<150x30xf32, #tpu.memory_space<vmem>>, vector<2x30xf32>
    %c0_158 = arith.constant 0 : index
    %c1710 = arith.constant 1710 : index
    %174 = vector.load %arg12[%c0_158, %c1710] : memref<2x2250xf32, #tpu.memory_space<vmem>>, vector<2x30xf32>
    tpu.vector_store %arg12[%c0_158, %c1710], %173 {strides = array<i32>} : memref<2x2250xf32, #tpu.memory_space<vmem>>, vector<2x30xf32>,
    %c116 = arith.constant 116 : index
    %c0_159 = arith.constant 0 : index
    %175 = vector.load %arg11[%c116, %c0_159] : memref<150x30xf32, #tpu.memory_space<vmem>>, vector<2x30xf32>
    %c0_160 = arith.constant 0 : index
    %c1740 = arith.constant 1740 : index
    %176 = vector.load %arg12[%c0_160, %c1740] : memref<2x2250xf32, #tpu.memory_space<vmem>>, vector<2x30xf32>
    tpu.vector_store %arg12[%c0_160, %c1740], %175 {strides = array<i32>} : memref<2x2250xf32, #tpu.memory_space<vmem>>, vector<2x30xf32>,
    %c118 = arith.constant 118 : index
    %c0_161 = arith.constant 0 : index
    %177 = vector.load %arg11[%c118, %c0_161] : memref<150x30xf32, #tpu.memory_space<vmem>>, vector<2x30xf32>
    %c0_162 = arith.constant 0 : index
    %c1770 = arith.constant 1770 : index
    %178 = vector.load %arg12[%c0_162, %c1770] : memref<2x2250xf32, #tpu.memory_space<vmem>>, vector<2x30xf32>
    tpu.vector_store %arg12[%c0_162, %c1770], %177 {strides = array<i32>} : memref<2x2250xf32, #tpu.memory_space<vmem>>, vector<2x30xf32>,
    %c120_163 = arith.constant 120 : index
    %c0_164 = arith.constant 0 : index
    %179 = vector.load %arg11[%c120_163, %c0_164] : memref<150x30xf32, #tpu.memory_space<vmem>>, vector<2x30xf32>
    %c0_165 = arith.constant 0 : index
    %c1800 = arith.constant 1800 : index
    %180 = vector.load %arg12[%c0_165, %c1800] : memref<2x2250xf32, #tpu.memory_space<vmem>>, vector<2x30xf32>
    tpu.vector_store %arg12[%c0_165, %c1800], %179 {strides = array<i32>} : memref<2x2250xf32, #tpu.memory_space<vmem>>, vector<2x30xf32>,
    %c122 = arith.constant 122 : index
    %c0_166 = arith.constant 0 : index
    %181 = vector.load %arg11[%c122, %c0_166] : memref<150x30xf32, #tpu.memory_space<vmem>>, vector<2x30xf32>
    %c0_167 = arith.constant 0 : index
    %c1830 = arith.constant 1830 : index
    %182 = vector.load %arg12[%c0_167, %c1830] : memref<2x2250xf32, #tpu.memory_space<vmem>>, vector<2x30xf32>
    tpu.vector_store %arg12[%c0_167, %c1830], %181 {strides = array<i32>} : memref<2x2250xf32, #tpu.memory_space<vmem>>, vector<2x30xf32>,
    %c124 = arith.constant 124 : index
    %c0_168 = arith.constant 0 : index
    %183 = vector.load %arg11[%c124, %c0_168] : memref<150x30xf32, #tpu.memory_space<vmem>>, vector<2x30xf32>
    %c0_169 = arith.constant 0 : index
    %c1860 = arith.constant 1860 : index
    %184 = vector.load %arg12[%c0_169, %c1860] : memref<2x2250xf32, #tpu.memory_space<vmem>>, vector<2x30xf32>
    tpu.vector_store %arg12[%c0_169, %c1860], %183 {strides = array<i32>} : memref<2x2250xf32, #tpu.memory_space<vmem>>, vector<2x30xf32>,
    %c126 = arith.constant 126 : index
    %c0_170 = arith.constant 0 : index
    %185 = vector.load %arg11[%c126, %c0_170] : memref<150x30xf32, #tpu.memory_space<vmem>>, vector<2x30xf32>
    %c0_171 = arith.constant 0 : index
    %c1890 = arith.constant 1890 : index
    %186 = vector.load %arg12[%c0_171, %c1890] : memref<2x2250xf32, #tpu.memory_space<vmem>>, vector<2x30xf32>
    tpu.vector_store %arg12[%c0_171, %c1890], %185 {strides = array<i32>} : memref<2x2250xf32, #tpu.memory_space<vmem>>, vector<2x30xf32>,
    %c128 = arith.constant 128 : index
    %c0_172 = arith.constant 0 : index
    %187 = vector.load %arg11[%c128, %c0_172] : memref<150x30xf32, #tpu.memory_space<vmem>>, vector<2x30xf32>
    %c0_173 = arith.constant 0 : index
    %c1920 = arith.constant 1920 : index
    %188 = vector.load %arg12[%c0_173, %c1920] : memref<2x2250xf32, #tpu.memory_space<vmem>>, vector<2x30xf32>
    tpu.vector_store %arg12[%c0_173, %c1920], %187 {strides = array<i32>} : memref<2x2250xf32, #tpu.memory_space<vmem>>, vector<2x30xf32>,
    %c130 = arith.constant 130 : index
    %c0_174 = arith.constant 0 : index
    %189 = vector.load %arg11[%c130, %c0_174] : memref<150x30xf32, #tpu.memory_space<vmem>>, vector<2x30xf32>
    %c0_175 = arith.constant 0 : index
    %c1950 = arith.constant 1950 : index
    %190 = vector.load %arg12[%c0_175, %c1950] : memref<2x2250xf32, #tpu.memory_space<vmem>>, vector<2x30xf32>
    tpu.vector_store %arg12[%c0_175, %c1950], %189 {strides = array<i32>} : memref<2x2250xf32, #tpu.memory_space<vmem>>, vector<2x30xf32>,
    %c132 = arith.constant 132 : index
    %c0_176 = arith.constant 0 : index
    %191 = vector.load %arg11[%c132, %c0_176] : memref<150x30xf32, #tpu.memory_space<vmem>>, vector<2x30xf32>
    %c0_177 = arith.constant 0 : index
    %c1980 = arith.constant 1980 : index
    %192 = vector.load %arg12[%c0_177, %c1980] : memref<2x2250xf32, #tpu.memory_space<vmem>>, vector<2x30xf32>
    tpu.vector_store %arg12[%c0_177, %c1980], %191 {strides = array<i32>} : memref<2x2250xf32, #tpu.memory_space<vmem>>, vector<2x30xf32>,
    %c134 = arith.constant 134 : index
    %c0_178 = arith.constant 0 : index
    %193 = vector.load %arg11[%c134, %c0_178] : memref<150x30xf32, #tpu.memory_space<vmem>>, vector<2x30xf32>
    %c0_179 = arith.constant 0 : index
    %c2010 = arith.constant 2010 : index
    %194 = vector.load %arg12[%c0_179, %c2010] : memref<2x2250xf32, #tpu.memory_space<vmem>>, vector<2x30xf32>
    tpu.vector_store %arg12[%c0_179, %c2010], %193 {strides = array<i32>} : memref<2x2250xf32, #tpu.memory_space<vmem>>, vector<2x30xf32>,
    %c136 = arith.constant 136 : index
    %c0_180 = arith.constant 0 : index
    %195 = vector.load %arg11[%c136, %c0_180] : memref<150x30xf32, #tpu.memory_space<vmem>>, vector<2x30xf32>
    %c0_181 = arith.constant 0 : index
    %c2040 = arith.constant 2040 : index
    %196 = vector.load %arg12[%c0_181, %c2040] : memref<2x2250xf32, #tpu.memory_space<vmem>>, vector<2x30xf32>
    tpu.vector_store %arg12[%c0_181, %c2040], %195 {strides = array<i32>} : memref<2x2250xf32, #tpu.memory_space<vmem>>, vector<2x30xf32>,
    %c138 = arith.constant 138 : index
    %c0_182 = arith.constant 0 : index
    %197 = vector.load %arg11[%c138, %c0_182] : memref<150x30xf32, #tpu.memory_space<vmem>>, vector<2x30xf32>
    %c0_183 = arith.constant 0 : index
    %c2070 = arith.constant 2070 : index
    %198 = vector.load %arg12[%c0_183, %c2070] : memref<2x2250xf32, #tpu.memory_space<vmem>>, vector<2x30xf32>
    tpu.vector_store %arg12[%c0_183, %c2070], %197 {strides = array<i32>} : memref<2x2250xf32, #tpu.memory_space<vmem>>, vector<2x30xf32>,
    %c140 = arith.constant 140 : index
    %c0_184 = arith.constant 0 : index
    %199 = vector.load %arg11[%c140, %c0_184] : memref<150x30xf32, #tpu.memory_space<vmem>>, vector<2x30xf32>
    %c0_185 = arith.constant 0 : index
    %c2100 = arith.constant 2100 : index
    %200 = vector.load %arg12[%c0_185, %c2100] : memref<2x2250xf32, #tpu.memory_space<vmem>>, vector<2x30xf32>
    tpu.vector_store %arg12[%c0_185, %c2100], %199 {strides = array<i32>} : memref<2x2250xf32, #tpu.memory_space<vmem>>, vector<2x30xf32>,
    %c142 = arith.constant 142 : index
    %c0_186 = arith.constant 0 : index
    %201 = vector.load %arg11[%c142, %c0_186] : memref<150x30xf32, #tpu.memory_space<vmem>>, vector<2x30xf32>
    %c0_187 = arith.constant 0 : index
    %c2130 = arith.constant 2130 : index
    %202 = vector.load %arg12[%c0_187, %c2130] : memref<2x2250xf32, #tpu.memory_space<vmem>>, vector<2x30xf32>
    tpu.vector_store %arg12[%c0_187, %c2130], %201 {strides = array<i32>} : memref<2x2250xf32, #tpu.memory_space<vmem>>, vector<2x30xf32>,
    %c144 = arith.constant 144 : index
    %c0_188 = arith.constant 0 : index
    %203 = vector.load %arg11[%c144, %c0_188] : memref<150x30xf32, #tpu.memory_space<vmem>>, vector<2x30xf32>
    %c0_189 = arith.constant 0 : index
    %c2160 = arith.constant 2160 : index
    %204 = vector.load %arg12[%c0_189, %c2160] : memref<2x2250xf32, #tpu.memory_space<vmem>>, vector<2x30xf32>
    tpu.vector_store %arg12[%c0_189, %c2160], %203 {strides = array<i32>} : memref<2x2250xf32, #tpu.memory_space<vmem>>, vector<2x30xf32>,
    %c146 = arith.constant 146 : index
    %c0_190 = arith.constant 0 : index
    %205 = vector.load %arg11[%c146, %c0_190] : memref<150x30xf32, #tpu.memory_space<vmem>>, vector<2x30xf32>
    %c0_191 = arith.constant 0 : index
    %c2190 = arith.constant 2190 : index
    %206 = vector.load %arg12[%c0_191, %c2190] : memref<2x2250xf32, #tpu.memory_space<vmem>>, vector<2x30xf32>
    tpu.vector_store %arg12[%c0_191, %c2190], %205 {strides = array<i32>} : memref<2x2250xf32, #tpu.memory_space<vmem>>, vector<2x30xf32>,
    %c148 = arith.constant 148 : index
    %c0_192 = arith.constant 0 : index
    %207 = vector.load %arg11[%c148, %c0_192] : memref<150x30xf32, #tpu.memory_space<vmem>>, vector<2x30xf32>
    %c0_193 = arith.constant 0 : index
    %c2220 = arith.constant 2220 : index
    %208 = vector.load %arg12[%c0_193, %c2220] : memref<2x2250xf32, #tpu.memory_space<vmem>>, vector<2x30xf32>
    tpu.vector_store %arg12[%c0_193, %c2220], %207 {strides = array<i32>} : memref<2x2250xf32, #tpu.memory_space<vmem>>, vector<2x30xf32>,
    %c0_194 = arith.constant 0 : index
    %c0_195 = arith.constant 0 : index
    %209 = vector.load %arg12[%c0_194, %c0_195] : memref<2x2250xf32, #tpu.memory_space<vmem>>, vector<2x2250xf32>
    %c0_196 = arith.constant 0 : index
    %c0_197 = arith.constant 0 : index
    %210 = vector.load %arg8[%c0_196, %c0_197] : memref<2250x61xf32, #tpu.memory_space<vmem>>, vector<2250x61xf32>
    %cst_198 = arith.constant dense<0.000000e+00> : vector<2x61xf32>
    %211 = tpu.matmul %209, %210, %cst_198 {dimension_numbers = #tpu.dot_dimension_numbers<[1], [0], [0], [1], [0, 0, 1, 1], [], []>} : vector<2x2250xf32>, vector<2250x61xf32>, vector<2x61xf32> -> vector<2x61xf32>
    %c0_199 = arith.constant 0 : index
    %c0_200 = arith.constant 0 : index
    %212 = vector.load %arg9[%c0_199, %c0_200] : memref<1x61xf32, #tpu.memory_space<vmem>>, vector<1x61xf32>
    %213 = vector.broadcast %212 : vector<1x61xf32> to vector<2x61xf32>
    %214 = arith.addf %211, %213 : vector<2x61xf32>
    %cst_201 = arith.constant 0.000000e+00 : f32
    %215 = vector.broadcast %cst_201 : f32 to vector<2x61xf32>
    %216 = arith.maximumf %214, %215 : vector<2x61xf32>
    %c0_202 = arith.constant 0 : index
    %c0_203 = arith.constant 0 : index
    %217 = vector.load %arg10[%c0_202, %c0_203] : memref<2x61xf32, #tpu.memory_space<vmem>>, vector<2x61xf32>
    tpu.vector_store %arg10[%c0_202, %c0_203], %216 {strides = array<i32>} : memref<2x61xf32, #tpu.memory_space<vmem>>, vector<2x61xf32>,
    return
  }
  func.func @transform_0(%arg0: i32) -> (i32, i32) {
    %c0_i32 = arith.constant 0 : i32
    %c0_i32_0 = arith.constant 0 : i32
    %c0_i32_1 = arith.constant 0 : i32
    return %c0_i32, %c0_i32_0 : i32, i32
  }
  func.func @transform_1(%arg0: i32) -> (i32, i32) {
    %c0_i32 = arith.constant 0 : i32
    %c0_i32_0 = arith.constant 0 : i32
    %c0_i32_1 = arith.constant 0 : i32
    return %c0_i32, %c0_i32_0 : i32, i32
  }
  func.func @transform_2(%arg0: i32) -> (i32, i32) {
    %c0_i32 = arith.constant 0 : i32
    %c0_i32_0 = arith.constant 0 : i32
    %c0_i32_1 = arith.constant 0 : i32
    return %c0_i32, %c0_i32_0 : i32, i32
  }
  func.func @transform_3(%arg0: i32) -> (i32, i32, i32) {
    %c0_i32 = arith.constant 0 : i32
    %c0_i32_0 = arith.constant 0 : i32
    %c0_i32_1 = arith.constant 0 : i32
    %c0_i32_2 = arith.constant 0 : i32
    return %c0_i32, %c0_i32_0, %c0_i32_1 : i32, i32, i32
  }
  func.func @transform_4(%arg0: i32) -> (i32, i32) {
    %c0_i32 = arith.constant 0 : i32
    %c0_i32_0 = arith.constant 0 : i32
    %c0_i32_1 = arith.constant 0 : i32
    return %c0_i32, %c0_i32_0 : i32, i32
  }
  func.func @transform_5(%arg0: i32) -> (i32, i32, i32) {
    %c0_i32 = arith.constant 0 : i32
    %c0_i32_0 = arith.constant 0 : i32
    %c0_i32_1 = arith.constant 0 : i32
    %c0_i32_2 = arith.constant 0 : i32
    return %c0_i32, %c0_i32_0, %c0_i32_1 : i32, i32, i32
  }
  func.func @transform_6(%arg0: i32) -> (i32, i32) {
    %c0_i32 = arith.constant 0 : i32
    %c0_i32_0 = arith.constant 0 : i32
    %c0_i32_1 = arith.constant 0 : i32
    return %c0_i32, %c0_i32_0 : i32, i32
  }
  func.func @transform_7(%arg0: i32) -> (i32, i32) {
    %c0_i32 = arith.constant 0 : i32
    %c0_i32_0 = arith.constant 0 : i32
    %c0_i32_1 = arith.constant 0 : i32
    return %c0_i32, %c0_i32_0 : i32, i32
  }
  func.func @transform_8(%arg0: i32) -> (i32, i32) {
    %c0_i32 = arith.constant 0 : i32
    %c0_i32_0 = arith.constant 0 : i32
    %c0_i32_1 = arith.constant 0 : i32
    return %c0_i32, %c0_i32_0 : i32, i32
  }
  func.func @transform_9(%arg0: i32) -> (i32, i32) {
    %c0_i32 = arith.constant 0 : i32
    %c0_i32_0 = arith.constant 0 : i32
    %c0_i32_1 = arith.constant 0 : i32
    return %c0_i32, %c0_i32_0 : i32, i32
  }
}

</mosaic_0001>

<llo_original>
// kernel: model1_forward.1
$region0: #{model1_forward.1}
  #allocation0 [shape = 'u32[]', space=smem, size = 0x4, offset = 0x4, fixed_abs, tag = 'smem constant byte address 0x4 - core index']
  #allocation1 [shape = 'u32[144,128]{1,0:T(1,128)}', space=vmem, size = 0x12000, scoped, tag = 'internal scratch']
  #allocation2 [shape = 'f32[150,30]{1,0:T(8,128)}', space=vmem, size = 0x13000, scoped, tag = 'scratch operand']
  #allocation3 [shape = 'f32[2,2250]{1,0:T(2,128)}', space=vmem, size = 0x4800, scoped, tag = 'scratch operand']
  %s0 = inlined_call_operand.vmem [shape: f32[150,48], index: 0, kind: input, shape index: {}]
  %s1 = inlined_call_operand.vmem [shape: f32[12,20], index: 1, kind: input, shape index: {}]
  %s2 = inlined_call_operand.vmem [shape: f32[1,20], index: 2, kind: input, shape index: {}]
  %s3 = inlined_call_operand.vmem [shape: f32[2,20,100], index: 3, kind: input, shape index: {}]
  %s4 = inlined_call_operand.vmem [shape: f32[1,100], index: 4, kind: input, shape index: {}]
  %s5 = inlined_call_operand.vmem [shape: f32[2,100,30], index: 5, kind: input, shape index: {}]
  %s6 = inlined_call_operand.vmem [shape: f32[1,30], index: 6, kind: input, shape index: {}]
  %s7 = inlined_call_operand.vmem [shape: f32[2250,61], index: 7, kind: input, shape index: {}]
  %s8 = inlined_call_operand.vmem [shape: f32[1,61], index: 8, kind: input, shape index: {}]
  %s9 = inlined_call_operand.hbm [shape: f32[2,61], index: 9, kind: output, shape index: {}]
  %s10 = sld [smem:[#allocation0]]
  $region46: #{model1_forward.1} parent=0
    _
  %s12 = ssub.s32 1, %s10
  %s13 = scalar_select 0, %s12, %s10
  $region1: #{model1_forward.1} parent=0
    #allocation4 [shape = 'u8[1024]{0}', space=vmem, size = 0x400, scoped, tag = 'output window, operand 0, single buffered']
    #allocation5 [shape = 's32[1]{0}', space=sflag, size = 0x4, scoped, tag = 'scoped memory for model1_forward.1']
    %14 = vsyncpa [#allocation5], 0
    // Predicated region
    $region2: #{model1_forward.1} parent=1 // pred_check
      _
    $region3: #{model1_forward.1} parent=1 // pred_check_branch
      %16 = sbr.rel (0) target = $region5
    $region4: #{model1_forward.1} parent=1 // pred_region
      _
    $region5: #{model1_forward.1} parent=1 // pred_fallthru
      _
    // Predicated region
    $region6: #{model1_forward.1} parent=1 // pred_check
      _
    $region7: #{model1_forward.1} parent=1 // pred_check_branch
      %18 = sbr.rel (0) target = $region9
    $region8: #{model1_forward.1} parent=1 // pred_region
      _
    $region9: #{model1_forward.1} parent=1 // pred_fallthru
      _
    // Predicated region
    $region10: #{model1_forward.1} parent=1 // pred_check
      _
    $region11: #{model1_forward.1} parent=1 // pred_check_branch
      %20 = sbr.rel (0) target = $region13
    $region12: #{model1_forward.1} parent=1 // pred_region
      _
    $region13: #{model1_forward.1} parent=1 // pred_fallthru
      _
    // Predicated region
    $region14: #{model1_forward.1} parent=1 // pred_check
      _
    $region15: #{model1_forward.1} parent=1 // pred_check_branch
      %22 = sbr.rel (0) target = $region17
    $region16: #{model1_forward.1} parent=1 // pred_region
      _
    $region17: #{model1_forward.1} parent=1 // pred_fallthru
      _
    // Predicated region
    $region18: #{model1_forward.1} parent=1 // pred_check
      _
    $region19: #{model1_forward.1} parent=1 // pred_check_branch
      %24 = sbr.rel (0) target = $region21
    $region20: #{model1_forward.1} parent=1 // pred_region
      _
    $region21: #{model1_forward.1} parent=1 // pred_fallthru
      _
    // Predicated region
    $region22: #{model1_forward.1} parent=1 // pred_check
      _
    $region23: #{model1_forward.1} parent=1 // pred_check_branch
      %26 = sbr.rel (0) target = $region25
    $region24: #{model1_forward.1} parent=1 // pred_region
      _
    $region25: #{model1_forward.1} parent=1 // pred_fallthru
      _
    // Predicated region
    $region26: #{model1_forward.1} parent=1 // pred_check
      _
    $region27: #{model1_forward.1} parent=1 // pred_check_branch
      %28 = sbr.rel (0) target = $region29
    $region28: #{model1_forward.1} parent=1 // pred_region
      _
    $region29: #{model1_forward.1} parent=1 // pred_fallthru
      _
    // Predicated region
    $region30: #{model1_forward.1} parent=1 // pred_check
      _
    $region31: #{model1_forward.1} parent=1 // pred_check_branch
      %30 = sbr.rel (0) target = $region33
    $region32: #{model1_forward.1} parent=1 // pred_region
      _
    $region33: #{model1_forward.1} parent=1 // pred_fallthru
      _
    // Predicated region
    $region34: #{model1_forward.1} parent=1 // pred_check
      _
    $region35: #{model1_forward.1} parent=1 // pred_check_branch
      %32 = sbr.rel (0) target = $region37
    $region36: #{model1_forward.1} parent=1 // pred_region
      _
    $region37: #{model1_forward.1} parent=1 // pred_fallthru
      _
    %v33 = vld [vmem:[%s0] sm:$0xff]
    %v34 = vld [vmem:[%s0 + $0x8] sm:$0xff]
    %v35 = vld [vmem:[%s0 + $0x10] sm:$0xff]
    %v36 = vld [vmem:[%s0 + $0x18] sm:$0xff]
    %v37 = vld [vmem:[%s0 + $0x20] sm:$0xff]
    %v38 = vld [vmem:[%s0 + $0x28] sm:$0xff]
    %v39 = vld [vmem:[%s0 + $0x30] sm:$0xff]
    %v40 = vld [vmem:[%s0 + $0x38] sm:$0xff]
    %v41 = vld [vmem:[%s0 + $0x40] sm:$0xff]
    %v42 = vld [vmem:[%s0 + $0x48] sm:$0xff]
    %v43 = vld [vmem:[%s0 + $0x50] sm:$0xff]
    %v44 = vld [vmem:[%s0 + $0x58] sm:$0xff]
    %v45 = vld [vmem:[%s0 + $0x60] sm:$0xff]
    %v46 = vld [vmem:[%s0 + $0x68] sm:$0xff]
    %v47 = vld [vmem:[%s0 + $0x70] sm:$0xff]
    %v48 = vld [vmem:[%s0 + $0x78] sm:$0xff]
    %v49 = vld [vmem:[%s0 + $0x80] sm:$0xff]
    %v50 = vld [vmem:[%s0 + $0x88] sm:$0xff]
    %v51 = vld [vmem:[%s0 + $0x90] sm:$0x3f]
    %v52 = vld [vmem:[%s1] sm:$0xff]
    %v53 = vld [vmem:[%s1 + $0x8] sm:$0xf]
    %v54 = vld [vmem:[%s2] sm:$0x1]
    %v56 = vlaneseq
    %v57 = vshrl.u32 %v56, 7
    %v58 = vsub.s32 0, %v57
    %v59 = vrot.slane %v54, %v58
    %vm61 = vcmask 97280
    %v63 = vsel %vm61, %v33, 0
    %v66 = vsel %vm61, %v34, 0
    %v69 = vsel %vm61, %v35, 0
    %v72 = vsel %vm61, %v36, 0
    %v75 = vsel %vm61, %v37, 0
    %v78 = vsel %vm61, %v38, 0
    %v81 = vsel %vm61, %v39, 0
    %v84 = vsel %vm61, %v40, 0
    %v87 = vsel %vm61, %v41, 0
    %v90 = vsel %vm61, %v42, 0
    %v93 = vsel %vm61, %v43, 0
    %v96 = vsel %vm61, %v44, 0
    %v99 = vsel %vm61, %v45, 0
    %v102 = vsel %vm61, %v46, 0
    %v105 = vsel %vm61, %v47, 0
    %v108 = vsel %vm61, %v48, 0
    %v111 = vsel %vm61, %v49, 0
    %v114 = vsel %vm61, %v50, 0
    %v117 = vsel %vm61, %v51, 0
    %vm119 = vcmask 1043456
    %v121 = vsel %vm119, %v53, 0
    %123 = vmatprep.subr.mxu0 0.0
    %124 = vmatpush1.msra.mxu0 0.0
    %125 = vmatprep.subr.mxu0 0.0
    %126 = vmatpush1.msra.mxu0 0.0
    %127 = vmatprep.subr.mxu0 0.0
    %128 = vmatpush1.msra.mxu0 0.0
    %129 = vmatprep.subr.mxu0 0.0
    %130 = vmatpush1.msra.mxu0 0.0
    %131 = vmatprep.subr.mxu0 0.0
    %132 = vmatpush1.msra.mxu0 0.0
    %133 = vmatprep.subr.mxu0 0.0
    %134 = vmatpush1.msra.mxu0 0.0
    %135 = vmatprep.subr.mxu0 0.0
    %136 = vmatpush1.msra.mxu0 0.0
    %137 = vmatprep.subr.mxu0 0.0
    %138 = vmatpush1.msra.mxu0 0.0
    %139 = vmatprep.subr.mxu0 0.0
    %140 = vmatpush1.msra.mxu0 0.0
    %141 = vmatprep.subr.mxu0 0.0
    %142 = vmatpush1.msra.mxu0 0.0
    %143 = vmatprep.subr.mxu0 0.0
    %144 = vmatpush1.msra.mxu0 0.0
    %145 = vmatprep.subr.mxu0 0.0
    %146 = vmatpush1.msra.mxu0 0.0
    %147 = vmatprep.subr.mxu0 0.0
    %148 = vmatpush1.msra.mxu0 0.0
    %149 = vmatprep.subr.mxu0 0.0
    %150 = vmatpush1.msra.mxu0 0.0
    %151 = vmatprep.subr.mxu0 0.0
    %152 = vmatpush1.msra.mxu0 %v121
    %153 = vmatprep.subr.mxu0 0.0
    %154 = vmatpush1.msra.mxu0 %v52
    %155 = vmatprep.subr.mxu0 0.0
    %156 = vmatpush2.msra.mxu0 0.0
    %157 = vmatprep.subr.mxu0 0.0
    %158 = vmatpush2.msra.mxu0 0.0
    %159 = vmatprep.subr.mxu0 0.0
    %160 = vmatpush2.msra.mxu0 0.0
    %161 = vmatprep.subr.mxu0 0.0
    %162 = vmatpush2.msra.mxu0 0.0
    %163 = vmatprep.subr.mxu0 0.0
    %164 = vmatpush2.msra.mxu0 0.0
    %165 = vmatprep.subr.mxu0 0.0
    %166 = vmatpush2.msra.mxu0 0.0
    %167 = vmatprep.subr.mxu0 0.0
    %168 = vmatpush2.msra.mxu0 0.0
    %169 = vmatprep.subr.mxu0 0.0
    %170 = vmatpush2.msra.mxu0 0.0
    %171 = vmatprep.subr.mxu0 0.0
    %172 = vmatpush2.msra.mxu0 0.0
    %173 = vmatprep.subr.mxu0 0.0
    %174 = vmatpush2.msra.mxu0 0.0
    %175 = vmatprep.subr.mxu0 0.0
    %176 = vmatpush2.msra.mxu0 0.0
    %177 = vmatprep.subr.mxu0 0.0
    %178 = vmatpush2.msra.mxu0 0.0
    %179 = vmatprep.subr.mxu0 0.0
    %180 = vmatpush2.msra.mxu0 0.0
    %181 = vmatprep.subr.mxu0 0.0
    %182 = vmatpush2.msra.mxu0 0.0
    %183 = vmatprep.subr.mxu0 0.0
    %184 = vmatpush2.msra.mxu0 0.0
    %185 = vmatprep.subr.mxu0 0.0
    %186 = vmatpush2.msra.mxu0 0.0
    %187 = vmatprep.mubr.f32.mxu0 0.0
    %188 = vmatmul.mubr.f32.gmra.mxu0 %v63
    %v189 = vpop.f32.mrf.mxu0
    %v190 = vadd.f32 %v59, %v189
    %v191 = vpop.f32.mrf.mxu0
    %192 = vmatprep.mubr.f32.mxu0 0.0
    %193 = vmatmul.mubr.f32.gmra.mxu0 %v66
    %v194 = vpop.f32.mrf.mxu0
    %v195 = vadd.f32 %v59, %v194
    %v196 = vpop.f32.mrf.mxu0
    %197 = vmatprep.mubr.f32.mxu0 0.0
    %198 = vmatmul.mubr.f32.gmra.mxu0 %v69
    %v199 = vpop.f32.mrf.mxu0
    %v200 = vadd.f32 %v59, %v199
    %v201 = vpop.f32.mrf.mxu0
    %202 = vmatprep.mubr.f32.mxu0 0.0
    %203 = vmatmul.mubr.f32.gmra.mxu0 %v72
    %v204 = vpop.f32.mrf.mxu0
    %v205 = vadd.f32 %v59, %v204
    %v206 = vpop.f32.mrf.mxu0
    %207 = vmatprep.mubr.f32.mxu0 0.0
    %208 = vmatmul.mubr.f32.gmra.mxu0 %v75
    %v209 = vpop.f32.mrf.mxu0
    %v210 = vadd.f32 %v59, %v209
    %v211 = vpop.f32.mrf.mxu0
    %212 = vmatprep.mubr.f32.mxu0 0.0
    %213 = vmatmul.mubr.f32.gmra.mxu0 %v78
    %v214 = vpop.f32.mrf.mxu0
    %v215 = vadd.f32 %v59, %v214
    %v216 = vpop.f32.mrf.mxu0
    %217 = vmatprep.mubr.f32.mxu0 0.0
    %218 = vmatmul.mubr.f32.gmra.mxu0 %v81
    %v219 = vpop.f32.mrf.mxu0
    %v220 = vadd.f32 %v59, %v219
    %v221 = vpop.f32.mrf.mxu0
    %222 = vmatprep.mubr.f32.mxu0 0.0
    %223 = vmatmul.mubr.f32.gmra.mxu0 %v84
    %v224 = vpop.f32.mrf.mxu0
    %v225 = vadd.f32 %v59, %v224
    %v226 = vpop.f32.mrf.mxu0
    %227 = vmatprep.mubr.f32.mxu0 0.0
    %228 = vmatmul.mubr.f32.gmra.mxu0 %v87
    %v229 = vpop.f32.mrf.mxu0
    %v230 = vadd.f32 %v59, %v229
    %v231 = vpop.f32.mrf.mxu0
    %232 = vmatprep.mubr.f32.mxu0 0.0
    %233 = vmatmul.mubr.f32.gmra.mxu0 %v90
    %v234 = vpop.f32.mrf.mxu0
    %v235 = vadd.f32 %v59, %v234
    %v236 = vpop.f32.mrf.mxu0
    %237 = vmatprep.mubr.f32.mxu0 0.0
    %238 = vmatmul.mubr.f32.gmra.mxu0 %v93
    %v239 = vpop.f32.mrf.mxu0
    %v240 = vadd.f32 %v59, %v239
    %v241 = vpop.f32.mrf.mxu0
    %242 = vmatprep.mubr.f32.mxu0 0.0
    %243 = vmatmul.mubr.f32.gmra.mxu0 %v96
    %v244 = vpop.f32.mrf.mxu0
    %v245 = vadd.f32 %v59, %v244
    %v246 = vpop.f32.mrf.mxu0
    %247 = vmatprep.mubr.f32.mxu0 0.0
    %248 = vmatmul.mubr.f32.gmra.mxu0 %v99
    %v249 = vpop.f32.mrf.mxu0
    %v250 = vadd.f32 %v59, %v249
    %v251 = vpop.f32.mrf.mxu0
    %252 = vmatprep.mubr.f32.mxu0 0.0
    %253 = vmatmul.mubr.f32.gmra.mxu0 %v102
    %v254 = vpop.f32.mrf.mxu0
    %v255 = vadd.f32 %v59, %v254
    %v256 = vpop.f32.mrf.mxu0
    %257 = vmatprep.mubr.f32.mxu0 0.0
    %258 = vmatmul.mubr.f32.gmra.mxu0 %v105
    %v259 = vpop.f32.mrf.mxu0
    %v260 = vadd.f32 %v59, %v259
    %v261 = vpop.f32.mrf.mxu0
    %262 = vmatprep.mubr.f32.mxu0 0.0
    %263 = vmatmul.mubr.f32.gmra.mxu0 %v108
    %v264 = vpop.f32.mrf.mxu0
    %v265 = vadd.f32 %v59, %v264
    %v266 = vpop.f32.mrf.mxu0
    %267 = vmatprep.mubr.f32.mxu0 0.0
    %268 = vmatmul.mubr.f32.gmra.mxu0 %v111
    %v269 = vpop.f32.mrf.mxu0
    %v270 = vadd.f32 %v59, %v269
    %v271 = vpop.f32.mrf.mxu0
    %272 = vmatprep.mubr.f32.mxu0 0.0
    %273 = vmatmul.mubr.f32.gmra.mxu0 %v114
    %v274 = vpop.f32.mrf.mxu0
    %v275 = vadd.f32 %v59, %v274
    %v276 = vpop.f32.mrf.mxu0
    %277 = vmatprep.mubr.f32.mxu0 0.0
    %278 = vmatmul.mubr.f32.gmra.mxu0 %v117
    %v279 = vpop.f32.mrf.mxu0
    %v280 = vadd.f32 %v59, %v279
    %v281 = vpop.f32.mrf.mxu0
    %282 = vdwg.mxu0
    %v283 = vmax.f32 %v190, 0.0
    %v284 = vmax.f32 %v195, 0.0
    %v285 = vmax.f32 %v200, 0.0
    %v286 = vmax.f32 %v205, 0.0
    %v287 = vmax.f32 %v210, 0.0
    %v288 = vmax.f32 %v215, 0.0
    %v289 = vmax.f32 %v220, 0.0
    %v290 = vmax.f32 %v225, 0.0
    %v291 = vmax.f32 %v230, 0.0
    %v292 = vmax.f32 %v235, 0.0
    %v293 = vmax.f32 %v240, 0.0
    %v294 = vmax.f32 %v245, 0.0
    %v295 = vmax.f32 %v250, 0.0
    %v296 = vmax.f32 %v255, 0.0
    %v297 = vmax.f32 %v260, 0.0
    %v298 = vmax.f32 %v265, 0.0
    %v299 = vmax.f32 %v270, 0.0
    %v300 = vmax.f32 %v275, 0.0
    %v301 = vmax.f32 %v280, 0.0
    %302 = vrot.lane.b32.xlu0 %v33, 116
    %v303 = vpop.permute.xlu0 %302
    %304 = vrot.lane.b32.xlu0 %v34, 116
    %v305 = vpop.permute.xlu0 %304
    %306 = vrot.lane.b32.xlu0 %v35, 116
    %v307 = vpop.permute.xlu0 %306
    %308 = vrot.lane.b32.xlu0 %v36, 116
    %v309 = vpop.permute.xlu0 %308
    %310 = vrot.lane.b32.xlu0 %v37, 116
    %v311 = vpop.permute.xlu0 %310
    %312 = vrot.lane.b32.xlu0 %v38, 116
    %v313 = vpop.permute.xlu0 %312
    %314 = vrot.lane.b32.xlu0 %v39, 116
    %v315 = vpop.permute.xlu0 %314
    %316 = vrot.lane.b32.xlu0 %v40, 116
    %v317 = vpop.permute.xlu0 %316
    %318 = vrot.lane.b32.xlu0 %v41, 116
    %v319 = vpop.permute.xlu0 %318
    %320 = vrot.lane.b32.xlu0 %v42, 116
    %v321 = vpop.permute.xlu0 %320
    %322 = vrot.lane.b32.xlu0 %v43, 116
    %v323 = vpop.permute.xlu0 %322
    %324 = vrot.lane.b32.xlu0 %v44, 116
    %v325 = vpop.permute.xlu0 %324
    %326 = vrot.lane.b32.xlu0 %v45, 116
    %v327 = vpop.permute.xlu0 %326
    %328 = vrot.lane.b32.xlu0 %v46, 116
    %v329 = vpop.permute.xlu0 %328
    %330 = vrot.lane.b32.xlu0 %v47, 116
    %v331 = vpop.permute.xlu0 %330
    %332 = vrot.lane.b32.xlu0 %v48, 116
    %v333 = vpop.permute.xlu0 %332
    %334 = vrot.lane.b32.xlu0 %v49, 116
    %v335 = vpop.permute.xlu0 %334
    %336 = vrot.lane.b32.xlu0 %v50, 116
    %v337 = vpop.permute.xlu0 %336
    %338 = vrot.lane.b32.xlu0 %v51, 116
    %v339 = vpop.permute.xlu0 %338
    %v340 = vsel %vm61, %v303, 0
    %v342 = vsel %vm61, %v305, 0
    %v344 = vsel %vm61, %v307, 0
    %v346 = vsel %vm61, %v309, 0
    %v348 = vsel %vm61, %v311, 0
    %v350 = vsel %vm61, %v313, 0
    %v352 = vsel %vm61, %v315, 0
    %v354 = vsel %vm61, %v317, 0
    %v356 = vsel %vm61, %v319, 0
    %v358 = vsel %vm61, %v321, 0
    %v360 = vsel %vm61, %v323, 0
    %v362 = vsel %vm61, %v325, 0
    %v364 = vsel %vm61, %v327, 0
    %v366 = vsel %vm61, %v329, 0
    %v368 = vsel %vm61, %v331, 0
    %v370 = vsel %vm61, %v333, 0
    %v372 = vsel %vm61, %v335, 0
    %v374 = vsel %vm61, %v337, 0
    %v376 = vsel %vm61, %v339, 0
    %378 = vmatprep.subr.mxu0 0.0
    %379 = vmatpush1.msra.mxu0 0.0
    %380 = vmatprep.subr.mxu0 0.0
    %381 = vmatpush1.msra.mxu0 0.0
    %382 = vmatprep.subr.mxu0 0.0
    %383 = vmatpush1.msra.mxu0 0.0
    %384 = vmatprep.subr.mxu0 0.0
    %385 = vmatpush1.msra.mxu0 0.0
    %386 = vmatprep.subr.mxu0 0.0
    %387 = vmatpush1.msra.mxu0 0.0
    %388 = vmatprep.subr.mxu0 0.0
    %389 = vmatpush1.msra.mxu0 0.0
    %390 = vmatprep.subr.mxu0 0.0
    %391 = vmatpush1.msra.mxu0 0.0
    %392 = vmatprep.subr.mxu0 0.0
    %393 = vmatpush1.msra.mxu0 0.0
    %394 = vmatprep.subr.mxu0 0.0
    %395 = vmatpush1.msra.mxu0 0.0
    %396 = vmatprep.subr.mxu0 0.0
    %397 = vmatpush1.msra.mxu0 0.0
    %398 = vmatprep.subr.mxu0 0.0
    %399 = vmatpush1.msra.mxu0 0.0
    %400 = vmatprep.subr.mxu0 0.0
    %401 = vmatpush1.msra.mxu0 0.0
    %402 = vmatprep.subr.mxu0 0.0
    %403 = vmatpush1.msra.mxu0 0.0
    %404 = vmatprep.subr.mxu0 0.0
    %405 = vmatpush1.msra.mxu0 0.0
    %406 = vmatprep.subr.mxu0 0.0
    %407 = vmatpush1.msra.mxu0 %v121
    %408 = vmatprep.subr.mxu0 0.0
    %409 = vmatpush1.msra.mxu0 %v52
    %410 = vmatprep.subr.mxu0 0.0
    %411 = vmatpush2.msra.mxu0 0.0
    %412 = vmatprep.subr.mxu0 0.0
    %413 = vmatpush2.msra.mxu0 0.0
    %414 = vmatprep.subr.mxu0 0.0
    %415 = vmatpush2.msra.mxu0 0.0
    %416 = vmatprep.subr.mxu0 0.0
    %417 = vmatpush2.msra.mxu0 0.0
    %418 = vmatprep.subr.mxu0 0.0
    %419 = vmatpush2.msra.mxu0 0.0
    %420 = vmatprep.subr.mxu0 0.0
    %421 = vmatpush2.msra.mxu0 0.0
    %422 = vmatprep.subr.mxu0 0.0
    %423 = vmatpush2.msra.mxu0 0.0
    %424 = vmatprep.subr.mxu0 0.0
    %425 = vmatpush2.msra.mxu0 0.0
    %426 = vmatprep.subr.mxu0 0.0
    %427 = vmatpush2.msra.mxu0 0.0
    %428 = vmatprep.subr.mxu0 0.0
    %429 = vmatpush2.msra.mxu0 0.0
    %430 = vmatprep.subr.mxu0 0.0
    %431 = vmatpush2.msra.mxu0 0.0
    %432 = vmatprep.subr.mxu0 0.0
    %433 = vmatpush2.msra.mxu0 0.0
    %434 = vmatprep.subr.mxu0 0.0
    %435 = vmatpush2.msra.mxu0 0.0
    %436 = vmatprep.subr.mxu0 0.0
    %437 = vmatpush2.msra.mxu0 0.0
    %438 = vmatprep.subr.mxu0 0.0
    %439 = vmatpush2.msra.mxu0 0.0
    %440 = vmatprep.subr.mxu0 0.0
    %441 = vmatpush2.msra.mxu0 0.0
    %442 = vmatprep.mubr.f32.mxu0 0.0
    %443 = vmatmul.mubr.f32.gmra.mxu0 %v340
    %v444 = vpop.f32.mrf.mxu0
    %v445 = vadd.f32 %v59, %v444
    %v446 = vpop.f32.mrf.mxu0
    %447 = vmatprep.mubr.f32.mxu0 0.0
    %448 = vmatmul.mubr.f32.gmra.mxu0 %v342
    %v449 = vpop.f32.mrf.mxu0
    %v450 = vadd.f32 %v59, %v449
    %v451 = vpop.f32.mrf.mxu0
    %452 = vmatprep.mubr.f32.mxu0 0.0
    %453 = vmatmul.mubr.f32.gmra.mxu0 %v344
    %v454 = vpop.f32.mrf.mxu0
    %v455 = vadd.f32 %v59, %v454
    %v456 = vpop.f32.mrf.mxu0
    %457 = vmatprep.mubr.f32.mxu0 0.0
    %458 = vmatmul.mubr.f32.gmra.mxu0 %v346
    %v459 = vpop.f32.mrf.mxu0
    %v460 = vadd.f32 %v59, %v459
    %v461 = vpop.f32.mrf.mxu0
    %462 = vmatprep.mubr.f32.mxu0 0.0
    %463 = vmatmul.mubr.f32.gmra.mxu0 %v348
    %v464 = vpop.f32.mrf.mxu0
    %v465 = vadd.f32 %v59, %v464
    %v466 = vpop.f32.mrf.mxu0
    %467 = vmatprep.mubr.f32.mxu0 0.0
    %468 = vmatmul.mubr.f32.gmra.mxu0 %v350
    %v469 = vpop.f32.mrf.mxu0
    %v470 = vadd.f32 %v59, %v469
    %v471 = vpop.f32.mrf.mxu0
    %472 = vmatprep.mubr.f32.mxu0 0.0
    %473 = vmatmul.mubr.f32.gmra.mxu0 %v352
    %v474 = vpop.f32.mrf.mxu0
    %v475 = vadd.f32 %v59, %v474
    %v476 = vpop.f32.mrf.mxu0
    %477 = vmatprep.mubr.f32.mxu0 0.0
    %478 = vmatmul.mubr.f32.gmra.mxu0 %v354
    %v479 = vpop.f32.mrf.mxu0
    %v480 = vadd.f32 %v59, %v479
    %v481 = vpop.f32.mrf.mxu0
    %482 = vmatprep.mubr.f32.mxu0 0.0
    %483 = vmatmul.mubr.f32.gmra.mxu0 %v356
    %v484 = vpop.f32.mrf.mxu0
    %v485 = vadd.f32 %v59, %v484
    %v486 = vpop.f32.mrf.mxu0
    %487 = vmatprep.mubr.f32.mxu0 0.0
    %488 = vmatmul.mubr.f32.gmra.mxu0 %v358
    %v489 = vpop.f32.mrf.mxu0
    %v490 = vadd.f32 %v59, %v489
    %v491 = vpop.f32.mrf.mxu0
    %492 = vmatprep.mubr.f32.mxu0 0.0
    %493 = vmatmul.mubr.f32.gmra.mxu0 %v360
    %v494 = vpop.f32.mrf.mxu0
    %v495 = vadd.f32 %v59, %v494
    %v496 = vpop.f32.mrf.mxu0
    %497 = vmatprep.mubr.f32.mxu0 0.0
    %498 = vmatmul.mubr.f32.gmra.mxu0 %v362
    %v499 = vpop.f32.mrf.mxu0
    %v500 = vadd.f32 %v59, %v499
    %v501 = vpop.f32.mrf.mxu0
    %502 = vmatprep.mubr.f32.mxu0 0.0
    %503 = vmatmul.mubr.f32.gmra.mxu0 %v364
    %v504 = vpop.f32.mrf.mxu0
    %v505 = vadd.f32 %v59, %v504
    %v506 = vpop.f32.mrf.mxu0
    %507 = vmatprep.mubr.f32.mxu0 0.0
    %508 = vmatmul.mubr.f32.gmra.mxu0 %v366
    %v509 = vpop.f32.mrf.mxu0
    %v510 = vadd.f32 %v59, %v509
    %v511 = vpop.f32.mrf.mxu0
    %512 = vmatprep.mubr.f32.mxu0 0.0
    %513 = vmatmul.mubr.f32.gmra.mxu0 %v368
    %v514 = vpop.f32.mrf.mxu0
    %v515 = vadd.f32 %v59, %v514
    %v516 = vpop.f32.mrf.mxu0
    %517 = vmatprep.mubr.f32.mxu0 0.0
    %518 = vmatmul.mubr.f32.gmra.mxu0 %v370
    %v519 = vpop.f32.mrf.mxu0
    %v520 = vadd.f32 %v59, %v519
    %v521 = vpop.f32.mrf.mxu0
    %522 = vmatprep.mubr.f32.mxu0 0.0
    %523 = vmatmul.mubr.f32.gmra.mxu0 %v372
    %v524 = vpop.f32.mrf.mxu0
    %v525 = vadd.f32 %v59, %v524
    %v526 = vpop.f32.mrf.mxu0
    %527 = vmatprep.mubr.f32.mxu0 0.0
    %528 = vmatmul.mubr.f32.gmra.mxu0 %v374
    %v529 = vpop.f32.mrf.mxu0
    %v530 = vadd.f32 %v59, %v529
    %v531 = vpop.f32.mrf.mxu0
    %532 = vmatprep.mubr.f32.mxu0 0.0
    %533 = vmatmul.mubr.f32.gmra.mxu0 %v376
    %v534 = vpop.f32.mrf.mxu0
    %v535 = vadd.f32 %v59, %v534
    %v536 = vpop.f32.mrf.mxu0
    %537 = vdwg.mxu0
    %v538 = vmax.f32 %v445, 0.0
    %v539 = vmax.f32 %v450, 0.0
    %v540 = vmax.f32 %v455, 0.0
    %v541 = vmax.f32 %v460, 0.0
    %v542 = vmax.f32 %v465, 0.0
    %v543 = vmax.f32 %v470, 0.0
    %v544 = vmax.f32 %v475, 0.0
    %v545 = vmax.f32 %v480, 0.0
    %v546 = vmax.f32 %v485, 0.0
    %v547 = vmax.f32 %v490, 0.0
    %v548 = vmax.f32 %v495, 0.0
    %v549 = vmax.f32 %v500, 0.0
    %v550 = vmax.f32 %v505, 0.0
    %v551 = vmax.f32 %v510, 0.0
    %v552 = vmax.f32 %v515, 0.0
    %v553 = vmax.f32 %v520, 0.0
    %v554 = vmax.f32 %v525, 0.0
    %v555 = vmax.f32 %v530, 0.0
    %v556 = vmax.f32 %v535, 0.0
    %557 = vrot.lane.b32.xlu0 %v33, 104
    %v558 = vpop.permute.xlu0 %557
    %559 = vrot.lane.b32.xlu0 %v34, 104
    %v560 = vpop.permute.xlu0 %559
    %561 = vrot.lane.b32.xlu0 %v35, 104
    %v562 = vpop.permute.xlu0 %561
    %563 = vrot.lane.b32.xlu0 %v36, 104
    %v564 = vpop.permute.xlu0 %563
    %565 = vrot.lane.b32.xlu0 %v37, 104
    %v566 = vpop.permute.xlu0 %565
    %567 = vrot.lane.b32.xlu0 %v38, 104
    %v568 = vpop.permute.xlu0 %567
    %569 = vrot.lane.b32.xlu0 %v39, 104
    %v570 = vpop.permute.xlu0 %569
    %571 = vrot.lane.b32.xlu0 %v40, 104
    %v572 = vpop.permute.xlu0 %571
    %573 = vrot.lane.b32.xlu0 %v41, 104
    %v574 = vpop.permute.xlu0 %573
    %575 = vrot.lane.b32.xlu0 %v42, 104
    %v576 = vpop.permute.xlu0 %575
    %577 = vrot.lane.b32.xlu0 %v43, 104
    %v578 = vpop.permute.xlu0 %577
    %579 = vrot.lane.b32.xlu0 %v44, 104
    %v580 = vpop.permute.xlu0 %579
    %581 = vrot.lane.b32.xlu0 %v45, 104
    %v582 = vpop.permute.xlu0 %581
    %583 = vrot.lane.b32.xlu0 %v46, 104
    %v584 = vpop.permute.xlu0 %583
    %585 = vrot.lane.b32.xlu0 %v47, 104
    %v586 = vpop.permute.xlu0 %585
    %587 = vrot.lane.b32.xlu0 %v48, 104
    %v588 = vpop.permute.xlu0 %587
    %589 = vrot.lane.b32.xlu0 %v49, 104
    %v590 = vpop.permute.xlu0 %589
    %591 = vrot.lane.b32.xlu0 %v50, 104
    %v592 = vpop.permute.xlu0 %591
    %593 = vrot.lane.b32.xlu0 %v51, 104
    %v594 = vpop.permute.xlu0 %593
    %v595 = vsel %vm61, %v558, 0
    %v597 = vsel %vm61, %v560, 0
    %v599 = vsel %vm61, %v562, 0
    %v601 = vsel %vm61, %v564, 0
    %v603 = vsel %vm61, %v566, 0
    %v605 = vsel %vm61, %v568, 0
    %v607 = vsel %vm61, %v570, 0
    %v609 = vsel %vm61, %v572, 0
    %v611 = vsel %vm61, %v574, 0
    %v613 = vsel %vm61, %v576, 0
    %v615 = vsel %vm61, %v578, 0
    %v617 = vsel %vm61, %v580, 0
    %v619 = vsel %vm61, %v582, 0
    %v621 = vsel %vm61, %v584, 0
    %v623 = vsel %vm61, %v586, 0
    %v625 = vsel %vm61, %v588, 0
    %v627 = vsel %vm61, %v590, 0
    %v629 = vsel %vm61, %v592, 0
    %v631 = vsel %vm61, %v594, 0
    %633 = vmatprep.subr.mxu0 0.0
    %634 = vmatpush1.msra.mxu0 0.0
    %635 = vmatprep.subr.mxu0 0.0
    %636 = vmatpush1.msra.mxu0 0.0
    %637 = vmatprep.subr.mxu0 0.0
    %638 = vmatpush1.msra.mxu0 0.0
    %639 = vmatprep.subr.mxu0 0.0
    %640 = vmatpush1.msra.mxu0 0.0
    %641 = vmatprep.subr.mxu0 0.0
    %642 = vmatpush1.msra.mxu0 0.0
    %643 = vmatprep.subr.mxu0 0.0
    %644 = vmatpush1.msra.mxu0 0.0
    %645 = vmatprep.subr.mxu0 0.0
    %646 = vmatpush1.msra.mxu0 0.0
    %647 = vmatprep.subr.mxu0 0.0
    %648 = vmatpush1.msra.mxu0 0.0
    %649 = vmatprep.subr.mxu0 0.0
    %650 = vmatpush1.msra.mxu0 0.0
    %651 = vmatprep.subr.mxu0 0.0
    %652 = vmatpush1.msra.mxu0 0.0
    %653 = vmatprep.subr.mxu0 0.0
    %654 = vmatpush1.msra.mxu0 0.0
    %655 = vmatprep.subr.mxu0 0.0
    %656 = vmatpush1.msra.mxu0 0.0
    %657 = vmatprep.subr.mxu0 0.0
    %658 = vmatpush1.msra.mxu0 0.0
    %659 = vmatprep.subr.mxu0 0.0
    %660 = vmatpush1.msra.mxu0 0.0
    %661 = vmatprep.subr.mxu0 0.0
    %662 = vmatpush1.msra.mxu0 %v121
    %663 = vmatprep.subr.mxu0 0.0
    %664 = vmatpush1.msra.mxu0 %v52
    %665 = vmatprep.subr.mxu0 0.0
    %666 = vmatpush2.msra.mxu0 0.0
    %667 = vmatprep.subr.mxu0 0.0
    %668 = vmatpush2.msra.mxu0 0.0
    %669 = vmatprep.subr.mxu0 0.0
    %670 = vmatpush2.msra.mxu0 0.0
    %671 = vmatprep.subr.mxu0 0.0
    %672 = vmatpush2.msra.mxu0 0.0
    %673 = vmatprep.subr.mxu0 0.0
    %674 = vmatpush2.msra.mxu0 0.0
    %675 = vmatprep.subr.mxu0 0.0
    %676 = vmatpush2.msra.mxu0 0.0
    %677 = vmatprep.subr.mxu0 0.0
    %678 = vmatpush2.msra.mxu0 0.0
    %679 = vmatprep.subr.mxu0 0.0
    %680 = vmatpush2.msra.mxu0 0.0
    %681 = vmatprep.subr.mxu0 0.0
    %682 = vmatpush2.msra.mxu0 0.0
    %683 = vmatprep.subr.mxu0 0.0
    %684 = vmatpush2.msra.mxu0 0.0
    %685 = vmatprep.subr.mxu0 0.0
    %686 = vmatpush2.msra.mxu0 0.0
    %687 = vmatprep.subr.mxu0 0.0
    %688 = vmatpush2.msra.mxu0 0.0
    %689 = vmatprep.subr.mxu0 0.0
    %690 = vmatpush2.msra.mxu0 0.0
    %691 = vmatprep.subr.mxu0 0.0
    %692 = vmatpush2.msra.mxu0 0.0
    %693 = vmatprep.subr.mxu0 0.0
    %694 = vmatpush2.msra.mxu0 0.0
    %695 = vmatprep.subr.mxu0 0.0
    %696 = vmatpush2.msra.mxu0 0.0
    %697 = vmatprep.mubr.f32.mxu0 0.0
    %698 = vmatmul.mubr.f32.gmra.mxu0 %v595
    %v699 = vpop.f32.mrf.mxu0
    %v700 = vadd.f32 %v59, %v699
    %v701 = vpop.f32.mrf.mxu0
    %702 = vmatprep.mubr.f32.mxu0 0.0
    %703 = vmatmul.mubr.f32.gmra.mxu0 %v597
    %v704 = vpop.f32.mrf.mxu0
    %v705 = vadd.f32 %v59, %v704
    %v706 = vpop.f32.mrf.mxu0
    %707 = vmatprep.mubr.f32.mxu0 0.0
    %708 = vmatmul.mubr.f32.gmra.mxu0 %v599
    %v709 = vpop.f32.mrf.mxu0
    %v710 = vadd.f32 %v59, %v709
    %v711 = vpop.f32.mrf.mxu0
    %712 = vmatprep.mubr.f32.mxu0 0.0
    %713 = vmatmul.mubr.f32.gmra.mxu0 %v601
    %v714 = vpop.f32.mrf.mxu0
    %v715 = vadd.f32 %v59, %v714
    %v716 = vpop.f32.mrf.mxu0
    %717 = vmatprep.mubr.f32.mxu0 0.0
    %718 = vmatmul.mubr.f32.gmra.mxu0 %v603
    %v719 = vpop.f32.mrf.mxu0
    %v720 = vadd.f32 %v59, %v719
    %v721 = vpop.f32.mrf.mxu0
    %722 = vmatprep.mubr.f32.mxu0 0.0
    %723 = vmatmul.mubr.f32.gmra.mxu0 %v605
    %v724 = vpop.f32.mrf.mxu0
    %v725 = vadd.f32 %v59, %v724
    %v726 = vpop.f32.mrf.mxu0
    %727 = vmatprep.mubr.f32.mxu0 0.0
    %728 = vmatmul.mubr.f32.gmra.mxu0 %v607
    %v729 = vpop.f32.mrf.mxu0
    %v730 = vadd.f32 %v59, %v729
    %v731 = vpop.f32.mrf.mxu0
    %732 = vmatprep.mubr.f32.mxu0 0.0
    %733 = vmatmul.mubr.f32.gmra.mxu0 %v609
    %v734 = vpop.f32.mrf.mxu0
    %v735 = vadd.f32 %v59, %v734
    %v736 = vpop.f32.mrf.mxu0
    %737 = vmatprep.mubr.f32.mxu0 0.0
    %738 = vmatmul.mubr.f32.gmra.mxu0 %v611
    %v739 = vpop.f32.mrf.mxu0
    %v740 = vadd.f32 %v59, %v739
    %v741 = vpop.f32.mrf.mxu0
    %742 = vmatprep.mubr.f32.mxu0 0.0
    %743 = vmatmul.mubr.f32.gmra.mxu0 %v613
    %v744 = vpop.f32.mrf.mxu0
    %v745 = vadd.f32 %v59, %v744
    %v746 = vpop.f32.mrf.mxu0
    %747 = vmatprep.mubr.f32.mxu0 0.0
    %748 = vmatmul.mubr.f32.gmra.mxu0 %v615
    %v749 = vpop.f32.mrf.mxu0
    %v750 = vadd.f32 %v59, %v749
    %v751 = vpop.f32.mrf.mxu0
    %752 = vmatprep.mubr.f32.mxu0 0.0
    %753 = vmatmul.mubr.f32.gmra.mxu0 %v617
    %v754 = vpop.f32.mrf.mxu0
    %v755 = vadd.f32 %v59, %v754
    %v756 = vpop.f32.mrf.mxu0
    %757 = vmatprep.mubr.f32.mxu0 0.0
    %758 = vmatmul.mubr.f32.gmra.mxu0 %v619
    %v759 = vpop.f32.mrf.mxu0
    %v760 = vadd.f32 %v59, %v759
    %v761 = vpop.f32.mrf.mxu0
    %762 = vmatprep.mubr.f32.mxu0 0.0
    %763 = vmatmul.mubr.f32.gmra.mxu0 %v621
    %v764 = vpop.f32.mrf.mxu0
    %v765 = vadd.f32 %v59, %v764
    %v766 = vpop.f32.mrf.mxu0
    %767 = vmatprep.mubr.f32.mxu0 0.0
    %768 = vmatmul.mubr.f32.gmra.mxu0 %v623
    %v769 = vpop.f32.mrf.mxu0
    %v770 = vadd.f32 %v59, %v769
    %v771 = vpop.f32.mrf.mxu0
    %772 = vmatprep.mubr.f32.mxu0 0.0
    %773 = vmatmul.mubr.f32.gmra.mxu0 %v625
    %v774 = vpop.f32.mrf.mxu0
    %v775 = vadd.f32 %v59, %v774
    %v776 = vpop.f32.mrf.mxu0
    %777 = vmatprep.mubr.f32.mxu0 0.0
    %778 = vmatmul.mubr.f32.gmra.mxu0 %v627
    %v779 = vpop.f32.mrf.mxu0
    %v780 = vadd.f32 %v59, %v779
    %v781 = vpop.f32.mrf.mxu0
    %782 = vmatprep.mubr.f32.mxu0 0.0
    %783 = vmatmul.mubr.f32.gmra.mxu0 %v629
    %v784 = vpop.f32.mrf.mxu0
    %v785 = vadd.f32 %v59, %v784
    %v786 = vpop.f32.mrf.mxu0
    %787 = vmatprep.mubr.f32.mxu0 0.0
    %788 = vmatmul.mubr.f32.gmra.mxu0 %v631
    %v789 = vpop.f32.mrf.mxu0
    %v790 = vadd.f32 %v59, %v789
    %v791 = vpop.f32.mrf.mxu0
    %792 = vdwg.mxu0
    %v793 = vmax.f32 %v700, 0.0
    %v794 = vmax.f32 %v705, 0.0
    %v795 = vmax.f32 %v710, 0.0
    %v796 = vmax.f32 %v715, 0.0
    %v797 = vmax.f32 %v720, 0.0
    %v798 = vmax.f32 %v725, 0.0
    %v799 = vmax.f32 %v730, 0.0
    %v800 = vmax.f32 %v735, 0.0
    %v801 = vmax.f32 %v740, 0.0
    %v802 = vmax.f32 %v745, 0.0
    %v803 = vmax.f32 %v750, 0.0
    %v804 = vmax.f32 %v755, 0.0
    %v805 = vmax.f32 %v760, 0.0
    %v806 = vmax.f32 %v765, 0.0
    %v807 = vmax.f32 %v770, 0.0
    %v808 = vmax.f32 %v775, 0.0
    %v809 = vmax.f32 %v780, 0.0
    %v810 = vmax.f32 %v785, 0.0
    %v811 = vmax.f32 %v790, 0.0
    %812 = vrot.lane.b32.xlu0 %v33, 92
    %v813 = vpop.permute.xlu0 %812
    %814 = vrot.lane.b32.xlu0 %v34, 92
    %v815 = vpop.permute.xlu0 %814
    %816 = vrot.lane.b32.xlu0 %v35, 92
    %v817 = vpop.permute.xlu0 %816
    %818 = vrot.lane.b32.xlu0 %v36, 92
    %v819 = vpop.permute.xlu0 %818
    %820 = vrot.lane.b32.xlu0 %v37, 92
    %v821 = vpop.permute.xlu0 %820
    %822 = vrot.lane.b32.xlu0 %v38, 92
    %v823 = vpop.permute.xlu0 %822
    %824 = vrot.lane.b32.xlu0 %v39, 92
    %v825 = vpop.permute.xlu0 %824
    %826 = vrot.lane.b32.xlu0 %v40, 92
    %v827 = vpop.permute.xlu0 %826
    %828 = vrot.lane.b32.xlu0 %v41, 92
    %v829 = vpop.permute.xlu0 %828
    %830 = vrot.lane.b32.xlu0 %v42, 92
    %v831 = vpop.permute.xlu0 %830
    %832 = vrot.lane.b32.xlu0 %v43, 92
    %v833 = vpop.permute.xlu0 %832
    %834 = vrot.lane.b32.xlu0 %v44, 92
    %v835 = vpop.permute.xlu0 %834
    %836 = vrot.lane.b32.xlu0 %v45, 92
    %v837 = vpop.permute.xlu0 %836
    %838 = vrot.lane.b32.xlu0 %v46, 92
    %v839 = vpop.permute.xlu0 %838
    %840 = vrot.lane.b32.xlu0 %v47, 92
    %v841 = vpop.permute.xlu0 %840
    %842 = vrot.lane.b32.xlu0 %v48, 92
    %v843 = vpop.permute.xlu0 %842
    %844 = vrot.lane.b32.xlu0 %v49, 92
    %v845 = vpop.permute.xlu0 %844
    %846 = vrot.lane.b32.xlu0 %v50, 92
    %v847 = vpop.permute.xlu0 %846
    %848 = vrot.lane.b32.xlu0 %v51, 92
    %v849 = vpop.permute.xlu0 %848
    %v850 = vsel %vm61, %v813, 0
    %v852 = vsel %vm61, %v815, 0
    %v854 = vsel %vm61, %v817, 0
    %v856 = vsel %vm61, %v819, 0
    %v858 = vsel %vm61, %v821, 0
    %v860 = vsel %vm61, %v823, 0
    %v862 = vsel %vm61, %v825, 0
    %v864 = vsel %vm61, %v827, 0
    %v866 = vsel %vm61, %v829, 0
    %v868 = vsel %vm61, %v831, 0
    %v870 = vsel %vm61, %v833, 0
    %v872 = vsel %vm61, %v835, 0
    %v874 = vsel %vm61, %v837, 0
    %v876 = vsel %vm61, %v839, 0
    %v878 = vsel %vm61, %v841, 0
    %v880 = vsel %vm61, %v843, 0
    %v882 = vsel %vm61, %v845, 0
    %v884 = vsel %vm61, %v847, 0
    %v886 = vsel %vm61, %v849, 0
    %888 = vmatprep.subr.mxu0 0.0
    %889 = vmatpush1.msra.mxu0 0.0
    %890 = vmatprep.subr.mxu0 0.0
    %891 = vmatpush1.msra.mxu0 0.0
    %892 = vmatprep.subr.mxu0 0.0
    %893 = vmatpush1.msra.mxu0 0.0
    %894 = vmatprep.subr.mxu0 0.0
    %895 = vmatpush1.msra.mxu0 0.0
    %896 = vmatprep.subr.mxu0 0.0
    %897 = vmatpush1.msra.mxu0 0.0
    %898 = vmatprep.subr.mxu0 0.0
    %899 = vmatpush1.msra.mxu0 0.0
    %900 = vmatprep.subr.mxu0 0.0
    %901 = vmatpush1.msra.mxu0 0.0
    %902 = vmatprep.subr.mxu0 0.0
    %903 = vmatpush1.msra.mxu0 0.0
    %904 = vmatprep.subr.mxu0 0.0
    %905 = vmatpush1.msra.mxu0 0.0
    %906 = vmatprep.subr.mxu0 0.0
    %907 = vmatpush1.msra.mxu0 0.0
    %908 = vmatprep.subr.mxu0 0.0
    %909 = vmatpush1.msra.mxu0 0.0
    %910 = vmatprep.subr.mxu0 0.0
    %911 = vmatpush1.msra.mxu0 0.0
    %912 = vmatprep.subr.mxu0 0.0
    %913 = vmatpush1.msra.mxu0 0.0
    %914 = vmatprep.subr.mxu0 0.0
    %915 = vmatpush1.msra.mxu0 0.0
    %916 = vmatprep.subr.mxu0 0.0
    %917 = vmatpush1.msra.mxu0 %v121
    %918 = vmatprep.subr.mxu0 0.0
    %919 = vmatpush1.msra.mxu0 %v52
    %920 = vmatprep.subr.mxu0 0.0
    %921 = vmatpush2.msra.mxu0 0.0
    %922 = vmatprep.subr.mxu0 0.0
    %923 = vmatpush2.msra.mxu0 0.0
    %924 = vmatprep.subr.mxu0 0.0
    %925 = vmatpush2.msra.mxu0 0.0
    %926 = vmatprep.subr.mxu0 0.0
    %927 = vmatpush2.msra.mxu0 0.0
    %928 = vmatprep.subr.mxu0 0.0
    %929 = vmatpush2.msra.mxu0 0.0
    %930 = vmatprep.subr.mxu0 0.0
    %931 = vmatpush2.msra.mxu0 0.0
    %932 = vmatprep.subr.mxu0 0.0
    %933 = vmatpush2.msra.mxu0 0.0
    %934 = vmatprep.subr.mxu0 0.0
    %935 = vmatpush2.msra.mxu0 0.0
    %936 = vmatprep.subr.mxu0 0.0
    %937 = vmatpush2.msra.mxu0 0.0
    %938 = vmatprep.subr.mxu0 0.0
    %939 = vmatpush2.msra.mxu0 0.0
    %940 = vmatprep.subr.mxu0 0.0
    %941 = vmatpush2.msra.mxu0 0.0
    %942 = vmatprep.subr.mxu0 0.0
    %943 = vmatpush2.msra.mxu0 0.0
    %944 = vmatprep.subr.mxu0 0.0
    %945 = vmatpush2.msra.mxu0 0.0
    %946 = vmatprep.subr.mxu0 0.0
    %947 = vmatpush2.msra.mxu0 0.0
    %948 = vmatprep.subr.mxu0 0.0
    %949 = vmatpush2.msra.mxu0 0.0
    %950 = vmatprep.subr.mxu0 0.0
    %951 = vmatpush2.msra.mxu0 0.0
    %952 = vmatprep.mubr.f32.mxu0 0.0
    %953 = vmatmul.mubr.f32.gmra.mxu0 %v850
    %v954 = vpop.f32.mrf.mxu0
    %v955 = vadd.f32 %v59, %v954
    %v956 = vpop.f32.mrf.mxu0
    %957 = vmatprep.mubr.f32.mxu0 0.0
    %958 = vmatmul.mubr.f32.gmra.mxu0 %v852
    %v959 = vpop.f32.mrf.mxu0
    %v960 = vadd.f32 %v59, %v959
    %v961 = vpop.f32.mrf.mxu0
    %962 = vmatprep.mubr.f32.mxu0 0.0
    %963 = vmatmul.mubr.f32.gmra.mxu0 %v854
    %v964 = vpop.f32.mrf.mxu0
    %v965 = vadd.f32 %v59, %v964
    %v966 = vpop.f32.mrf.mxu0
    %967 = vmatprep.mubr.f32.mxu0 0.0
    %968 = vmatmul.mubr.f32.gmra.mxu0 %v856
    %v969 = vpop.f32.mrf.mxu0
    %v970 = vadd.f32 %v59, %v969
    %v971 = vpop.f32.mrf.mxu0
    %972 = vmatprep.mubr.f32.mxu0 0.0
    %973 = vmatmul.mubr.f32.gmra.mxu0 %v858
    %v974 = vpop.f32.mrf.mxu0
    %v975 = vadd.f32 %v59, %v974
    %v976 = vpop.f32.mrf.mxu0
    %977 = vmatprep.mubr.f32.mxu0 0.0
    %978 = vmatmul.mubr.f32.gmra.mxu0 %v860
    %v979 = vpop.f32.mrf.mxu0
    %v980 = vadd.f32 %v59, %v979
    %v981 = vpop.f32.mrf.mxu0
    %982 = vmatprep.mubr.f32.mxu0 0.0
    %983 = vmatmul.mubr.f32.gmra.mxu0 %v862
    %v984 = vpop.f32.mrf.mxu0
    %v985 = vadd.f32 %v59, %v984
    %v986 = vpop.f32.mrf.mxu0
    %987 = vmatprep.mubr.f32.mxu0 0.0
    %988 = vmatmul.mubr.f32.gmra.mxu0 %v864
    %v989 = vpop.f32.mrf.mxu0
    %v990 = vadd.f32 %v59, %v989
    %v991 = vpop.f32.mrf.mxu0
    %992 = vmatprep.mubr.f32.mxu0 0.0
    %993 = vmatmul.mubr.f32.gmra.mxu0 %v866
    %v994 = vpop.f32.mrf.mxu0
    %v995 = vadd.f32 %v59, %v994
    %v996 = vpop.f32.mrf.mxu0
    %997 = vmatprep.mubr.f32.mxu0 0.0
    %998 = vmatmul.mubr.f32.gmra.mxu0 %v868
    %v999 = vpop.f32.mrf.mxu0
    %v1000 = vadd.f32 %v59, %v999
    %v1001 = vpop.f32.mrf.mxu0
    %1002 = vmatprep.mubr.f32.mxu0 0.0
    %1003 = vmatmul.mubr.f32.gmra.mxu0 %v870
    %v1004 = vpop.f32.mrf.mxu0
    %v1005 = vadd.f32 %v59, %v1004
    %v1006 = vpop.f32.mrf.mxu0
    %1007 = vmatprep.mubr.f32.mxu0 0.0
    %1008 = vmatmul.mubr.f32.gmra.mxu0 %v872
    %v1009 = vpop.f32.mrf.mxu0
    %v1010 = vadd.f32 %v59, %v1009
    %v1011 = vpop.f32.mrf.mxu0
    %1012 = vmatprep.mubr.f32.mxu0 0.0
    %1013 = vmatmul.mubr.f32.gmra.mxu0 %v874
    %v1014 = vpop.f32.mrf.mxu0
    %v1015 = vadd.f32 %v59, %v1014
    %v1016 = vpop.f32.mrf.mxu0
    %1017 = vmatprep.mubr.f32.mxu0 0.0
    %1018 = vmatmul.mubr.f32.gmra.mxu0 %v876
    %v1019 = vpop.f32.mrf.mxu0
    %v1020 = vadd.f32 %v59, %v1019
    %v1021 = vpop.f32.mrf.mxu0
    %1022 = vmatprep.mubr.f32.mxu0 0.0
    %1023 = vmatmul.mubr.f32.gmra.mxu0 %v878
    %v1024 = vpop.f32.mrf.mxu0
    %v1025 = vadd.f32 %v59, %v1024
    %v1026 = vpop.f32.mrf.mxu0
    %1027 = vmatprep.mubr.f32.mxu0 0.0
    %1028 = vmatmul.mubr.f32.gmra.mxu0 %v880
    %v1029 = vpop.f32.mrf.mxu0
    %v1030 = vadd.f32 %v59, %v1029
    %v1031 = vpop.f32.mrf.mxu0
    %1032 = vmatprep.mubr.f32.mxu0 0.0
    %1033 = vmatmul.mubr.f32.gmra.mxu0 %v882
    %v1034 = vpop.f32.mrf.mxu0
    %v1035 = vadd.f32 %v59, %v1034
    %v1036 = vpop.f32.mrf.mxu0
    %1037 = vmatprep.mubr.f32.mxu0 0.0
    %1038 = vmatmul.mubr.f32.gmra.mxu0 %v884
    %v1039 = vpop.f32.mrf.mxu0
    %v1040 = vadd.f32 %v59, %v1039
    %v1041 = vpop.f32.mrf.mxu0
    %1042 = vmatprep.mubr.f32.mxu0 0.0
    %1043 = vmatmul.mubr.f32.gmra.mxu0 %v886
    %v1044 = vpop.f32.mrf.mxu0
    %v1045 = vadd.f32 %v59, %v1044
    %v1046 = vpop.f32.mrf.mxu0
    %1047 = vdwg.mxu0
    %v1048 = vmax.f32 %v955, 0.0
    %v1049 = vmax.f32 %v960, 0.0
    %v1050 = vmax.f32 %v965, 0.0
    %v1051 = vmax.f32 %v970, 0.0
    %v1052 = vmax.f32 %v975, 0.0
    %v1053 = vmax.f32 %v980, 0.0
    %v1054 = vmax.f32 %v985, 0.0
    %v1055 = vmax.f32 %v990, 0.0
    %v1056 = vmax.f32 %v995, 0.0
    %v1057 = vmax.f32 %v1000, 0.0
    %v1058 = vmax.f32 %v1005, 0.0
    %v1059 = vmax.f32 %v1010, 0.0
    %v1060 = vmax.f32 %v1015, 0.0
    %v1061 = vmax.f32 %v1020, 0.0
    %v1062 = vmax.f32 %v1025, 0.0
    %v1063 = vmax.f32 %v1030, 0.0
    %v1064 = vmax.f32 %v1035, 0.0
    %v1065 = vmax.f32 %v1040, 0.0
    %v1066 = vmax.f32 %v1045, 0.0
    %v1067 = vld [vmem:[%s3] sm:$0xff]
    %v1068 = vld [vmem:[%s3 + $0x8] sm:$0xff]
    %v1069 = vld [vmem:[%s3 + $0x10] sm:$0xf]
    %s1070 = scalar_lea.vmem %s3, 24
    %v1071 = vld [vmem:[%s1070] sm:$0xff]
    %v1072 = vld [vmem:[%s1070 + $0x8] sm:$0xff]
    %v1073 = vld [vmem:[%s1070 + $0x10] sm:$0xf]
    %v1074 = vld [vmem:[%s4] sm:$0x1]
    %vm1075 = vcmask 162816
    %v1077 = vsel %vm1075, %v538, 0
    %v1080 = vsel %vm1075, %v539, 0
    %v1083 = vsel %vm1075, %v540, 0
    %v1086 = vsel %vm1075, %v541, 0
    %v1089 = vsel %vm1075, %v542, 0
    %v1092 = vsel %vm1075, %v543, 0
    %v1095 = vsel %vm1075, %v544, 0
    %v1098 = vsel %vm1075, %v545, 0
    %v1101 = vsel %vm1075, %v546, 0
    %v1104 = vsel %vm1075, %v547, 0
    %v1107 = vsel %vm1075, %v548, 0
    %v1110 = vsel %vm1075, %v549, 0
    %v1113 = vsel %vm1075, %v550, 0
    %v1116 = vsel %vm1075, %v551, 0
    %v1119 = vsel %vm1075, %v552, 0
    %v1122 = vsel %vm1075, %v553, 0
    %v1125 = vsel %vm1075, %v554, 0
    %v1128 = vsel %vm1075, %v555, 0
    %v1131 = vsel %vm1075, %v556, 0
    %v1134 = vsel %vm119, %v1073, 0
    %1136 = vmatprep.subr.mxu0 0.0
    %1137 = vmatpush1.msra.mxu0 0.0
    %1138 = vmatprep.subr.mxu0 0.0
    %1139 = vmatpush1.msra.mxu0 0.0
    %1140 = vmatprep.subr.mxu0 0.0
    %1141 = vmatpush1.msra.mxu0 0.0
    %1142 = vmatprep.subr.mxu0 0.0
    %1143 = vmatpush1.msra.mxu0 0.0
    %1144 = vmatprep.subr.mxu0 0.0
    %1145 = vmatpush1.msra.mxu0 0.0
    %1146 = vmatprep.subr.mxu0 0.0
    %1147 = vmatpush1.msra.mxu0 0.0
    %1148 = vmatprep.subr.mxu0 0.0
    %1149 = vmatpush1.msra.mxu0 0.0
    %1150 = vmatprep.subr.mxu0 0.0
    %1151 = vmatpush1.msra.mxu0 0.0
    %1152 = vmatprep.subr.mxu0 0.0
    %1153 = vmatpush1.msra.mxu0 0.0
    %1154 = vmatprep.subr.mxu0 0.0
    %1155 = vmatpush1.msra.mxu0 0.0
    %1156 = vmatprep.subr.mxu0 0.0
    %1157 = vmatpush1.msra.mxu0 0.0
    %1158 = vmatprep.subr.mxu0 0.0
    %1159 = vmatpush1.msra.mxu0 0.0
    %1160 = vmatprep.subr.mxu0 0.0
    %1161 = vmatpush1.msra.mxu0 0.0
    %1162 = vmatprep.subr.mxu0 0.0
    %1163 = vmatpush1.msra.mxu0 %v1134
    %1164 = vmatprep.subr.mxu0 0.0
    %1165 = vmatpush1.msra.mxu0 %v1072
    %1166 = vmatprep.subr.mxu0 0.0
    %1167 = vmatpush1.msra.mxu0 %v1071
    %1168 = vmatprep.subr.mxu0 0.0
    %1169 = vmatpush2.msra.mxu0 0.0
    %1170 = vmatprep.subr.mxu0 0.0
    %1171 = vmatpush2.msra.mxu0 0.0
    %1172 = vmatprep.subr.mxu0 0.0
    %1173 = vmatpush2.msra.mxu0 0.0
    %1174 = vmatprep.subr.mxu0 0.0
    %1175 = vmatpush2.msra.mxu0 0.0
    %1176 = vmatprep.subr.mxu0 0.0
    %1177 = vmatpush2.msra.mxu0 0.0
    %1178 = vmatprep.subr.mxu0 0.0
    %1179 = vmatpush2.msra.mxu0 0.0
    %1180 = vmatprep.subr.mxu0 0.0
    %1181 = vmatpush2.msra.mxu0 0.0
    %1182 = vmatprep.subr.mxu0 0.0
    %1183 = vmatpush2.msra.mxu0 0.0
    %1184 = vmatprep.subr.mxu0 0.0
    %1185 = vmatpush2.msra.mxu0 0.0
    %1186 = vmatprep.subr.mxu0 0.0
    %1187 = vmatpush2.msra.mxu0 0.0
    %1188 = vmatprep.subr.mxu0 0.0
    %1189 = vmatpush2.msra.mxu0 0.0
    %1190 = vmatprep.subr.mxu0 0.0
    %1191 = vmatpush2.msra.mxu0 0.0
    %1192 = vmatprep.subr.mxu0 0.0
    %1193 = vmatpush2.msra.mxu0 0.0
    %1194 = vmatprep.subr.mxu0 0.0
    %1195 = vmatpush2.msra.mxu0 0.0
    %1196 = vmatprep.subr.mxu0 0.0
    %1197 = vmatpush2.msra.mxu0 0.0
    %1198 = vmatprep.subr.mxu0 0.0
    %1199 = vmatpush2.msra.mxu0 0.0
    %1200 = vmatprep.mubr.f32.mxu0 0.0
    %1201 = vmatmul.mubr.f32.gmra.mxu0 %v1077
    %v1202 = vpop.f32.mrf.mxu0
    %v1203 = vadd.f32 0.0, %v1202
    %v1204 = vpop.f32.mrf.mxu0
    %1205 = vmatprep.mubr.f32.mxu0 0.0
    %1206 = vmatmul.mubr.f32.gmra.mxu0 %v1080
    %v1207 = vpop.f32.mrf.mxu0
    %v1208 = vadd.f32 0.0, %v1207
    %v1209 = vpop.f32.mrf.mxu0
    %1210 = vmatprep.mubr.f32.mxu0 0.0
    %1211 = vmatmul.mubr.f32.gmra.mxu0 %v1083
    %v1212 = vpop.f32.mrf.mxu0
    %v1213 = vadd.f32 0.0, %v1212
    %v1214 = vpop.f32.mrf.mxu0
    %1215 = vmatprep.mubr.f32.mxu0 0.0
    %1216 = vmatmul.mubr.f32.gmra.mxu0 %v1086
    %v1217 = vpop.f32.mrf.mxu0
    %v1218 = vadd.f32 0.0, %v1217
    %v1219 = vpop.f32.mrf.mxu0
    %1220 = vmatprep.mubr.f32.mxu0 0.0
    %1221 = vmatmul.mubr.f32.gmra.mxu0 %v1089
    %v1222 = vpop.f32.mrf.mxu0
    %v1223 = vadd.f32 0.0, %v1222
    %v1224 = vpop.f32.mrf.mxu0
    %1225 = vmatprep.mubr.f32.mxu0 0.0
    %1226 = vmatmul.mubr.f32.gmra.mxu0 %v1092
    %v1227 = vpop.f32.mrf.mxu0
    %v1228 = vadd.f32 0.0, %v1227
    %v1229 = vpop.f32.mrf.mxu0
    %1230 = vmatprep.mubr.f32.mxu0 0.0
    %1231 = vmatmul.mubr.f32.gmra.mxu0 %v1095
    %v1232 = vpop.f32.mrf.mxu0
    %v1233 = vadd.f32 0.0, %v1232
    %v1234 = vpop.f32.mrf.mxu0
    %1235 = vmatprep.mubr.f32.mxu0 0.0
    %1236 = vmatmul.mubr.f32.gmra.mxu0 %v1098
    %v1237 = vpop.f32.mrf.mxu0
    %v1238 = vadd.f32 0.0, %v1237
    %v1239 = vpop.f32.mrf.mxu0
    %1240 = vmatprep.mubr.f32.mxu0 0.0
    %1241 = vmatmul.mubr.f32.gmra.mxu0 %v1101
    %v1242 = vpop.f32.mrf.mxu0
    %v1243 = vadd.f32 0.0, %v1242
    %v1244 = vpop.f32.mrf.mxu0
    %1245 = vmatprep.mubr.f32.mxu0 0.0
    %1246 = vmatmul.mubr.f32.gmra.mxu0 %v1104
    %v1247 = vpop.f32.mrf.mxu0
    %v1248 = vadd.f32 0.0, %v1247
    %v1249 = vpop.f32.mrf.mxu0
    %1250 = vmatprep.mubr.f32.mxu0 0.0
    %1251 = vmatmul.mubr.f32.gmra.mxu0 %v1107
    %v1252 = vpop.f32.mrf.mxu0
    %v1253 = vadd.f32 0.0, %v1252
    %v1254 = vpop.f32.mrf.mxu0
    %1255 = vmatprep.mubr.f32.mxu0 0.0
    %1256 = vmatmul.mubr.f32.gmra.mxu0 %v1110
    %v1257 = vpop.f32.mrf.mxu0
    %v1258 = vadd.f32 0.0, %v1257
    %v1259 = vpop.f32.mrf.mxu0
    %1260 = vmatprep.mubr.f32.mxu0 0.0
    %1261 = vmatmul.mubr.f32.gmra.mxu0 %v1113
    %v1262 = vpop.f32.mrf.mxu0
    %v1263 = vadd.f32 0.0, %v1262
    %v1264 = vpop.f32.mrf.mxu0
    %1265 = vmatprep.mubr.f32.mxu0 0.0
    %1266 = vmatmul.mubr.f32.gmra.mxu0 %v1116
    %v1267 = vpop.f32.mrf.mxu0
    %v1268 = vadd.f32 0.0, %v1267
    %v1269 = vpop.f32.mrf.mxu0
    %1270 = vmatprep.mubr.f32.mxu0 0.0
    %1271 = vmatmul.mubr.f32.gmra.mxu0 %v1119
    %v1272 = vpop.f32.mrf.mxu0
    %v1273 = vadd.f32 0.0, %v1272
    %v1274 = vpop.f32.mrf.mxu0
    %1275 = vmatprep.mubr.f32.mxu0 0.0
    %1276 = vmatmul.mubr.f32.gmra.mxu0 %v1122
    %v1277 = vpop.f32.mrf.mxu0
    %v1278 = vadd.f32 0.0, %v1277
    %v1279 = vpop.f32.mrf.mxu0
    %1280 = vmatprep.mubr.f32.mxu0 0.0
    %1281 = vmatmul.mubr.f32.gmra.mxu0 %v1125
    %v1282 = vpop.f32.mrf.mxu0
    %v1283 = vadd.f32 0.0, %v1282
    %v1284 = vpop.f32.mrf.mxu0
    %1285 = vmatprep.mubr.f32.mxu0 0.0
    %1286 = vmatmul.mubr.f32.gmra.mxu0 %v1128
    %v1287 = vpop.f32.mrf.mxu0
    %v1288 = vadd.f32 0.0, %v1287
    %v1289 = vpop.f32.mrf.mxu0
    %1290 = vmatprep.mubr.f32.mxu0 0.0
    %1291 = vmatmul.mubr.f32.gmra.mxu0 %v1131
    %v1292 = vpop.f32.mrf.mxu0
    %v1293 = vadd.f32 0.0, %v1292
    %v1294 = vpop.f32.mrf.mxu0
    %1295 = vdwg.mxu0
    %v1297 = vsel %vm1075, %v283, 0
    %v1300 = vsel %vm1075, %v284, 0
    %v1303 = vsel %vm1075, %v285, 0
    %v1306 = vsel %vm1075, %v286, 0
    %v1309 = vsel %vm1075, %v287, 0
    %v1312 = vsel %vm1075, %v288, 0
    %v1315 = vsel %vm1075, %v289, 0
    %v1318 = vsel %vm1075, %v290, 0
    %v1321 = vsel %vm1075, %v291, 0
    %v1324 = vsel %vm1075, %v292, 0
    %v1327 = vsel %vm1075, %v293, 0
    %v1330 = vsel %vm1075, %v294, 0
    %v1333 = vsel %vm1075, %v295, 0
    %v1336 = vsel %vm1075, %v296, 0
    %v1339 = vsel %vm1075, %v297, 0
    %v1342 = vsel %vm1075, %v298, 0
    %v1345 = vsel %vm1075, %v299, 0
    %v1348 = vsel %vm1075, %v300, 0
    %v1351 = vsel %vm1075, %v301, 0
    %v1354 = vsel %vm119, %v1069, 0
    %1356 = vmatprep.subr.mxu0 0.0
    %1357 = vmatpush1.msra.mxu0 0.0
    %1358 = vmatprep.subr.mxu0 0.0
    %1359 = vmatpush1.msra.mxu0 0.0
    %1360 = vmatprep.subr.mxu0 0.0
    %1361 = vmatpush1.msra.mxu0 0.0
    %1362 = vmatprep.subr.mxu0 0.0
    %1363 = vmatpush1.msra.mxu0 0.0
    %1364 = vmatprep.subr.mxu0 0.0
    %1365 = vmatpush1.msra.mxu0 0.0
    %1366 = vmatprep.subr.mxu0 0.0
    %1367 = vmatpush1.msra.mxu0 0.0
    %1368 = vmatprep.subr.mxu0 0.0
    %1369 = vmatpush1.msra.mxu0 0.0
    %1370 = vmatprep.subr.mxu0 0.0
    %1371 = vmatpush1.msra.mxu0 0.0
    %1372 = vmatprep.subr.mxu0 0.0
    %1373 = vmatpush1.msra.mxu0 0.0
    %1374 = vmatprep.subr.mxu0 0.0
    %1375 = vmatpush1.msra.mxu0 0.0
    %1376 = vmatprep.subr.mxu0 0.0
    %1377 = vmatpush1.msra.mxu0 0.0
    %1378 = vmatprep.subr.mxu0 0.0
    %1379 = vmatpush1.msra.mxu0 0.0
    %1380 = vmatprep.subr.mxu0 0.0
    %1381 = vmatpush1.msra.mxu0 0.0
    %1382 = vmatprep.subr.mxu0 0.0
    %1383 = vmatpush1.msra.mxu0 %v1354
    %1384 = vmatprep.subr.mxu0 0.0
    %1385 = vmatpush1.msra.mxu0 %v1068
    %1386 = vmatprep.subr.mxu0 0.0
    %1387 = vmatpush1.msra.mxu0 %v1067
    %1388 = vmatprep.subr.mxu0 0.0
    %1389 = vmatpush2.msra.mxu0 0.0
    %1390 = vmatprep.subr.mxu0 0.0
    %1391 = vmatpush2.msra.mxu0 0.0
    %1392 = vmatprep.subr.mxu0 0.0
    %1393 = vmatpush2.msra.mxu0 0.0
    %1394 = vmatprep.subr.mxu0 0.0
    %1395 = vmatpush2.msra.mxu0 0.0
    %1396 = vmatprep.subr.mxu0 0.0
    %1397 = vmatpush2.msra.mxu0 0.0
    %1398 = vmatprep.subr.mxu0 0.0
    %1399 = vmatpush2.msra.mxu0 0.0
    %1400 = vmatprep.subr.mxu0 0.0
    %1401 = vmatpush2.msra.mxu0 0.0
    %1402 = vmatprep.subr.mxu0 0.0
    %1403 = vmatpush2.msra.mxu0 0.0
    %1404 = vmatprep.subr.mxu0 0.0
    %1405 = vmatpush2.msra.mxu0 0.0
    %1406 = vmatprep.subr.mxu0 0.0
    %1407 = vmatpush2.msra.mxu0 0.0
    %1408 = vmatprep.subr.mxu0 0.0
    %1409 = vmatpush2.msra.mxu0 0.0
    %1410 = vmatprep.subr.mxu0 0.0
    %1411 = vmatpush2.msra.mxu0 0.0
    %1412 = vmatprep.subr.mxu0 0.0
    %1413 = vmatpush2.msra.mxu0 0.0
    %1414 = vmatprep.subr.mxu0 0.0
    %1415 = vmatpush2.msra.mxu0 0.0
    %1416 = vmatprep.subr.mxu0 0.0
    %1417 = vmatpush2.msra.mxu0 0.0
    %1418 = vmatprep.subr.mxu0 0.0
    %1419 = vmatpush2.msra.mxu0 0.0
    %1420 = vmatprep.mubr.f32.mxu0 0.0
    %1421 = vmatmul.mubr.f32.gmra.mxu0 %v1297
    %v1422 = vpop.f32.mrf.mxu0
    %v1423 = vadd.f32 %v1203, %v1422
    %v1424 = vpop.f32.mrf.mxu0
    %1425 = vmatprep.mubr.f32.mxu0 0.0
    %1426 = vmatmul.mubr.f32.gmra.mxu0 %v1300
    %v1427 = vpop.f32.mrf.mxu0
    %v1428 = vadd.f32 %v1208, %v1427
    %v1429 = vpop.f32.mrf.mxu0
    %1430 = vmatprep.mubr.f32.mxu0 0.0
    %1431 = vmatmul.mubr.f32.gmra.mxu0 %v1303
    %v1432 = vpop.f32.mrf.mxu0
    %v1433 = vadd.f32 %v1213, %v1432
    %v1434 = vpop.f32.mrf.mxu0
    %1435 = vmatprep.mubr.f32.mxu0 0.0
    %1436 = vmatmul.mubr.f32.gmra.mxu0 %v1306
    %v1437 = vpop.f32.mrf.mxu0
    %v1438 = vadd.f32 %v1218, %v1437
    %v1439 = vpop.f32.mrf.mxu0
    %1440 = vmatprep.mubr.f32.mxu0 0.0
    %1441 = vmatmul.mubr.f32.gmra.mxu0 %v1309
    %v1442 = vpop.f32.mrf.mxu0
    %v1443 = vadd.f32 %v1223, %v1442
    %v1444 = vpop.f32.mrf.mxu0
    %1445 = vmatprep.mubr.f32.mxu0 0.0
    %1446 = vmatmul.mubr.f32.gmra.mxu0 %v1312
    %v1447 = vpop.f32.mrf.mxu0
    %v1448 = vadd.f32 %v1228, %v1447
    %v1449 = vpop.f32.mrf.mxu0
    %1450 = vmatprep.mubr.f32.mxu0 0.0
    %1451 = vmatmul.mubr.f32.gmra.mxu0 %v1315
    %v1452 = vpop.f32.mrf.mxu0
    %v1453 = vadd.f32 %v1233, %v1452
    %v1454 = vpop.f32.mrf.mxu0
    %1455 = vmatprep.mubr.f32.mxu0 0.0
    %1456 = vmatmul.mubr.f32.gmra.mxu0 %v1318
    %v1457 = vpop.f32.mrf.mxu0
    %v1458 = vadd.f32 %v1238, %v1457
    %v1459 = vpop.f32.mrf.mxu0
    %1460 = vmatprep.mubr.f32.mxu0 0.0
    %1461 = vmatmul.mubr.f32.gmra.mxu0 %v1321
    %v1462 = vpop.f32.mrf.mxu0
    %v1463 = vadd.f32 %v1243, %v1462
    %v1464 = vpop.f32.mrf.mxu0
    %1465 = vmatprep.mubr.f32.mxu0 0.0
    %1466 = vmatmul.mubr.f32.gmra.mxu0 %v1324
    %v1467 = vpop.f32.mrf.mxu0
    %v1468 = vadd.f32 %v1248, %v1467
    %v1469 = vpop.f32.mrf.mxu0
    %1470 = vmatprep.mubr.f32.mxu0 0.0
    %1471 = vmatmul.mubr.f32.gmra.mxu0 %v1327
    %v1472 = vpop.f32.mrf.mxu0
    %v1473 = vadd.f32 %v1253, %v1472
    %v1474 = vpop.f32.mrf.mxu0
    %1475 = vmatprep.mubr.f32.mxu0 0.0
    %1476 = vmatmul.mubr.f32.gmra.mxu0 %v1330
    %v1477 = vpop.f32.mrf.mxu0
    %v1478 = vadd.f32 %v1258, %v1477
    %v1479 = vpop.f32.mrf.mxu0
    %1480 = vmatprep.mubr.f32.mxu0 0.0
    %1481 = vmatmul.mubr.f32.gmra.mxu0 %v1333
    %v1482 = vpop.f32.mrf.mxu0
    %v1483 = vadd.f32 %v1263, %v1482
    %v1484 = vpop.f32.mrf.mxu0
    %1485 = vmatprep.mubr.f32.mxu0 0.0
    %1486 = vmatmul.mubr.f32.gmra.mxu0 %v1336
    %v1487 = vpop.f32.mrf.mxu0
    %v1488 = vadd.f32 %v1268, %v1487
    %v1489 = vpop.f32.mrf.mxu0
    %1490 = vmatprep.mubr.f32.mxu0 0.0
    %1491 = vmatmul.mubr.f32.gmra.mxu0 %v1339
    %v1492 = vpop.f32.mrf.mxu0
    %v1493 = vadd.f32 %v1273, %v1492
    %v1494 = vpop.f32.mrf.mxu0
    %1495 = vmatprep.mubr.f32.mxu0 0.0
    %1496 = vmatmul.mubr.f32.gmra.mxu0 %v1342
    %v1497 = vpop.f32.mrf.mxu0
    %v1498 = vadd.f32 %v1278, %v1497
    %v1499 = vpop.f32.mrf.mxu0
    %1500 = vmatprep.mubr.f32.mxu0 0.0
    %1501 = vmatmul.mubr.f32.gmra.mxu0 %v1345
    %v1502 = vpop.f32.mrf.mxu0
    %v1503 = vadd.f32 %v1283, %v1502
    %v1504 = vpop.f32.mrf.mxu0
    %1505 = vmatprep.mubr.f32.mxu0 0.0
    %1506 = vmatmul.mubr.f32.gmra.mxu0 %v1348
    %v1507 = vpop.f32.mrf.mxu0
    %v1508 = vadd.f32 %v1288, %v1507
    %v1509 = vpop.f32.mrf.mxu0
    %1510 = vmatprep.mubr.f32.mxu0 0.0
    %1511 = vmatmul.mubr.f32.gmra.mxu0 %v1351
    %v1512 = vpop.f32.mrf.mxu0
    %v1513 = vadd.f32 %v1293, %v1512
    %v1514 = vpop.f32.mrf.mxu0
    %1515 = vdwg.mxu0
    %v1517 = vlaneseq
    %v1518 = vshrl.u32 %v1517, 7
    %v1519 = vsub.s32 0, %v1518
    %v1520 = vrot.slane %v1074, %v1519
    %v1522 = vadd.f32 %v1423, %v1520
    %v1523 = vadd.f32 %v1428, %v1520
    %v1524 = vadd.f32 %v1433, %v1520
    %v1525 = vadd.f32 %v1438, %v1520
    %v1526 = vadd.f32 %v1443, %v1520
    %v1527 = vadd.f32 %v1448, %v1520
    %v1528 = vadd.f32 %v1453, %v1520
    %v1529 = vadd.f32 %v1458, %v1520
    %v1530 = vadd.f32 %v1463, %v1520
    %v1531 = vadd.f32 %v1468, %v1520
    %v1532 = vadd.f32 %v1473, %v1520
    %v1533 = vadd.f32 %v1478, %v1520
    %v1534 = vadd.f32 %v1483, %v1520
    %v1535 = vadd.f32 %v1488, %v1520
    %v1536 = vadd.f32 %v1493, %v1520
    %v1537 = vadd.f32 %v1498, %v1520
    %v1538 = vadd.f32 %v1503, %v1520
    %v1539 = vadd.f32 %v1508, %v1520
    %v1540 = vadd.f32 %v1513, %v1520
    %v1541 = vmax.f32 %v1522, 0.0
    %v1542 = vmax.f32 %v1523, 0.0
    %v1543 = vmax.f32 %v1524, 0.0
    %v1544 = vmax.f32 %v1525, 0.0
    %v1545 = vmax.f32 %v1526, 0.0
    %v1546 = vmax.f32 %v1527, 0.0
    %v1547 = vmax.f32 %v1528, 0.0
    %v1548 = vmax.f32 %v1529, 0.0
    %v1549 = vmax.f32 %v1530, 0.0
    %v1550 = vmax.f32 %v1531, 0.0
    %v1551 = vmax.f32 %v1532, 0.0
    %v1552 = vmax.f32 %v1533, 0.0
    %v1553 = vmax.f32 %v1534, 0.0
    %v1554 = vmax.f32 %v1535, 0.0
    %v1555 = vmax.f32 %v1536, 0.0
    %v1556 = vmax.f32 %v1537, 0.0
    %v1557 = vmax.f32 %v1538, 0.0
    %v1558 = vmax.f32 %v1539, 0.0
    %v1559 = vmax.f32 %v1540, 0.0
    %v1561 = vsel %vm1075, %v1048, 0
    %v1564 = vsel %vm1075, %v1049, 0
    %v1567 = vsel %vm1075, %v1050, 0
    %v1570 = vsel %vm1075, %v1051, 0
    %v1573 = vsel %vm1075, %v1052, 0
    %v1576 = vsel %vm1075, %v1053, 0
    %v1579 = vsel %vm1075, %v1054, 0
    %v1582 = vsel %vm1075, %v1055, 0
    %v1585 = vsel %vm1075, %v1056, 0
    %v1588 = vsel %vm1075, %v1057, 0
    %v1591 = vsel %vm1075, %v1058, 0
    %v1594 = vsel %vm1075, %v1059, 0
    %v1597 = vsel %vm1075, %v1060, 0
    %v1600 = vsel %vm1075, %v1061, 0
    %v1603 = vsel %vm1075, %v1062, 0
    %v1606 = vsel %vm1075, %v1063, 0
    %v1609 = vsel %vm1075, %v1064, 0
    %v1612 = vsel %vm1075, %v1065, 0
    %v1615 = vsel %vm1075, %v1066, 0
    %1617 = vmatprep.subr.mxu0 0.0
    %1618 = vmatpush1.msra.mxu0 0.0
    %1619 = vmatprep.subr.mxu0 0.0
    %1620 = vmatpush1.msra.mxu0 0.0
    %1621 = vmatprep.subr.mxu0 0.0
    %1622 = vmatpush1.msra.mxu0 0.0
    %1623 = vmatprep.subr.mxu0 0.0
    %1624 = vmatpush1.msra.mxu0 0.0
    %1625 = vmatprep.subr.mxu0 0.0
    %1626 = vmatpush1.msra.mxu0 0.0
    %1627 = vmatprep.subr.mxu0 0.0
    %1628 = vmatpush1.msra.mxu0 0.0
    %1629 = vmatprep.subr.mxu0 0.0
    %1630 = vmatpush1.msra.mxu0 0.0
    %1631 = vmatprep.subr.mxu0 0.0
    %1632 = vmatpush1.msra.mxu0 0.0
    %1633 = vmatprep.subr.mxu0 0.0
    %1634 = vmatpush1.msra.mxu0 0.0
    %1635 = vmatprep.subr.mxu0 0.0
    %1636 = vmatpush1.msra.mxu0 0.0
    %1637 = vmatprep.subr.mxu0 0.0
    %1638 = vmatpush1.msra.mxu0 0.0
    %1639 = vmatprep.subr.mxu0 0.0
    %1640 = vmatpush1.msra.mxu0 0.0
    %1641 = vmatprep.subr.mxu0 0.0
    %1642 = vmatpush1.msra.mxu0 0.0
    %1643 = vmatprep.subr.mxu0 0.0
    %1644 = vmatpush1.msra.mxu0 %v1134
    %1645 = vmatprep.subr.mxu0 0.0
    %1646 = vmatpush1.msra.mxu0 %v1072
    %1647 = vmatprep.subr.mxu0 0.0
    %1648 = vmatpush1.msra.mxu0 %v1071
    %1649 = vmatprep.subr.mxu0 0.0
    %1650 = vmatpush2.msra.mxu0 0.0
    %1651 = vmatprep.subr.mxu0 0.0
    %1652 = vmatpush2.msra.mxu0 0.0
    %1653 = vmatprep.subr.mxu0 0.0
    %1654 = vmatpush2.msra.mxu0 0.0
    %1655 = vmatprep.subr.mxu0 0.0
    %1656 = vmatpush2.msra.mxu0 0.0
    %1657 = vmatprep.subr.mxu0 0.0
    %1658 = vmatpush2.msra.mxu0 0.0
    %1659 = vmatprep.subr.mxu0 0.0
    %1660 = vmatpush2.msra.mxu0 0.0
    %1661 = vmatprep.subr.mxu0 0.0
    %1662 = vmatpush2.msra.mxu0 0.0
    %1663 = vmatprep.subr.mxu0 0.0
    %1664 = vmatpush2.msra.mxu0 0.0
    %1665 = vmatprep.subr.mxu0 0.0
    %1666 = vmatpush2.msra.mxu0 0.0
    %1667 = vmatprep.subr.mxu0 0.0
    %1668 = vmatpush2.msra.mxu0 0.0
    %1669 = vmatprep.subr.mxu0 0.0
    %1670 = vmatpush2.msra.mxu0 0.0
    %1671 = vmatprep.subr.mxu0 0.0
    %1672 = vmatpush2.msra.mxu0 0.0
    %1673 = vmatprep.subr.mxu0 0.0
    %1674 = vmatpush2.msra.mxu0 0.0
    %1675 = vmatprep.subr.mxu0 0.0
    %1676 = vmatpush2.msra.mxu0 0.0
    %1677 = vmatprep.subr.mxu0 0.0
    %1678 = vmatpush2.msra.mxu0 0.0
    %1679 = vmatprep.subr.mxu0 0.0
    %1680 = vmatpush2.msra.mxu0 0.0
    %1681 = vmatprep.mubr.f32.mxu0 0.0
    %1682 = vmatmul.mubr.f32.gmra.mxu0 %v1561
    %v1683 = vpop.f32.mrf.mxu0
    %v1684 = vadd.f32 0.0, %v1683
    %v1685 = vpop.f32.mrf.mxu0
    %1686 = vmatprep.mubr.f32.mxu0 0.0
    %1687 = vmatmul.mubr.f32.gmra.mxu0 %v1564
    %v1688 = vpop.f32.mrf.mxu0
    %v1689 = vadd.f32 0.0, %v1688
    %v1690 = vpop.f32.mrf.mxu0
    %1691 = vmatprep.mubr.f32.mxu0 0.0
    %1692 = vmatmul.mubr.f32.gmra.mxu0 %v1567
    %v1693 = vpop.f32.mrf.mxu0
    %v1694 = vadd.f32 0.0, %v1693
    %v1695 = vpop.f32.mrf.mxu0
    %1696 = vmatprep.mubr.f32.mxu0 0.0
    %1697 = vmatmul.mubr.f32.gmra.mxu0 %v1570
    %v1698 = vpop.f32.mrf.mxu0
    %v1699 = vadd.f32 0.0, %v1698
    %v1700 = vpop.f32.mrf.mxu0
    %1701 = vmatprep.mubr.f32.mxu0 0.0
    %1702 = vmatmul.mubr.f32.gmra.mxu0 %v1573
    %v1703 = vpop.f32.mrf.mxu0
    %v1704 = vadd.f32 0.0, %v1703
    %v1705 = vpop.f32.mrf.mxu0
    %1706 = vmatprep.mubr.f32.mxu0 0.0
    %1707 = vmatmul.mubr.f32.gmra.mxu0 %v1576
    %v1708 = vpop.f32.mrf.mxu0
    %v1709 = vadd.f32 0.0, %v1708
    %v1710 = vpop.f32.mrf.mxu0
    %1711 = vmatprep.mubr.f32.mxu0 0.0
    %1712 = vmatmul.mubr.f32.gmra.mxu0 %v1579
    %v1713 = vpop.f32.mrf.mxu0
    %v1714 = vadd.f32 0.0, %v1713
    %v1715 = vpop.f32.mrf.mxu0
    %1716 = vmatprep.mubr.f32.mxu0 0.0
    %1717 = vmatmul.mubr.f32.gmra.mxu0 %v1582
    %v1718 = vpop.f32.mrf.mxu0
    %v1719 = vadd.f32 0.0, %v1718
    %v1720 = vpop.f32.mrf.mxu0
    %1721 = vmatprep.mubr.f32.mxu0 0.0
    %1722 = vmatmul.mubr.f32.gmra.mxu0 %v1585
    %v1723 = vpop.f32.mrf.mxu0
    %v1724 = vadd.f32 0.0, %v1723
    %v1725 = vpop.f32.mrf.mxu0
    %1726 = vmatprep.mubr.f32.mxu0 0.0
    %1727 = vmatmul.mubr.f32.gmra.mxu0 %v1588
    %v1728 = vpop.f32.mrf.mxu0
    %v1729 = vadd.f32 0.0, %v1728
    %v1730 = vpop.f32.mrf.mxu0
    %1731 = vmatprep.mubr.f32.mxu0 0.0
    %1732 = vmatmul.mubr.f32.gmra.mxu0 %v1591
    %v1733 = vpop.f32.mrf.mxu0
    %v1734 = vadd.f32 0.0, %v1733
    %v1735 = vpop.f32.mrf.mxu0
    %1736 = vmatprep.mubr.f32.mxu0 0.0
    %1737 = vmatmul.mubr.f32.gmra.mxu0 %v1594
    %v1738 = vpop.f32.mrf.mxu0
    %v1739 = vadd.f32 0.0, %v1738
    %v1740 = vpop.f32.mrf.mxu0
    %1741 = vmatprep.mubr.f32.mxu0 0.0
    %1742 = vmatmul.mubr.f32.gmra.mxu0 %v1597
    %v1743 = vpop.f32.mrf.mxu0
    %v1744 = vadd.f32 0.0, %v1743
    %v1745 = vpop.f32.mrf.mxu0
    %1746 = vmatprep.mubr.f32.mxu0 0.0
    %1747 = vmatmul.mubr.f32.gmra.mxu0 %v1600
    %v1748 = vpop.f32.mrf.mxu0
    %v1749 = vadd.f32 0.0, %v1748
    %v1750 = vpop.f32.mrf.mxu0
    %1751 = vmatprep.mubr.f32.mxu0 0.0
    %1752 = vmatmul.mubr.f32.gmra.mxu0 %v1603
    %v1753 = vpop.f32.mrf.mxu0
    %v1754 = vadd.f32 0.0, %v1753
    %v1755 = vpop.f32.mrf.mxu0
    %1756 = vmatprep.mubr.f32.mxu0 0.0
    %1757 = vmatmul.mubr.f32.gmra.mxu0 %v1606
    %v1758 = vpop.f32.mrf.mxu0
    %v1759 = vadd.f32 0.0, %v1758
    %v1760 = vpop.f32.mrf.mxu0
    %1761 = vmatprep.mubr.f32.mxu0 0.0
    %1762 = vmatmul.mubr.f32.gmra.mxu0 %v1609
    %v1763 = vpop.f32.mrf.mxu0
    %v1764 = vadd.f32 0.0, %v1763
    %v1765 = vpop.f32.mrf.mxu0
    %1766 = vmatprep.mubr.f32.mxu0 0.0
    %1767 = vmatmul.mubr.f32.gmra.mxu0 %v1612
    %v1768 = vpop.f32.mrf.mxu0
    %v1769 = vadd.f32 0.0, %v1768
    %v1770 = vpop.f32.mrf.mxu0
    %1771 = vmatprep.mubr.f32.mxu0 0.0
    %1772 = vmatmul.mubr.f32.gmra.mxu0 %v1615
    %v1773 = vpop.f32.mrf.mxu0
    %v1774 = vadd.f32 0.0, %v1773
    %v1775 = vpop.f32.mrf.mxu0
    %1776 = vdwg.mxu0
    %v1778 = vsel %vm1075, %v793, 0
    %v1781 = vsel %vm1075, %v794, 0
    %v1784 = vsel %vm1075, %v795, 0
    %v1787 = vsel %vm1075, %v796, 0
    %v1790 = vsel %vm1075, %v797, 0
    %v1793 = vsel %vm1075, %v798, 0
    %v1796 = vsel %vm1075, %v799, 0
    %v1799 = vsel %vm1075, %v800, 0
    %v1802 = vsel %vm1075, %v801, 0
    %v1805 = vsel %vm1075, %v802, 0
    %v1808 = vsel %vm1075, %v803, 0
    %v1811 = vsel %vm1075, %v804, 0
    %v1814 = vsel %vm1075, %v805, 0
    %v1817 = vsel %vm1075, %v806, 0
    %v1820 = vsel %vm1075, %v807, 0
    %v1823 = vsel %vm1075, %v808, 0
    %v1826 = vsel %vm1075, %v809, 0
    %v1829 = vsel %vm1075, %v810, 0
    %v1832 = vsel %vm1075, %v811, 0
    %1834 = vmatprep.subr.mxu0 0.0
    %1835 = vmatpush1.msra.mxu0 0.0
    %1836 = vmatprep.subr.mxu0 0.0
    %1837 = vmatpush1.msra.mxu0 0.0
    %1838 = vmatprep.subr.mxu0 0.0
    %1839 = vmatpush1.msra.mxu0 0.0
    %1840 = vmatprep.subr.mxu0 0.0
    %1841 = vmatpush1.msra.mxu0 0.0
    %1842 = vmatprep.subr.mxu0 0.0
    %1843 = vmatpush1.msra.mxu0 0.0
    %1844 = vmatprep.subr.mxu0 0.0
    %1845 = vmatpush1.msra.mxu0 0.0
    %1846 = vmatprep.subr.mxu0 0.0
    %1847 = vmatpush1.msra.mxu0 0.0
    %1848 = vmatprep.subr.mxu0 0.0
    %1849 = vmatpush1.msra.mxu0 0.0
    %1850 = vmatprep.subr.mxu0 0.0
    %1851 = vmatpush1.msra.mxu0 0.0
    %1852 = vmatprep.subr.mxu0 0.0
    %1853 = vmatpush1.msra.mxu0 0.0
    %1854 = vmatprep.subr.mxu0 0.0
    %1855 = vmatpush1.msra.mxu0 0.0
    %1856 = vmatprep.subr.mxu0 0.0
    %1857 = vmatpush1.msra.mxu0 0.0
    %1858 = vmatprep.subr.mxu0 0.0
    %1859 = vmatpush1.msra.mxu0 0.0
    %1860 = vmatprep.subr.mxu0 0.0
    %1861 = vmatpush1.msra.mxu0 %v1354
    %1862 = vmatprep.subr.mxu0 0.0
    %1863 = vmatpush1.msra.mxu0 %v1068
    %1864 = vmatprep.subr.mxu0 0.0
    %1865 = vmatpush1.msra.mxu0 %v1067
    %1866 = vmatprep.subr.mxu0 0.0
    %1867 = vmatpush2.msra.mxu0 0.0
    %1868 = vmatprep.subr.mxu0 0.0
    %1869 = vmatpush2.msra.mxu0 0.0
    %1870 = vmatprep.subr.mxu0 0.0
    %1871 = vmatpush2.msra.mxu0 0.0
    %1872 = vmatprep.subr.mxu0 0.0
    %1873 = vmatpush2.msra.mxu0 0.0
    %1874 = vmatprep.subr.mxu0 0.0
    %1875 = vmatpush2.msra.mxu0 0.0
    %1876 = vmatprep.subr.mxu0 0.0
    %1877 = vmatpush2.msra.mxu0 0.0
    %1878 = vmatprep.subr.mxu0 0.0
    %1879 = vmatpush2.msra.mxu0 0.0
    %1880 = vmatprep.subr.mxu0 0.0
    %1881 = vmatpush2.msra.mxu0 0.0
    %1882 = vmatprep.subr.mxu0 0.0
    %1883 = vmatpush2.msra.mxu0 0.0
    %1884 = vmatprep.subr.mxu0 0.0
    %1885 = vmatpush2.msra.mxu0 0.0
    %1886 = vmatprep.subr.mxu0 0.0
    %1887 = vmatpush2.msra.mxu0 0.0
    %1888 = vmatprep.subr.mxu0 0.0
    %1889 = vmatpush2.msra.mxu0 0.0
    %1890 = vmatprep.subr.mxu0 0.0
    %1891 = vmatpush2.msra.mxu0 0.0
    %1892 = vmatprep.subr.mxu0 0.0
    %1893 = vmatpush2.msra.mxu0 0.0
    %1894 = vmatprep.subr.mxu0 0.0
    %1895 = vmatpush2.msra.mxu0 0.0
    %1896 = vmatprep.subr.mxu0 0.0
    %1897 = vmatpush2.msra.mxu0 0.0
    %1898 = vmatprep.mubr.f32.mxu0 0.0
    %1899 = vmatmul.mubr.f32.gmra.mxu0 %v1778
    %v1900 = vpop.f32.mrf.mxu0
    %v1901 = vadd.f32 %v1684, %v1900
    %v1902 = vpop.f32.mrf.mxu0
    %1903 = vmatprep.mubr.f32.mxu0 0.0
    %1904 = vmatmul.mubr.f32.gmra.mxu0 %v1781
    %v1905 = vpop.f32.mrf.mxu0
    %v1906 = vadd.f32 %v1689, %v1905
    %v1907 = vpop.f32.mrf.mxu0
    %1908 = vmatprep.mubr.f32.mxu0 0.0
    %1909 = vmatmul.mubr.f32.gmra.mxu0 %v1784
    %v1910 = vpop.f32.mrf.mxu0
    %v1911 = vadd.f32 %v1694, %v1910
    %v1912 = vpop.f32.mrf.mxu0
    %1913 = vmatprep.mubr.f32.mxu0 0.0
    %1914 = vmatmul.mubr.f32.gmra.mxu0 %v1787
    %v1915 = vpop.f32.mrf.mxu0
    %v1916 = vadd.f32 %v1699, %v1915
    %v1917 = vpop.f32.mrf.mxu0
    %1918 = vmatprep.mubr.f32.mxu0 0.0
    %1919 = vmatmul.mubr.f32.gmra.mxu0 %v1790
    %v1920 = vpop.f32.mrf.mxu0
    %v1921 = vadd.f32 %v1704, %v1920
    %v1922 = vpop.f32.mrf.mxu0
    %1923 = vmatprep.mubr.f32.mxu0 0.0
    %1924 = vmatmul.mubr.f32.gmra.mxu0 %v1793
    %v1925 = vpop.f32.mrf.mxu0
    %v1926 = vadd.f32 %v1709, %v1925
    %v1927 = vpop.f32.mrf.mxu0
    %1928 = vmatprep.mubr.f32.mxu0 0.0
    %1929 = vmatmul.mubr.f32.gmra.mxu0 %v1796
    %v1930 = vpop.f32.mrf.mxu0
    %v1931 = vadd.f32 %v1714, %v1930
    %v1932 = vpop.f32.mrf.mxu0
    %1933 = vmatprep.mubr.f32.mxu0 0.0
    %1934 = vmatmul.mubr.f32.gmra.mxu0 %v1799
    %v1935 = vpop.f32.mrf.mxu0
    %v1936 = vadd.f32 %v1719, %v1935
    %v1937 = vpop.f32.mrf.mxu0
    %1938 = vmatprep.mubr.f32.mxu0 0.0
    %1939 = vmatmul.mubr.f32.gmra.mxu0 %v1802
    %v1940 = vpop.f32.mrf.mxu0
    %v1941 = vadd.f32 %v1724, %v1940
    %v1942 = vpop.f32.mrf.mxu0
    %1943 = vmatprep.mubr.f32.mxu0 0.0
    %1944 = vmatmul.mubr.f32.gmra.mxu0 %v1805
    %v1945 = vpop.f32.mrf.mxu0
    %v1946 = vadd.f32 %v1729, %v1945
    %v1947 = vpop.f32.mrf.mxu0
    %1948 = vmatprep.mubr.f32.mxu0 0.0
    %1949 = vmatmul.mubr.f32.gmra.mxu0 %v1808
    %v1950 = vpop.f32.mrf.mxu0
    %v1951 = vadd.f32 %v1734, %v1950
    %v1952 = vpop.f32.mrf.mxu0
    %1953 = vmatprep.mubr.f32.mxu0 0.0
    %1954 = vmatmul.mubr.f32.gmra.mxu0 %v1811
    %v1955 = vpop.f32.mrf.mxu0
    %v1956 = vadd.f32 %v1739, %v1955
    %v1957 = vpop.f32.mrf.mxu0
    %1958 = vmatprep.mubr.f32.mxu0 0.0
    %1959 = vmatmul.mubr.f32.gmra.mxu0 %v1814
    %v1960 = vpop.f32.mrf.mxu0
    %v1961 = vadd.f32 %v1744, %v1960
    %v1962 = vpop.f32.mrf.mxu0
    %1963 = vmatprep.mubr.f32.mxu0 0.0
    %1964 = vmatmul.mubr.f32.gmra.mxu0 %v1817
    %v1965 = vpop.f32.mrf.mxu0
    %v1966 = vadd.f32 %v1749, %v1965
    %v1967 = vpop.f32.mrf.mxu0
    %1968 = vmatprep.mubr.f32.mxu0 0.0
    %1969 = vmatmul.mubr.f32.gmra.mxu0 %v1820
    %v1970 = vpop.f32.mrf.mxu0
    %v1971 = vadd.f32 %v1754, %v1970
    %v1972 = vpop.f32.mrf.mxu0
    %1973 = vmatprep.mubr.f32.mxu0 0.0
    %1974 = vmatmul.mubr.f32.gmra.mxu0 %v1823
    %v1975 = vpop.f32.mrf.mxu0
    %v1976 = vadd.f32 %v1759, %v1975
    %v1977 = vpop.f32.mrf.mxu0
    %1978 = vmatprep.mubr.f32.mxu0 0.0
    %1979 = vmatmul.mubr.f32.gmra.mxu0 %v1826
    %v1980 = vpop.f32.mrf.mxu0
    %v1981 = vadd.f32 %v1764, %v1980
    %v1982 = vpop.f32.mrf.mxu0
    %1983 = vmatprep.mubr.f32.mxu0 0.0
    %1984 = vmatmul.mubr.f32.gmra.mxu0 %v1829
    %v1985 = vpop.f32.mrf.mxu0
    %v1986 = vadd.f32 %v1769, %v1985
    %v1987 = vpop.f32.mrf.mxu0
    %1988 = vmatprep.mubr.f32.mxu0 0.0
    %1989 = vmatmul.mubr.f32.gmra.mxu0 %v1832
    %v1990 = vpop.f32.mrf.mxu0
    %v1991 = vadd.f32 %v1774, %v1990
    %v1992 = vpop.f32.mrf.mxu0
    %1993 = vdwg.mxu0
    %v1994 = vadd.f32 %v1901, %v1520
    %v1995 = vadd.f32 %v1906, %v1520
    %v1996 = vadd.f32 %v1911, %v1520
    %v1997 = vadd.f32 %v1916, %v1520
    %v1998 = vadd.f32 %v1921, %v1520
    %v1999 = vadd.f32 %v1926, %v1520
    %v2000 = vadd.f32 %v1931, %v1520
    %v2001 = vadd.f32 %v1936, %v1520
    %v2002 = vadd.f32 %v1941, %v1520
    %v2003 = vadd.f32 %v1946, %v1520
    %v2004 = vadd.f32 %v1951, %v1520
    %v2005 = vadd.f32 %v1956, %v1520
    %v2006 = vadd.f32 %v1961, %v1520
    %v2007 = vadd.f32 %v1966, %v1520
    %v2008 = vadd.f32 %v1971, %v1520
    %v2009 = vadd.f32 %v1976, %v1520
    %v2010 = vadd.f32 %v1981, %v1520
    %v2011 = vadd.f32 %v1986, %v1520
    %v2012 = vadd.f32 %v1991, %v1520
    %v2013 = vmax.f32 %v1994, 0.0
    %v2014 = vmax.f32 %v1995, 0.0
    %v2015 = vmax.f32 %v1996, 0.0
    %v2016 = vmax.f32 %v1997, 0.0
    %v2017 = vmax.f32 %v1998, 0.0
    %v2018 = vmax.f32 %v1999, 0.0
    %v2019 = vmax.f32 %v2000, 0.0
    %v2020 = vmax.f32 %v2001, 0.0
    %v2021 = vmax.f32 %v2002, 0.0
    %v2022 = vmax.f32 %v2003, 0.0
    %v2023 = vmax.f32 %v2004, 0.0
    %v2024 = vmax.f32 %v2005, 0.0
    %v2025 = vmax.f32 %v2006, 0.0
    %v2026 = vmax.f32 %v2007, 0.0
    %v2027 = vmax.f32 %v2008, 0.0
    %v2028 = vmax.f32 %v2009, 0.0
    %v2029 = vmax.f32 %v2010, 0.0
    %v2030 = vmax.f32 %v2011, 0.0
    %v2031 = vmax.f32 %v2012, 0.0
    %v2032 = vld [vmem:[%s5] sm:$0xff]
    %v2033 = vld [vmem:[%s5 + $0x8] sm:$0xff]
    %v2034 = vld [vmem:[%s5 + $0x10] sm:$0xff]
    %v2035 = vld [vmem:[%s5 + $0x18] sm:$0xff]
    %v2036 = vld [vmem:[%s5 + $0x20] sm:$0xff]
    %v2037 = vld [vmem:[%s5 + $0x28] sm:$0xff]
    %v2038 = vld [vmem:[%s5 + $0x30] sm:$0xff]
    %v2039 = vld [vmem:[%s5 + $0x38] sm:$0xff]
    %v2040 = vld [vmem:[%s5 + $0x40] sm:$0xff]
    %v2041 = vld [vmem:[%s5 + $0x48] sm:$0xff]
    %v2042 = vld [vmem:[%s5 + $0x50] sm:$0xff]
    %v2043 = vld [vmem:[%s5 + $0x58] sm:$0xff]
    %v2044 = vld [vmem:[%s5 + $0x60] sm:$0xf]
    %s2045 = scalar_lea.vmem %s5, 104
    %v2046 = vld [vmem:[%s2045] sm:$0xff]
    %v2047 = vld [vmem:[%s2045 + $0x8] sm:$0xff]
    %v2048 = vld [vmem:[%s2045 + $0x10] sm:$0xff]
    %v2049 = vld [vmem:[%s2045 + $0x18] sm:$0xff]
    %v2050 = vld [vmem:[%s2045 + $0x20] sm:$0xff]
    %v2051 = vld [vmem:[%s2045 + $0x28] sm:$0xff]
    %v2052 = vld [vmem:[%s2045 + $0x30] sm:$0xff]
    %v2053 = vld [vmem:[%s2045 + $0x38] sm:$0xff]
    %v2054 = vld [vmem:[%s2045 + $0x40] sm:$0xff]
    %v2055 = vld [vmem:[%s2045 + $0x48] sm:$0xff]
    %v2056 = vld [vmem:[%s2045 + $0x50] sm:$0xff]
    %v2057 = vld [vmem:[%s2045 + $0x58] sm:$0xff]
    %v2058 = vld [vmem:[%s2045 + $0x60] sm:$0xf]
    %vm2059 = vcmask 818176
    %v2061 = vsel %vm2059, %v2013, 0
    %v2064 = vsel %vm2059, %v2014, 0
    %v2067 = vsel %vm2059, %v2015, 0
    %v2070 = vsel %vm2059, %v2016, 0
    %v2073 = vsel %vm2059, %v2017, 0
    %v2076 = vsel %vm2059, %v2018, 0
    %v2079 = vsel %vm2059, %v2019, 0
    %v2082 = vsel %vm2059, %v2020, 0
    %v2085 = vsel %vm2059, %v2021, 0
    %v2088 = vsel %vm2059, %v2022, 0
    %v2091 = vsel %vm2059, %v2023, 0
    %v2094 = vsel %vm2059, %v2024, 0
    %v2097 = vsel %vm2059, %v2025, 0
    %v2100 = vsel %vm2059, %v2026, 0
    %v2103 = vsel %vm2059, %v2027, 0
    %v2106 = vsel %vm2059, %v2028, 0
    %v2109 = vsel %vm2059, %v2029, 0
    %v2112 = vsel %vm2059, %v2030, 0
    %v2115 = vsel %vm2059, %v2031, 0
    %v2118 = vsel %vm119, %v2058, 0
    %2120 = vmatprep.subr.mxu0 0.0
    %2121 = vmatpush1.msra.mxu0 0.0
    %2122 = vmatprep.subr.mxu0 0.0
    %2123 = vmatpush1.msra.mxu0 0.0
    %2124 = vmatprep.subr.mxu0 0.0
    %2125 = vmatpush1.msra.mxu0 0.0
    %2126 = vmatprep.subr.mxu0 0.0
    %2127 = vmatpush1.msra.mxu0 %v2118
    %2128 = vmatprep.subr.mxu0 0.0
    %2129 = vmatpush1.msra.mxu0 %v2057
    %2130 = vmatprep.subr.mxu0 0.0
    %2131 = vmatpush1.msra.mxu0 %v2056
    %2132 = vmatprep.subr.mxu0 0.0
    %2133 = vmatpush1.msra.mxu0 %v2055
    %2134 = vmatprep.subr.mxu0 0.0
    %2135 = vmatpush1.msra.mxu0 %v2054
    %2136 = vmatprep.subr.mxu0 0.0
    %2137 = vmatpush1.msra.mxu0 %v2053
    %2138 = vmatprep.subr.mxu0 0.0
    %2139 = vmatpush1.msra.mxu0 %v2052
    %2140 = vmatprep.subr.mxu0 0.0
    %2141 = vmatpush1.msra.mxu0 %v2051
    %2142 = vmatprep.subr.mxu0 0.0
    %2143 = vmatpush1.msra.mxu0 %v2050
    %2144 = vmatprep.subr.mxu0 0.0
    %2145 = vmatpush1.msra.mxu0 %v2049
    %2146 = vmatprep.subr.mxu0 0.0
    %2147 = vmatpush1.msra.mxu0 %v2048
    %2148 = vmatprep.subr.mxu0 0.0
    %2149 = vmatpush1.msra.mxu0 %v2047
    %2150 = vmatprep.subr.mxu0 0.0
    %2151 = vmatpush1.msra.mxu0 %v2046
    %2152 = vmatprep.subr.mxu0 0.0
    %2153 = vmatpush2.msra.mxu0 0.0
    %2154 = vmatprep.subr.mxu0 0.0
    %2155 = vmatpush2.msra.mxu0 0.0
    %2156 = vmatprep.subr.mxu0 0.0
    %2157 = vmatpush2.msra.mxu0 0.0
    %2158 = vmatprep.subr.mxu0 0.0
    %2159 = vmatpush2.msra.mxu0 0.0
    %2160 = vmatprep.subr.mxu0 0.0
    %2161 = vmatpush2.msra.mxu0 0.0
    %2162 = vmatprep.subr.mxu0 0.0
    %2163 = vmatpush2.msra.mxu0 0.0
    %2164 = vmatprep.subr.mxu0 0.0
    %2165 = vmatpush2.msra.mxu0 0.0
    %2166 = vmatprep.subr.mxu0 0.0
    %2167 = vmatpush2.msra.mxu0 0.0
    %2168 = vmatprep.subr.mxu0 0.0
    %2169 = vmatpush2.msra.mxu0 0.0
    %2170 = vmatprep.subr.mxu0 0.0
    %2171 = vmatpush2.msra.mxu0 0.0
    %2172 = vmatprep.subr.mxu0 0.0
    %2173 = vmatpush2.msra.mxu0 0.0
    %2174 = vmatprep.subr.mxu0 0.0
    %2175 = vmatpush2.msra.mxu0 0.0
    %2176 = vmatprep.subr.mxu0 0.0
    %2177 = vmatpush2.msra.mxu0 0.0
    %2178 = vmatprep.subr.mxu0 0.0
    %2179 = vmatpush2.msra.mxu0 0.0
    %2180 = vmatprep.subr.mxu0 0.0
    %2181 = vmatpush2.msra.mxu0 0.0
    %2182 = vmatprep.subr.mxu0 0.0
    %2183 = vmatpush2.msra.mxu0 0.0
    %2184 = vmatprep.mubr.f32.mxu0 0.0
    %2185 = vmatmul.mubr.f32.gmra.mxu0 %v2061
    %v2186 = vpop.f32.mrf.mxu0
    %v2187 = vadd.f32 0.0, %v2186
    %v2188 = vpop.f32.mrf.mxu0
    %2189 = vmatprep.mubr.f32.mxu0 0.0
    %2190 = vmatmul.mubr.f32.gmra.mxu0 %v2064
    %v2191 = vpop.f32.mrf.mxu0
    %v2192 = vadd.f32 0.0, %v2191
    %v2193 = vpop.f32.mrf.mxu0
    %2194 = vmatprep.mubr.f32.mxu0 0.0
    %2195 = vmatmul.mubr.f32.gmra.mxu0 %v2067
    %v2196 = vpop.f32.mrf.mxu0
    %v2197 = vadd.f32 0.0, %v2196
    %v2198 = vpop.f32.mrf.mxu0
    %2199 = vmatprep.mubr.f32.mxu0 0.0
    %2200 = vmatmul.mubr.f32.gmra.mxu0 %v2070
    %v2201 = vpop.f32.mrf.mxu0
    %v2202 = vadd.f32 0.0, %v2201
    %v2203 = vpop.f32.mrf.mxu0
    %2204 = vmatprep.mubr.f32.mxu0 0.0
    %2205 = vmatmul.mubr.f32.gmra.mxu0 %v2073
    %v2206 = vpop.f32.mrf.mxu0
    %v2207 = vadd.f32 0.0, %v2206
    %v2208 = vpop.f32.mrf.mxu0
    %2209 = vmatprep.mubr.f32.mxu0 0.0
    %2210 = vmatmul.mubr.f32.gmra.mxu0 %v2076
    %v2211 = vpop.f32.mrf.mxu0
    %v2212 = vadd.f32 0.0, %v2211
    %v2213 = vpop.f32.mrf.mxu0
    %2214 = vmatprep.mubr.f32.mxu0 0.0
    %2215 = vmatmul.mubr.f32.gmra.mxu0 %v2079
    %v2216 = vpop.f32.mrf.mxu0
    %v2217 = vadd.f32 0.0, %v2216
    %v2218 = vpop.f32.mrf.mxu0
    %2219 = vmatprep.mubr.f32.mxu0 0.0
    %2220 = vmatmul.mubr.f32.gmra.mxu0 %v2082
    %v2221 = vpop.f32.mrf.mxu0
    %v2222 = vadd.f32 0.0, %v2221
    %v2223 = vpop.f32.mrf.mxu0
    %2224 = vmatprep.mubr.f32.mxu0 0.0
    %2225 = vmatmul.mubr.f32.gmra.mxu0 %v2085
    %v2226 = vpop.f32.mrf.mxu0
    %v2227 = vadd.f32 0.0, %v2226
    %v2228 = vpop.f32.mrf.mxu0
    %2229 = vmatprep.mubr.f32.mxu0 0.0
    %2230 = vmatmul.mubr.f32.gmra.mxu0 %v2088
    %v2231 = vpop.f32.mrf.mxu0
    %v2232 = vadd.f32 0.0, %v2231
    %v2233 = vpop.f32.mrf.mxu0
    %2234 = vmatprep.mubr.f32.mxu0 0.0
    %2235 = vmatmul.mubr.f32.gmra.mxu0 %v2091
    %v2236 = vpop.f32.mrf.mxu0
    %v2237 = vadd.f32 0.0, %v2236
    %v2238 = vpop.f32.mrf.mxu0
    %2239 = vmatprep.mubr.f32.mxu0 0.0
    %2240 = vmatmul.mubr.f32.gmra.mxu0 %v2094
    %v2241 = vpop.f32.mrf.mxu0
    %v2242 = vadd.f32 0.0, %v2241
    %v2243 = vpop.f32.mrf.mxu0
    %2244 = vmatprep.mubr.f32.mxu0 0.0
    %2245 = vmatmul.mubr.f32.gmra.mxu0 %v2097
    %v2246 = vpop.f32.mrf.mxu0
    %v2247 = vadd.f32 0.0, %v2246
    %v2248 = vpop.f32.mrf.mxu0
    %2249 = vmatprep.mubr.f32.mxu0 0.0
    %2250 = vmatmul.mubr.f32.gmra.mxu0 %v2100
    %v2251 = vpop.f32.mrf.mxu0
    %v2252 = vadd.f32 0.0, %v2251
    %v2253 = vpop.f32.mrf.mxu0
    %2254 = vmatprep.mubr.f32.mxu0 0.0
    %2255 = vmatmul.mubr.f32.gmra.mxu0 %v2103
    %v2256 = vpop.f32.mrf.mxu0
    %v2257 = vadd.f32 0.0, %v2256
    %v2258 = vpop.f32.mrf.mxu0
    %2259 = vmatprep.mubr.f32.mxu0 0.0
    %2260 = vmatmul.mubr.f32.gmra.mxu0 %v2106
    %v2261 = vpop.f32.mrf.mxu0
    %v2262 = vadd.f32 0.0, %v2261
    %v2263 = vpop.f32.mrf.mxu0
    %2264 = vmatprep.mubr.f32.mxu0 0.0
    %2265 = vmatmul.mubr.f32.gmra.mxu0 %v2109
    %v2266 = vpop.f32.mrf.mxu0
    %v2267 = vadd.f32 0.0, %v2266
    %v2268 = vpop.f32.mrf.mxu0
    %2269 = vmatprep.mubr.f32.mxu0 0.0
    %2270 = vmatmul.mubr.f32.gmra.mxu0 %v2112
    %v2271 = vpop.f32.mrf.mxu0
    %v2272 = vadd.f32 0.0, %v2271
    %v2273 = vpop.f32.mrf.mxu0
    %2274 = vmatprep.mubr.f32.mxu0 0.0
    %2275 = vmatmul.mubr.f32.gmra.mxu0 %v2115
    %v2276 = vpop.f32.mrf.mxu0
    %v2277 = vadd.f32 0.0, %v2276
    %v2278 = vpop.f32.mrf.mxu0
    %2279 = vdwg.mxu0
    %v2281 = vsel %vm2059, %v1541, 0
    %v2284 = vsel %vm2059, %v1542, 0
    %v2287 = vsel %vm2059, %v1543, 0
    %v2290 = vsel %vm2059, %v1544, 0
    %v2293 = vsel %vm2059, %v1545, 0
    %v2296 = vsel %vm2059, %v1546, 0
    %v2299 = vsel %vm2059, %v1547, 0
    %v2302 = vsel %vm2059, %v1548, 0
    %v2305 = vsel %vm2059, %v1549, 0
    %v2308 = vsel %vm2059, %v1550, 0
    %v2311 = vsel %vm2059, %v1551, 0
    %v2314 = vsel %vm2059, %v1552, 0
    %v2317 = vsel %vm2059, %v1553, 0
    %v2320 = vsel %vm2059, %v1554, 0
    %v2323 = vsel %vm2059, %v1555, 0
    %v2326 = vsel %vm2059, %v1556, 0
    %v2329 = vsel %vm2059, %v1557, 0
    %v2332 = vsel %vm2059, %v1558, 0
    %v2335 = vsel %vm2059, %v1559, 0
    %v2338 = vsel %vm119, %v2044, 0
    %2340 = vmatprep.subr.mxu0 0.0
    %2341 = vmatpush1.msra.mxu0 0.0
    %2342 = vmatprep.subr.mxu0 0.0
    %2343 = vmatpush1.msra.mxu0 0.0
    %2344 = vmatprep.subr.mxu0 0.0
    %2345 = vmatpush1.msra.mxu0 0.0
    %2346 = vmatprep.subr.mxu0 0.0
    %2347 = vmatpush1.msra.mxu0 %v2338
    %2348 = vmatprep.subr.mxu0 0.0
    %2349 = vmatpush1.msra.mxu0 %v2043
    %2350 = vmatprep.subr.mxu0 0.0
    %2351 = vmatpush1.msra.mxu0 %v2042
    %2352 = vmatprep.subr.mxu0 0.0
    %2353 = vmatpush1.msra.mxu0 %v2041
    %2354 = vmatprep.subr.mxu0 0.0
    %2355 = vmatpush1.msra.mxu0 %v2040
    %2356 = vmatprep.subr.mxu0 0.0
    %2357 = vmatpush1.msra.mxu0 %v2039
    %2358 = vmatprep.subr.mxu0 0.0
    %2359 = vmatpush1.msra.mxu0 %v2038
    %2360 = vmatprep.subr.mxu0 0.0
    %2361 = vmatpush1.msra.mxu0 %v2037
    %2362 = vmatprep.subr.mxu0 0.0
    %2363 = vmatpush1.msra.mxu0 %v2036
    %2364 = vmatprep.subr.mxu0 0.0
    %2365 = vmatpush1.msra.mxu0 %v2035
    %2366 = vmatprep.subr.mxu0 0.0
    %2367 = vmatpush1.msra.mxu0 %v2034
    %2368 = vmatprep.subr.mxu0 0.0
    %2369 = vmatpush1.msra.mxu0 %v2033
    %2370 = vmatprep.subr.mxu0 0.0
    %2371 = vmatpush1.msra.mxu0 %v2032
    %2372 = vmatprep.subr.mxu0 0.0
    %2373 = vmatpush2.msra.mxu0 0.0
    %2374 = vmatprep.subr.mxu0 0.0
    %2375 = vmatpush2.msra.mxu0 0.0
    %2376 = vmatprep.subr.mxu0 0.0
    %2377 = vmatpush2.msra.mxu0 0.0
    %2378 = vmatprep.subr.mxu0 0.0
    %2379 = vmatpush2.msra.mxu0 0.0
    %2380 = vmatprep.subr.mxu0 0.0
    %2381 = vmatpush2.msra.mxu0 0.0
    %2382 = vmatprep.subr.mxu0 0.0
    %2383 = vmatpush2.msra.mxu0 0.0
    %2384 = vmatprep.subr.mxu0 0.0
    %2385 = vmatpush2.msra.mxu0 0.0
    %2386 = vmatprep.subr.mxu0 0.0
    %2387 = vmatpush2.msra.mxu0 0.0
    %2388 = vmatprep.subr.mxu0 0.0
    %2389 = vmatpush2.msra.mxu0 0.0
    %2390 = vmatprep.subr.mxu0 0.0
    %2391 = vmatpush2.msra.mxu0 0.0
    %2392 = vmatprep.subr.mxu0 0.0
    %2393 = vmatpush2.msra.mxu0 0.0
    %2394 = vmatprep.subr.mxu0 0.0
    %2395 = vmatpush2.msra.mxu0 0.0
    %2396 = vmatprep.subr.mxu0 0.0
    %2397 = vmatpush2.msra.mxu0 0.0
    %2398 = vmatprep.subr.mxu0 0.0
    %2399 = vmatpush2.msra.mxu0 0.0
    %2400 = vmatprep.subr.mxu0 0.0
    %2401 = vmatpush2.msra.mxu0 0.0
    %2402 = vmatprep.subr.mxu0 0.0
    %2403 = vmatpush2.msra.mxu0 0.0
    %2404 = vmatprep.mubr.f32.mxu0 0.0
    %2405 = vmatmul.mubr.f32.gmra.mxu0 %v2281
    %v2406 = vpop.f32.mrf.mxu0
    %v2407 = vadd.f32 %v2187, %v2406
    %v2408 = vpop.f32.mrf.mxu0
    %2409 = vmatprep.mubr.f32.mxu0 0.0
    %2410 = vmatmul.mubr.f32.gmra.mxu0 %v2284
    %v2411 = vpop.f32.mrf.mxu0
    %v2412 = vadd.f32 %v2192, %v2411
    %v2413 = vpop.f32.mrf.mxu0
    %2414 = vmatprep.mubr.f32.mxu0 0.0
    %2415 = vmatmul.mubr.f32.gmra.mxu0 %v2287
    %v2416 = vpop.f32.mrf.mxu0
    %v2417 = vadd.f32 %v2197, %v2416
    %v2418 = vpop.f32.mrf.mxu0
    %2419 = vmatprep.mubr.f32.mxu0 0.0
    %2420 = vmatmul.mubr.f32.gmra.mxu0 %v2290
    %v2421 = vpop.f32.mrf.mxu0
    %v2422 = vadd.f32 %v2202, %v2421
    %v2423 = vpop.f32.mrf.mxu0
    %2424 = vmatprep.mubr.f32.mxu0 0.0
    %2425 = vmatmul.mubr.f32.gmra.mxu0 %v2293
    %v2426 = vpop.f32.mrf.mxu0
    %v2427 = vadd.f32 %v2207, %v2426
    %v2428 = vpop.f32.mrf.mxu0
    %2429 = vmatprep.mubr.f32.mxu0 0.0
    %2430 = vmatmul.mubr.f32.gmra.mxu0 %v2296
    %v2431 = vpop.f32.mrf.mxu0
    %v2432 = vadd.f32 %v2212, %v2431
    %v2433 = vpop.f32.mrf.mxu0
    %2434 = vmatprep.mubr.f32.mxu0 0.0
    %2435 = vmatmul.mubr.f32.gmra.mxu0 %v2299
    %v2436 = vpop.f32.mrf.mxu0
    %v2437 = vadd.f32 %v2217, %v2436
    %v2438 = vpop.f32.mrf.mxu0
    %2439 = vmatprep.mubr.f32.mxu0 0.0
    %2440 = vmatmul.mubr.f32.gmra.mxu0 %v2302
    %v2441 = vpop.f32.mrf.mxu0
    %v2442 = vadd.f32 %v2222, %v2441
    %v2443 = vpop.f32.mrf.mxu0
    %2444 = vmatprep.mubr.f32.mxu0 0.0
    %2445 = vmatmul.mubr.f32.gmra.mxu0 %v2305
    %v2446 = vpop.f32.mrf.mxu0
    %v2447 = vadd.f32 %v2227, %v2446
    %v2448 = vpop.f32.mrf.mxu0
    %2449 = vmatprep.mubr.f32.mxu0 0.0
    %2450 = vmatmul.mubr.f32.gmra.mxu0 %v2308
    %v2451 = vpop.f32.mrf.mxu0
    %v2452 = vadd.f32 %v2232, %v2451
    %v2453 = vpop.f32.mrf.mxu0
    %2454 = vmatprep.mubr.f32.mxu0 0.0
    %2455 = vmatmul.mubr.f32.gmra.mxu0 %v2311
    %v2456 = vpop.f32.mrf.mxu0
    %v2457 = vadd.f32 %v2237, %v2456
    %v2458 = vpop.f32.mrf.mxu0
    %2459 = vmatprep.mubr.f32.mxu0 0.0
    %2460 = vmatmul.mubr.f32.gmra.mxu0 %v2314
    %v2461 = vpop.f32.mrf.mxu0
    %v2462 = vadd.f32 %v2242, %v2461
    %v2463 = vpop.f32.mrf.mxu0
    %2464 = vmatprep.mubr.f32.mxu0 0.0
    %2465 = vmatmul.mubr.f32.gmra.mxu0 %v2317
    %v2466 = vpop.f32.mrf.mxu0
    %v2467 = vadd.f32 %v2247, %v2466
    %v2468 = vpop.f32.mrf.mxu0
    %2469 = vmatprep.mubr.f32.mxu0 0.0
    %2470 = vmatmul.mubr.f32.gmra.mxu0 %v2320
    %v2471 = vpop.f32.mrf.mxu0
    %v2472 = vadd.f32 %v2252, %v2471
    %v2473 = vpop.f32.mrf.mxu0
    %2474 = vmatprep.mubr.f32.mxu0 0.0
    %2475 = vmatmul.mubr.f32.gmra.mxu0 %v2323
    %v2476 = vpop.f32.mrf.mxu0
    %v2477 = vadd.f32 %v2257, %v2476
    %v2478 = vpop.f32.mrf.mxu0
    %2479 = vmatprep.mubr.f32.mxu0 0.0
    %2480 = vmatmul.mubr.f32.gmra.mxu0 %v2326
    %v2481 = vpop.f32.mrf.mxu0
    %v2482 = vadd.f32 %v2262, %v2481
    %v2483 = vpop.f32.mrf.mxu0
    %2484 = vmatprep.mubr.f32.mxu0 0.0
    %2485 = vmatmul.mubr.f32.gmra.mxu0 %v2329
    %v2486 = vpop.f32.mrf.mxu0
    %v2487 = vadd.f32 %v2267, %v2486
    %v2488 = vpop.f32.mrf.mxu0
    %2489 = vmatprep.mubr.f32.mxu0 0.0
    %2490 = vmatmul.mubr.f32.gmra.mxu0 %v2332
    %v2491 = vpop.f32.mrf.mxu0
    %v2492 = vadd.f32 %v2272, %v2491
    %v2493 = vpop.f32.mrf.mxu0
    %2494 = vmatprep.mubr.f32.mxu0 0.0
    %2495 = vmatmul.mubr.f32.gmra.mxu0 %v2335
    %v2496 = vpop.f32.mrf.mxu0
    %v2497 = vadd.f32 %v2277, %v2496
    %v2498 = vpop.f32.mrf.mxu0
    %2499 = vdwg.mxu0
    %v2500 = vld [vmem:[%s6] sm:$0x1]
    %v2502 = vlaneseq
    %v2503 = vshrl.u32 %v2502, 7
    %v2504 = vsub.s32 0, %v2503
    %v2505 = vrot.slane %v2500, %v2504
    %v2507 = vadd.f32 %v2407, %v2505
    %v2508 = vadd.f32 %v2412, %v2505
    %v2509 = vadd.f32 %v2417, %v2505
    %v2510 = vadd.f32 %v2422, %v2505
    %v2511 = vadd.f32 %v2427, %v2505
    %v2512 = vadd.f32 %v2432, %v2505
    %v2513 = vadd.f32 %v2437, %v2505
    %v2514 = vadd.f32 %v2442, %v2505
    %v2515 = vadd.f32 %v2447, %v2505
    %v2516 = vadd.f32 %v2452, %v2505
    %v2517 = vadd.f32 %v2457, %v2505
    %v2518 = vadd.f32 %v2462, %v2505
    %v2519 = vadd.f32 %v2467, %v2505
    %v2520 = vadd.f32 %v2472, %v2505
    %v2521 = vadd.f32 %v2477, %v2505
    %v2522 = vadd.f32 %v2482, %v2505
    %v2523 = vadd.f32 %v2487, %v2505
    %v2524 = vadd.f32 %v2492, %v2505
    %v2525 = vadd.f32 %v2497, %v2505
    %v2526 = vmax.f32 %v2507, 0.0
    %v2527 = vmax.f32 %v2508, 0.0
    %v2528 = vmax.f32 %v2509, 0.0
    %v2529 = vmax.f32 %v2510, 0.0
    %v2530 = vmax.f32 %v2511, 0.0
    %v2531 = vmax.f32 %v2512, 0.0
    %v2532 = vmax.f32 %v2513, 0.0
    %v2533 = vmax.f32 %v2514, 0.0
    %v2534 = vmax.f32 %v2515, 0.0
    %v2535 = vmax.f32 %v2516, 0.0
    %v2536 = vmax.f32 %v2517, 0.0
    %v2537 = vmax.f32 %v2518, 0.0
    %v2538 = vmax.f32 %v2519, 0.0
    %v2539 = vmax.f32 %v2520, 0.0
    %v2540 = vmax.f32 %v2521, 0.0
    %v2541 = vmax.f32 %v2522, 0.0
    %v2542 = vmax.f32 %v2523, 0.0
    %v2543 = vmax.f32 %v2524, 0.0
    %v2544 = vmax.f32 %v2525, 0.0
    %vm2545 = vcmask 244736
    %2546 = vst.msk [vmem:[#allocation2] sm:$0xff] %vm2545, %v2526
    %2547 = vst.msk [vmem:[#allocation2 + $0x8] sm:$0xff] %vm2545, %v2527
    %2548 = vst.msk [vmem:[#allocation2 + $0x10] sm:$0xff] %vm2545, %v2528
    %2549 = vst.msk [vmem:[#allocation2 + $0x18] sm:$0xff] %vm2545, %v2529
    %2550 = vst.msk [vmem:[#allocation2 + $0x20] sm:$0xff] %vm2545, %v2530
    %2551 = vst.msk [vmem:[#allocation2 + $0x28] sm:$0xff] %vm2545, %v2531
    %2552 = vst.msk [vmem:[#allocation2 + $0x30] sm:$0xff] %vm2545, %v2532
    %2553 = vst.msk [vmem:[#allocation2 + $0x38] sm:$0xff] %vm2545, %v2533
    %2554 = vst.msk [vmem:[#allocation2 + $0x40] sm:$0xff] %vm2545, %v2534
    %2555 = vst.msk [vmem:[#allocation2 + $0x48] sm:$0xff] %vm2545, %v2535
    %2556 = vst.msk [vmem:[#allocation2 + $0x50] sm:$0xff] %vm2545, %v2536
    %2557 = vst.msk [vmem:[#allocation2 + $0x58] sm:$0xff] %vm2545, %v2537
    %2558 = vst.msk [vmem:[#allocation2 + $0x60] sm:$0xff] %vm2545, %v2538
    %2559 = vst.msk [vmem:[#allocation2 + $0x68] sm:$0xff] %vm2545, %v2539
    %2560 = vst.msk [vmem:[#allocation2 + $0x70] sm:$0xff] %vm2545, %v2540
    %2561 = vst.msk [vmem:[#allocation2 + $0x78] sm:$0xff] %vm2545, %v2541
    %2562 = vst.msk [vmem:[#allocation2 + $0x80] sm:$0xff] %vm2545, %v2542
    %2563 = vst.msk [vmem:[#allocation2 + $0x88] sm:$0xff] %vm2545, %v2543
    %vm2564 = vcmask 242688
    %2565 = vst.msk [vmem:[#allocation2 + $0x90] sm:$0x3f] %vm2564, %v2544
    %v2566 = vld [vmem:[#allocation2] sm:$0x3]
    %vm2567 = vcmask 238592
    %2568 = vst.msk [vmem:[#allocation3] sm:$0x3] %vm2567, %v2566
    %v2569 = vld [vmem:[#allocation2 + $0x2] sm:$0x3]
    %v2572 = vunpack.c.l.s4 1983009808
    %v2573 = vunpack.c.0.s8 %v2572
    %v2574 = vlaneseq
    %v2575 = vshrl.u32 %v2574, 7
    %v2576 = vsub.s32 %v2573, %v2575
    %v2577 = vrot.slane %v2569, %v2576
    %2578 = vrot.lane.b32.xlu0 %v2577, 30
    %v2579 = vpop.permute.xlu0 %2578
    %vm2581 = vcmask 484592
    %2582 = vst.msk [vmem:[#allocation3] sm:$0x3] %vm2581, %v2579
    %v2583 = vld [vmem:[#allocation2 + $0x4] sm:$0x3]
    %v2586 = vunpack.c.l.s4 1983009808
    %v2587 = vunpack.c.0.s8 %v2586
    %v2588 = vlaneseq
    %v2589 = vshrl.u32 %v2588, 7
    %v2590 = vsub.s32 %v2587, %v2589
    %v2591 = vrot.slane %v2583, %v2590
    %2592 = vrot.lane.b32.xlu0 %v2591, 60
    %v2593 = vpop.permute.xlu0 %2592
    %vm2595 = vcmask 730592
    %2596 = vst.msk [vmem:[#allocation3] sm:$0x3] %vm2595, %v2593
    %v2597 = vld [vmem:[#allocation2 + $0x6] sm:$0x3]
    %v2600 = vunpack.c.l.s4 1983009808
    %v2601 = vunpack.c.0.s8 %v2600
    %v2602 = vlaneseq
    %v2603 = vshrl.u32 %v2602, 7
    %v2604 = vsub.s32 %v2601, %v2603
    %v2605 = vrot.slane %v2597, %v2604
    %2606 = vrot.lane.b32.xlu0 %v2605, 90
    %v2607 = vpop.permute.xlu0 %2606
    %vm2609 = vcmask 976592
    %2610 = vst.msk [vmem:[#allocation3] sm:$0x3] %vm2609, %v2607
    %v2611 = vld [vmem:[#allocation2 + $0x8] sm:$0x3]
    %v2614 = vunpack.c.l.s4 1983009808
    %v2615 = vunpack.c.0.s8 %v2614
    %v2616 = vlaneseq
    %v2617 = vshrl.u32 %v2616, 7
    %v2618 = vsub.s32 %v2615, %v2617
    %v2619 = vrot.slane %v2611, %v2618
    %2620 = vrot.lane.b32.xlu0 %v2619, 120
    %v2621 = vpop.permute.xlu0 %2620
    %v2622 = vrot.slane %v2621, 6
    %vm2623 = vcmask 982016
    %v2624 = vsel %vm2623, %v2622, %v2621
    %vm2626 = vcmask 1042368
    %vm2627 = vcmask 175106
    %vm2628 = vmor %vm2627, %vm2626
    %2629 = vst.msk [vmem:[#allocation3] sm:$0xf] %vm2628, %v2624
    %v2630 = vld [vmem:[#allocation2 + $0xa] sm:$0x3]
    %v2633 = vunpack.c.l.s4 1983009808
    %v2634 = vunpack.c.0.s8 %v2633
    %v2635 = vlaneseq
    %v2636 = vshrl.u32 %v2635, 7
    %v2637 = vsub.s32 %v2634, %v2636
    %v2638 = vrot.slane %v2630, %v2637
    %2639 = vrot.lane.b32.xlu0 %v2638, 22
    %v2640 = vpop.permute.xlu0 %2639
    %vm2642 = vcmask 418992
    %2643 = vst.msk [vmem:[#allocation3 + $0x2] sm:$0x3] %vm2642, %v2640
    %v2644 = vld [vmem:[#allocation2 + $0xc] sm:$0x3]
    %v2647 = vunpack.c.l.s4 1983009808
    %v2648 = vunpack.c.0.s8 %v2647
    %v2649 = vlaneseq
    %v2650 = vshrl.u32 %v2649, 7
    %v2651 = vsub.s32 %v2648, %v2650
    %v2652 = vrot.slane %v2644, %v2651
    %2653 = vrot.lane.b32.xlu0 %v2652, 52
    %v2654 = vpop.permute.xlu0 %2653
    %vm2656 = vcmask 664992
    %2657 = vst.msk [vmem:[#allocation3 + $0x2] sm:$0x3] %vm2656, %v2654
    %v2658 = vld [vmem:[#allocation2 + $0xe] sm:$0x3]
    %v2661 = vunpack.c.l.s4 1983009808
    %v2662 = vunpack.c.0.s8 %v2661
    %v2663 = vlaneseq
    %v2664 = vshrl.u32 %v2663, 7
    %v2665 = vsub.s32 %v2662, %v2664
    %v2666 = vrot.slane %v2658, %v2665
    %2667 = vrot.lane.b32.xlu0 %v2666, 82
    %v2668 = vpop.permute.xlu0 %2667
    %vm2670 = vcmask 910992
    %2671 = vst.msk [vmem:[#allocation3 + $0x2] sm:$0x3] %vm2670, %v2668
    %v2672 = vld [vmem:[#allocation2 + $0x10] sm:$0x3]
    %v2675 = vunpack.c.l.s4 1983009808
    %v2676 = vunpack.c.0.s8 %v2675
    %v2677 = vlaneseq
    %v2678 = vshrl.u32 %v2677, 7
    %v2679 = vsub.s32 %v2676, %v2678
    %v2680 = vrot.slane %v2672, %v2679
    %2681 = vrot.lane.b32.xlu0 %v2680, 112
    %v2682 = vpop.permute.xlu0 %2681
    %v2683 = vrot.slane %v2682, 6
    %vm2684 = vcmask 916480
    %v2685 = vsel %vm2684, %v2683, %v2682
    %vm2687 = vcmask 1042304
    %vm2688 = vcmask 109570
    %vm2689 = vmor %vm2688, %vm2687
    %2690 = vst.msk [vmem:[#allocation3 + $0x2] sm:$0xf] %vm2689, %v2685
    %v2691 = vld [vmem:[#allocation2 + $0x12] sm:$0x3]
    %v2694 = vunpack.c.l.s4 1983009808
    %v2695 = vunpack.c.0.s8 %v2694
    %v2696 = vlaneseq
    %v2697 = vshrl.u32 %v2696, 7
    %v2698 = vsub.s32 %v2695, %v2697
    %v2699 = vrot.slane %v2691, %v2698
    %2700 = vrot.lane.b32.xlu0 %v2699, 14
    %v2701 = vpop.permute.xlu0 %2700
    %vm2703 = vcmask 353392
    %2704 = vst.msk [vmem:[#allocation3 + $0x4] sm:$0x3] %vm2703, %v2701
    %v2705 = vld [vmem:[#allocation2 + $0x14] sm:$0x3]
    %v2708 = vunpack.c.l.s4 1983009808
    %v2709 = vunpack.c.0.s8 %v2708
    %v2710 = vlaneseq
    %v2711 = vshrl.u32 %v2710, 7
    %v2712 = vsub.s32 %v2709, %v2711
    %v2713 = vrot.slane %v2705, %v2712
    %2714 = vrot.lane.b32.xlu0 %v2713, 44
    %v2715 = vpop.permute.xlu0 %2714
    %vm2717 = vcmask 599392
    %2718 = vst.msk [vmem:[#allocation3 + $0x4] sm:$0x3] %vm2717, %v2715
    %v2719 = vld [vmem:[#allocation2 + $0x16] sm:$0x3]
    %v2722 = vunpack.c.l.s4 1983009808
    %v2723 = vunpack.c.0.s8 %v2722
    %v2724 = vlaneseq
    %v2725 = vshrl.u32 %v2724, 7
    %v2726 = vsub.s32 %v2723, %v2725
    %v2727 = vrot.slane %v2719, %v2726
    %2728 = vrot.lane.b32.xlu0 %v2727, 74
    %v2729 = vpop.permute.xlu0 %2728
    %vm2731 = vcmask 845392
    %2732 = vst.msk [vmem:[#allocation3 + $0x4] sm:$0x3] %vm2731, %v2729
    %v2733 = vld [vmem:[#allocation2 + $0x18] sm:$0x3]
    %v2736 = vunpack.c.l.s4 1983009808
    %v2737 = vunpack.c.0.s8 %v2736
    %v2738 = vlaneseq
    %v2739 = vshrl.u32 %v2738, 7
    %v2740 = vsub.s32 %v2737, %v2739
    %v2741 = vrot.slane %v2733, %v2740
    %2742 = vrot.lane.b32.xlu0 %v2741, 104
    %v2743 = vpop.permute.xlu0 %2742
    %v2744 = vrot.slane %v2743, 6
    %vm2745 = vcmask 850944
    %v2746 = vsel %vm2745, %v2744, %v2743
    %vm2748 = vcmask 1042240
    %vm2749 = vcmask 44034
    %vm2750 = vmor %vm2749, %vm2748
    %2751 = vst.msk [vmem:[#allocation3 + $0x4] sm:$0xf] %vm2750, %v2746
    %v2752 = vld [vmem:[#allocation2 + $0x1a] sm:$0x3]
    %v2755 = vunpack.c.l.s4 1983009808
    %v2756 = vunpack.c.0.s8 %v2755
    %v2757 = vlaneseq
    %v2758 = vshrl.u32 %v2757, 7
    %v2759 = vsub.s32 %v2756, %v2758
    %v2760 = vrot.slane %v2752, %v2759
    %2761 = vrot.lane.b32.xlu0 %v2760, 6
    %v2762 = vpop.permute.xlu0 %2761
    %vm2764 = vcmask 287792
    %2765 = vst.msk [vmem:[#allocation3 + $0x6] sm:$0x3] %vm2764, %v2762
    %v2766 = vld [vmem:[#allocation2 + $0x1c] sm:$0x3]
    %v2769 = vunpack.c.l.s4 1983009808
    %v2770 = vunpack.c.0.s8 %v2769
    %v2771 = vlaneseq
    %v2772 = vshrl.u32 %v2771, 7
    %v2773 = vsub.s32 %v2770, %v2772
    %v2774 = vrot.slane %v2766, %v2773
    %2775 = vrot.lane.b32.xlu0 %v2774, 36
    %v2776 = vpop.permute.xlu0 %2775
    %vm2778 = vcmask 533792
    %2779 = vst.msk [vmem:[#allocation3 + $0x6] sm:$0x3] %vm2778, %v2776
    %v2780 = vld [vmem:[#allocation2 + $0x1e] sm:$0x3]
    %v2783 = vunpack.c.l.s4 1983009808
    %v2784 = vunpack.c.0.s8 %v2783
    %v2785 = vlaneseq
    %v2786 = vshrl.u32 %v2785, 7
    %v2787 = vsub.s32 %v2784, %v2786
    %v2788 = vrot.slane %v2780, %v2787
    %2789 = vrot.lane.b32.xlu0 %v2788, 66
    %v2790 = vpop.permute.xlu0 %2789
    %vm2792 = vcmask 779792
    %2793 = vst.msk [vmem:[#allocation3 + $0x6] sm:$0x3] %vm2792, %v2790
    %v2794 = vld [vmem:[#allocation2 + $0x20] sm:$0x3]
    %v2797 = vunpack.c.l.s4 1983009808
    %v2798 = vunpack.c.0.s8 %v2797
    %v2799 = vlaneseq
    %v2800 = vshrl.u32 %v2799, 7
    %v2801 = vsub.s32 %v2798, %v2800
    %v2802 = vrot.slane %v2794, %v2801
    %2803 = vrot.lane.b32.xlu0 %v2802, 96
    %v2804 = vpop.permute.xlu0 %2803
    %vm2806 = vcmask 1025792
    %2807 = vst.msk [vmem:[#allocation3 + $0x6] sm:$0x3] %vm2806, %v2804
    %v2808 = vld [vmem:[#allocation2 + $0x22] sm:$0x3]
    %v2811 = vunpack.c.l.s4 1983009808
    %v2812 = vunpack.c.0.s8 %v2811
    %v2813 = vlaneseq
    %v2814 = vshrl.u32 %v2813, 7
    %v2815 = vsub.s32 %v2812, %v2814
    %v2816 = vrot.slane %v2808, %v2815
    %2817 = vrot.lane.b32.xlu0 %v2816, 126
    %v2818 = vpop.permute.xlu0 %2817
    %v2819 = vrot.slane %v2818, 6
    %vm2820 = vcmask 1031168
    %v2821 = vsel %vm2820, %v2819, %v2818
    %vm2823 = vcmask 1042416
    %vm2824 = vcmask 224258
    %vm2825 = vmor %vm2824, %vm2823
    %2826 = vst.msk [vmem:[#allocation3 + $0x6] sm:$0xf] %vm2825, %v2821
    %v2827 = vld [vmem:[#allocation2 + $0x24] sm:$0x3]
    %v2830 = vunpack.c.l.s4 1983009808
    %v2831 = vunpack.c.0.s8 %v2830
    %v2832 = vlaneseq
    %v2833 = vshrl.u32 %v2832, 7
    %v2834 = vsub.s32 %v2831, %v2833
    %v2835 = vrot.slane %v2827, %v2834
    %2836 = vrot.lane.b32.xlu0 %v2835, 28
    %v2837 = vpop.permute.xlu0 %2836
    %vm2839 = vcmask 468192
    %2840 = vst.msk [vmem:[#allocation3 + $0x8] sm:$0x3] %vm2839, %v2837
    %v2841 = vld [vmem:[#allocation2 + $0x26] sm:$0x3]
    %v2844 = vunpack.c.l.s4 1983009808
    %v2845 = vunpack.c.0.s8 %v2844
    %v2846 = vlaneseq
    %v2847 = vshrl.u32 %v2846, 7
    %v2848 = vsub.s32 %v2845, %v2847
    %v2849 = vrot.slane %v2841, %v2848
    %2850 = vrot.lane.b32.xlu0 %v2849, 58
    %v2851 = vpop.permute.xlu0 %2850
    %vm2853 = vcmask 714192
    %2854 = vst.msk [vmem:[#allocation3 + $0x8] sm:$0x3] %vm2853, %v2851
    %v2855 = vld [vmem:[#allocation2 + $0x28] sm:$0x3]
    %v2858 = vunpack.c.l.s4 1983009808
    %v2859 = vunpack.c.0.s8 %v2858
    %v2860 = vlaneseq
    %v2861 = vshrl.u32 %v2860, 7
    %v2862 = vsub.s32 %v2859, %v2861
    %v2863 = vrot.slane %v2855, %v2862
    %2864 = vrot.lane.b32.xlu0 %v2863, 88
    %v2865 = vpop.permute.xlu0 %2864
    %vm2867 = vcmask 960192
    %2868 = vst.msk [vmem:[#allocation3 + $0x8] sm:$0x3] %vm2867, %v2865
    %v2869 = vld [vmem:[#allocation2 + $0x2a] sm:$0x3]
    %v2872 = vunpack.c.l.s4 1983009808
    %v2873 = vunpack.c.0.s8 %v2872
    %v2874 = vlaneseq
    %v2875 = vshrl.u32 %v2874, 7
    %v2876 = vsub.s32 %v2873, %v2875
    %v2877 = vrot.slane %v2869, %v2876
    %2878 = vrot.lane.b32.xlu0 %v2877, 118
    %v2879 = vpop.permute.xlu0 %2878
    %v2880 = vrot.slane %v2879, 6
    %vm2881 = vcmask 965632
    %v2882 = vsel %vm2881, %v2880, %v2879
    %vm2884 = vcmask 1042352
    %vm2885 = vcmask 158722
    %vm2886 = vmor %vm2885, %vm2884
    %2887 = vst.msk [vmem:[#allocation3 + $0x8] sm:$0xf] %vm2886, %v2882
    %v2888 = vld [vmem:[#allocation2 + $0x2c] sm:$0x3]
    %v2891 = vunpack.c.l.s4 1983009808
    %v2892 = vunpack.c.0.s8 %v2891
    %v2893 = vlaneseq
    %v2894 = vshrl.u32 %v2893, 7
    %v2895 = vsub.s32 %v2892, %v2894
    %v2896 = vrot.slane %v2888, %v2895
    %2897 = vrot.lane.b32.xlu0 %v2896, 20
    %v2898 = vpop.permute.xlu0 %2897
    %vm2900 = vcmask 402592
    %2901 = vst.msk [vmem:[#allocation3 + $0xa] sm:$0x3] %vm2900, %v2898
    %v2902 = vld [vmem:[#allocation2 + $0x2e] sm:$0x3]
    %v2905 = vunpack.c.l.s4 1983009808
    %v2906 = vunpack.c.0.s8 %v2905
    %v2907 = vlaneseq
    %v2908 = vshrl.u32 %v2907, 7
    %v2909 = vsub.s32 %v2906, %v2908
    %v2910 = vrot.slane %v2902, %v2909
    %2911 = vrot.lane.b32.xlu0 %v2910, 50
    %v2912 = vpop.permute.xlu0 %2911
    %vm2914 = vcmask 648592
    %2915 = vst.msk [vmem:[#allocation3 + $0xa] sm:$0x3] %vm2914, %v2912
    %v2916 = vld [vmem:[#allocation2 + $0x30] sm:$0x3]
    %v2919 = vunpack.c.l.s4 1983009808
    %v2920 = vunpack.c.0.s8 %v2919
    %v2921 = vlaneseq
    %v2922 = vshrl.u32 %v2921, 7
    %v2923 = vsub.s32 %v2920, %v2922
    %v2924 = vrot.slane %v2916, %v2923
    %2925 = vrot.lane.b32.xlu0 %v2924, 80
    %v2926 = vpop.permute.xlu0 %2925
    %vm2928 = vcmask 894592
    %2929 = vst.msk [vmem:[#allocation3 + $0xa] sm:$0x3] %vm2928, %v2926
    %v2930 = vld [vmem:[#allocation2 + $0x32] sm:$0x3]
    %v2933 = vunpack.c.l.s4 1983009808
    %v2934 = vunpack.c.0.s8 %v2933
    %v2935 = vlaneseq
    %v2936 = vshrl.u32 %v2935, 7
    %v2937 = vsub.s32 %v2934, %v2936
    %v2938 = vrot.slane %v2930, %v2937
    %2939 = vrot.lane.b32.xlu0 %v2938, 110
    %v2940 = vpop.permute.xlu0 %2939
    %v2941 = vrot.slane %v2940, 6
    %vm2942 = vcmask 900096
    %v2943 = vsel %vm2942, %v2941, %v2940
    %vm2945 = vcmask 1042288
    %vm2946 = vcmask 93186
    %vm2947 = vmor %vm2946, %vm2945
    %2948 = vst.msk [vmem:[#allocation3 + $0xa] sm:$0xf] %vm2947, %v2943
    %v2949 = vld [vmem:[#allocation2 + $0x34] sm:$0x3]
    %v2952 = vunpack.c.l.s4 1983009808
    %v2953 = vunpack.c.0.s8 %v2952
    %v2954 = vlaneseq
    %v2955 = vshrl.u32 %v2954, 7
    %v2956 = vsub.s32 %v2953, %v2955
    %v2957 = vrot.slane %v2949, %v2956
    %2958 = vrot.lane.b32.xlu0 %v2957, 12
    %v2959 = vpop.permute.xlu0 %2958
    %vm2961 = vcmask 336992
    %2962 = vst.msk [vmem:[#allocation3 + $0xc] sm:$0x3] %vm2961, %v2959
    %v2963 = vld [vmem:[#allocation2 + $0x36] sm:$0x3]
    %v2966 = vunpack.c.l.s4 1983009808
    %v2967 = vunpack.c.0.s8 %v2966
    %v2968 = vlaneseq
    %v2969 = vshrl.u32 %v2968, 7
    %v2970 = vsub.s32 %v2967, %v2969
    %v2971 = vrot.slane %v2963, %v2970
    %2972 = vrot.lane.b32.xlu0 %v2971, 42
    %v2973 = vpop.permute.xlu0 %2972
    %vm2975 = vcmask 582992
    %2976 = vst.msk [vmem:[#allocation3 + $0xc] sm:$0x3] %vm2975, %v2973
    %v2977 = vld [vmem:[#allocation2 + $0x38] sm:$0x3]
    %v2980 = vunpack.c.l.s4 1983009808
    %v2981 = vunpack.c.0.s8 %v2980
    %v2982 = vlaneseq
    %v2983 = vshrl.u32 %v2982, 7
    %v2984 = vsub.s32 %v2981, %v2983
    %v2985 = vrot.slane %v2977, %v2984
    %2986 = vrot.lane.b32.xlu0 %v2985, 72
    %v2987 = vpop.permute.xlu0 %2986
    %vm2989 = vcmask 828992
    %2990 = vst.msk [vmem:[#allocation3 + $0xc] sm:$0x3] %vm2989, %v2987
    %v2991 = vld [vmem:[#allocation2 + $0x3a] sm:$0x3]
    %v2994 = vunpack.c.l.s4 1983009808
    %v2995 = vunpack.c.0.s8 %v2994
    %v2996 = vlaneseq
    %v2997 = vshrl.u32 %v2996, 7
    %v2998 = vsub.s32 %v2995, %v2997
    %v2999 = vrot.slane %v2991, %v2998
    %3000 = vrot.lane.b32.xlu0 %v2999, 102
    %v3001 = vpop.permute.xlu0 %3000
    %v3002 = vrot.slane %v3001, 6
    %vm3003 = vcmask 834560
    %v3004 = vsel %vm3003, %v3002, %v3001
    %vm3006 = vcmask 1042224
    %vm3007 = vcmask 27650
    %vm3008 = vmor %vm3007, %vm3006
    %3009 = vst.msk [vmem:[#allocation3 + $0xc] sm:$0xf] %vm3008, %v3004
    %v3010 = vld [vmem:[#allocation2 + $0x3c] sm:$0x3]
    %v3013 = vunpack.c.l.s4 1983009808
    %v3014 = vunpack.c.0.s8 %v3013
    %v3015 = vlaneseq
    %v3016 = vshrl.u32 %v3015, 7
    %v3017 = vsub.s32 %v3014, %v3016
    %v3018 = vrot.slane %v3010, %v3017
    %3019 = vrot.lane.b32.xlu0 %v3018, 4
    %v3020 = vpop.permute.xlu0 %3019
    %vm3022 = vcmask 271392
    %3023 = vst.msk [vmem:[#allocation3 + $0xe] sm:$0x3] %vm3022, %v3020
    %v3024 = vld [vmem:[#allocation2 + $0x3e] sm:$0x3]
    %v3027 = vunpack.c.l.s4 1983009808
    %v3028 = vunpack.c.0.s8 %v3027
    %v3029 = vlaneseq
    %v3030 = vshrl.u32 %v3029, 7
    %v3031 = vsub.s32 %v3028, %v3030
    %v3032 = vrot.slane %v3024, %v3031
    %3033 = vrot.lane.b32.xlu0 %v3032, 34
    %v3034 = vpop.permute.xlu0 %3033
    %vm3036 = vcmask 517392
    %3037 = vst.msk [vmem:[#allocation3 + $0xe] sm:$0x3] %vm3036, %v3034
    %v3038 = vld [vmem:[#allocation2 + $0x40] sm:$0x3]
    %v3041 = vunpack.c.l.s4 1983009808
    %v3042 = vunpack.c.0.s8 %v3041
    %v3043 = vlaneseq
    %v3044 = vshrl.u32 %v3043, 7
    %v3045 = vsub.s32 %v3042, %v3044
    %v3046 = vrot.slane %v3038, %v3045
    %3047 = vrot.lane.b32.xlu0 %v3046, 64
    %v3048 = vpop.permute.xlu0 %3047
    %vm3050 = vcmask 763392
    %3051 = vst.msk [vmem:[#allocation3 + $0xe] sm:$0x3] %vm3050, %v3048
    %v3052 = vld [vmem:[#allocation2 + $0x42] sm:$0x3]
    %v3055 = vunpack.c.l.s4 1983009808
    %v3056 = vunpack.c.0.s8 %v3055
    %v3057 = vlaneseq
    %v3058 = vshrl.u32 %v3057, 7
    %v3059 = vsub.s32 %v3056, %v3058
    %v3060 = vrot.slane %v3052, %v3059
    %3061 = vrot.lane.b32.xlu0 %v3060, 94
    %v3062 = vpop.permute.xlu0 %3061
    %vm3064 = vcmask 1009392
    %3065 = vst.msk [vmem:[#allocation3 + $0xe] sm:$0x3] %vm3064, %v3062
    %v3066 = vld [vmem:[#allocation2 + $0x44] sm:$0x3]
    %v3069 = vunpack.c.l.s4 1983009808
    %v3070 = vunpack.c.0.s8 %v3069
    %v3071 = vlaneseq
    %v3072 = vshrl.u32 %v3071, 7
    %v3073 = vsub.s32 %v3070, %v3072
    %v3074 = vrot.slane %v3066, %v3073
    %3075 = vrot.lane.b32.xlu0 %v3074, 124
    %v3076 = vpop.permute.xlu0 %3075
    %v3077 = vrot.slane %v3076, 6
    %vm3078 = vcmask 1014784
    %v3079 = vsel %vm3078, %v3077, %v3076
    %vm3081 = vcmask 1042400
    %vm3082 = vcmask 207874
    %vm3083 = vmor %vm3082, %vm3081
    %3084 = vst.msk [vmem:[#allocation3 + $0xe] sm:$0xf] %vm3083, %v3079
    %v3085 = vld [vmem:[#allocation2 + $0x46] sm:$0x3]
    %v3088 = vunpack.c.l.s4 1983009808
    %v3089 = vunpack.c.0.s8 %v3088
    %v3090 = vlaneseq
    %v3091 = vshrl.u32 %v3090, 7
    %v3092 = vsub.s32 %v3089, %v3091
    %v3093 = vrot.slane %v3085, %v3092
    %3094 = vrot.lane.b32.xlu0 %v3093, 26
    %v3095 = vpop.permute.xlu0 %3094
    %vm3097 = vcmask 451792
    %3098 = vst.msk [vmem:[#allocation3 + $0x10] sm:$0x3] %vm3097, %v3095
    %v3099 = vld [vmem:[#allocation2 + $0x48] sm:$0x3]
    %v3102 = vunpack.c.l.s4 1983009808
    %v3103 = vunpack.c.0.s8 %v3102
    %v3104 = vlaneseq
    %v3105 = vshrl.u32 %v3104, 7
    %v3106 = vsub.s32 %v3103, %v3105
    %v3107 = vrot.slane %v3099, %v3106
    %3108 = vrot.lane.b32.xlu0 %v3107, 56
    %v3109 = vpop.permute.xlu0 %3108
    %vm3111 = vcmask 697792
    %3112 = vst.msk [vmem:[#allocation3 + $0x10] sm:$0x3] %vm3111, %v3109
    %v3113 = vld [vmem:[#allocation2 + $0x4a] sm:$0x3]
    %v3116 = vunpack.c.l.s4 1983009808
    %v3117 = vunpack.c.0.s8 %v3116
    %v3118 = vlaneseq
    %v3119 = vshrl.u32 %v3118, 7
    %v3120 = vsub.s32 %v3117, %v3119
    %v3121 = vrot.slane %v3113, %v3120
    %3122 = vrot.lane.b32.xlu0 %v3121, 86
    %v3123 = vpop.permute.xlu0 %3122
    %vm3125 = vcmask 943792
    %3126 = vst.msk [vmem:[#allocation3 + $0x10] sm:$0x3] %vm3125, %v3123
    %v3127 = vld [vmem:[#allocation2 + $0x4c] sm:$0x3]
    %v3130 = vunpack.c.l.s4 1983009808
    %v3131 = vunpack.c.0.s8 %v3130
    %v3132 = vlaneseq
    %v3133 = vshrl.u32 %v3132, 7
    %v3134 = vsub.s32 %v3131, %v3133
    %v3135 = vrot.slane %v3127, %v3134
    %3136 = vrot.lane.b32.xlu0 %v3135, 116
    %v3137 = vpop.permute.xlu0 %3136
    %v3138 = vrot.slane %v3137, 6
    %vm3139 = vcmask 949248
    %v3140 = vsel %vm3139, %v3138, %v3137
    %vm3142 = vcmask 1042336
    %vm3143 = vcmask 142338
    %vm3144 = vmor %vm3143, %vm3142
    %3145 = vst.msk [vmem:[#allocation3 + $0x10] sm:$0xf] %vm3144, %v3140
    %v3146 = vld [vmem:[#allocation2 + $0x4e] sm:$0x3]
    %v3149 = vunpack.c.l.s4 1983009808
    %v3150 = vunpack.c.0.s8 %v3149
    %v3151 = vlaneseq
    %v3152 = vshrl.u32 %v3151, 7
    %v3153 = vsub.s32 %v3150, %v3152
    %v3154 = vrot.slane %v3146, %v3153
    %3155 = vrot.lane.b32.xlu0 %v3154, 18
    %v3156 = vpop.permute.xlu0 %3155
    %vm3158 = vcmask 386192
    %3159 = vst.msk [vmem:[#allocation3 + $0x12] sm:$0x3] %vm3158, %v3156
    %v3160 = vld [vmem:[#allocation2 + $0x50] sm:$0x3]
    %v3163 = vunpack.c.l.s4 1983009808
    %v3164 = vunpack.c.0.s8 %v3163
    %v3165 = vlaneseq
    %v3166 = vshrl.u32 %v3165, 7
    %v3167 = vsub.s32 %v3164, %v3166
    %v3168 = vrot.slane %v3160, %v3167
    %3169 = vrot.lane.b32.xlu0 %v3168, 48
    %v3170 = vpop.permute.xlu0 %3169
    %vm3172 = vcmask 632192
    %3173 = vst.msk [vmem:[#allocation3 + $0x12] sm:$0x3] %vm3172, %v3170
    %v3174 = vld [vmem:[#allocation2 + $0x52] sm:$0x3]
    %v3177 = vunpack.c.l.s4 1983009808
    %v3178 = vunpack.c.0.s8 %v3177
    %v3179 = vlaneseq
    %v3180 = vshrl.u32 %v3179, 7
    %v3181 = vsub.s32 %v3178, %v3180
    %v3182 = vrot.slane %v3174, %v3181
    %3183 = vrot.lane.b32.xlu0 %v3182, 78
    %v3184 = vpop.permute.xlu0 %3183
    %vm3186 = vcmask 878192
    %3187 = vst.msk [vmem:[#allocation3 + $0x12] sm:$0x3] %vm3186, %v3184
    %v3188 = vld [vmem:[#allocation2 + $0x54] sm:$0x3]
    %v3191 = vunpack.c.l.s4 1983009808
    %v3192 = vunpack.c.0.s8 %v3191
    %v3193 = vlaneseq
    %v3194 = vshrl.u32 %v3193, 7
    %v3195 = vsub.s32 %v3192, %v3194
    %v3196 = vrot.slane %v3188, %v3195
    %3197 = vrot.lane.b32.xlu0 %v3196, 108
    %v3198 = vpop.permute.xlu0 %3197
    %v3199 = vrot.slane %v3198, 6
    %vm3200 = vcmask 883712
    %v3201 = vsel %vm3200, %v3199, %v3198
    %vm3203 = vcmask 1042272
    %vm3204 = vcmask 76802
    %vm3205 = vmor %vm3204, %vm3203
    %3206 = vst.msk [vmem:[#allocation3 + $0x12] sm:$0xf] %vm3205, %v3201
    %v3207 = vld [vmem:[#allocation2 + $0x56] sm:$0x3]
    %v3210 = vunpack.c.l.s4 1983009808
    %v3211 = vunpack.c.0.s8 %v3210
    %v3212 = vlaneseq
    %v3213 = vshrl.u32 %v3212, 7
    %v3214 = vsub.s32 %v3211, %v3213
    %v3215 = vrot.slane %v3207, %v3214
    %3216 = vrot.lane.b32.xlu0 %v3215, 10
    %v3217 = vpop.permute.xlu0 %3216
    %vm3219 = vcmask 320592
    %3220 = vst.msk [vmem:[#allocation3 + $0x14] sm:$0x3] %vm3219, %v3217
    %v3221 = vld [vmem:[#allocation2 + $0x58] sm:$0x3]
    %v3224 = vunpack.c.l.s4 1983009808
    %v3225 = vunpack.c.0.s8 %v3224
    %v3226 = vlaneseq
    %v3227 = vshrl.u32 %v3226, 7
    %v3228 = vsub.s32 %v3225, %v3227
    %v3229 = vrot.slane %v3221, %v3228
    %3230 = vrot.lane.b32.xlu0 %v3229, 40
    %v3231 = vpop.permute.xlu0 %3230
    %vm3233 = vcmask 566592
    %3234 = vst.msk [vmem:[#allocation3 + $0x14] sm:$0x3] %vm3233, %v3231
    %v3235 = vld [vmem:[#allocation2 + $0x5a] sm:$0x3]
    %v3238 = vunpack.c.l.s4 1983009808
    %v3239 = vunpack.c.0.s8 %v3238
    %v3240 = vlaneseq
    %v3241 = vshrl.u32 %v3240, 7
    %v3242 = vsub.s32 %v3239, %v3241
    %v3243 = vrot.slane %v3235, %v3242
    %3244 = vrot.lane.b32.xlu0 %v3243, 70
    %v3245 = vpop.permute.xlu0 %3244
    %vm3247 = vcmask 812592
    %3248 = vst.msk [vmem:[#allocation3 + $0x14] sm:$0x3] %vm3247, %v3245
    %v3249 = vld [vmem:[#allocation2 + $0x5c] sm:$0x3]
    %v3252 = vunpack.c.l.s4 1983009808
    %v3253 = vunpack.c.0.s8 %v3252
    %v3254 = vlaneseq
    %v3255 = vshrl.u32 %v3254, 7
    %v3256 = vsub.s32 %v3253, %v3255
    %v3257 = vrot.slane %v3249, %v3256
    %3258 = vrot.lane.b32.xlu0 %v3257, 100
    %v3259 = vpop.permute.xlu0 %3258
    %v3260 = vrot.slane %v3259, 6
    %v3261 = vsel %vm2059, %v3260, %v3259
    %vm3263 = vcmask 1042208
    %vm3264 = vcmask 11266
    %vm3265 = vmor %vm3264, %vm3263
    %3266 = vst.msk [vmem:[#allocation3 + $0x14] sm:$0xf] %vm3265, %v3261
    %v3267 = vld [vmem:[#allocation2 + $0x5e] sm:$0x3]
    %v3270 = vunpack.c.l.s4 1983009808
    %v3271 = vunpack.c.0.s8 %v3270
    %v3272 = vlaneseq
    %v3273 = vshrl.u32 %v3272, 7
    %v3274 = vsub.s32 %v3271, %v3273
    %v3275 = vrot.slane %v3267, %v3274
    %3276 = vrot.lane.b32.xlu0 %v3275, 2
    %v3277 = vpop.permute.xlu0 %3276
    %vm3279 = vcmask 254992
    %3280 = vst.msk [vmem:[#allocation3 + $0x16] sm:$0x3] %vm3279, %v3277
    %v3281 = vld [vmem:[#allocation2 + $0x60] sm:$0x3]
    %v3284 = vunpack.c.l.s4 1983009808
    %v3285 = vunpack.c.0.s8 %v3284
    %v3286 = vlaneseq
    %v3287 = vshrl.u32 %v3286, 7
    %v3288 = vsub.s32 %v3285, %v3287
    %v3289 = vrot.slane %v3281, %v3288
    %3290 = vrot.lane.b32.xlu0 %v3289, 32
    %v3291 = vpop.permute.xlu0 %3290
    %vm3293 = vcmask 500992
    %3294 = vst.msk [vmem:[#allocation3 + $0x16] sm:$0x3] %vm3293, %v3291
    %v3295 = vld [vmem:[#allocation2 + $0x62] sm:$0x3]
    %v3298 = vunpack.c.l.s4 1983009808
    %v3299 = vunpack.c.0.s8 %v3298
    %v3300 = vlaneseq
    %v3301 = vshrl.u32 %v3300, 7
    %v3302 = vsub.s32 %v3299, %v3301
    %v3303 = vrot.slane %v3295, %v3302
    %3304 = vrot.lane.b32.xlu0 %v3303, 62
    %v3305 = vpop.permute.xlu0 %3304
    %vm3307 = vcmask 746992
    %3308 = vst.msk [vmem:[#allocation3 + $0x16] sm:$0x3] %vm3307, %v3305
    %v3309 = vld [vmem:[#allocation2 + $0x64] sm:$0x3]
    %v3312 = vunpack.c.l.s4 1983009808
    %v3313 = vunpack.c.0.s8 %v3312
    %v3314 = vlaneseq
    %v3315 = vshrl.u32 %v3314, 7
    %v3316 = vsub.s32 %v3313, %v3315
    %v3317 = vrot.slane %v3309, %v3316
    %3318 = vrot.lane.b32.xlu0 %v3317, 92
    %v3319 = vpop.permute.xlu0 %3318
    %vm3321 = vcmask 992992
    %3322 = vst.msk [vmem:[#allocation3 + $0x16] sm:$0x3] %vm3321, %v3319
    %v3323 = vld [vmem:[#allocation2 + $0x66] sm:$0x3]
    %v3326 = vunpack.c.l.s4 1983009808
    %v3327 = vunpack.c.0.s8 %v3326
    %v3328 = vlaneseq
    %v3329 = vshrl.u32 %v3328, 7
    %v3330 = vsub.s32 %v3327, %v3329
    %v3331 = vrot.slane %v3323, %v3330
    %3332 = vrot.lane.b32.xlu0 %v3331, 122
    %v3333 = vpop.permute.xlu0 %3332
    %v3334 = vrot.slane %v3333, 6
    %vm3335 = vcmask 998400
    %v3336 = vsel %vm3335, %v3334, %v3333
    %vm3338 = vcmask 1042384
    %vm3339 = vcmask 191490
    %vm3340 = vmor %vm3339, %vm3338
    %3341 = vst.msk [vmem:[#allocation3 + $0x16] sm:$0xf] %vm3340, %v3336
    %v3342 = vld [vmem:[#allocation2 + $0x68] sm:$0x3]
    %v3345 = vunpack.c.l.s4 1983009808
    %v3346 = vunpack.c.0.s8 %v3345
    %v3347 = vlaneseq
    %v3348 = vshrl.u32 %v3347, 7
    %v3349 = vsub.s32 %v3346, %v3348
    %v3350 = vrot.slane %v3342, %v3349
    %3351 = vrot.lane.b32.xlu0 %v3350, 24
    %v3352 = vpop.permute.xlu0 %3351
    %vm3354 = vcmask 435392
    %3355 = vst.msk [vmem:[#allocation3 + $0x18] sm:$0x3] %vm3354, %v3352
    %v3356 = vld [vmem:[#allocation2 + $0x6a] sm:$0x3]
    %v3359 = vunpack.c.l.s4 1983009808
    %v3360 = vunpack.c.0.s8 %v3359
    %v3361 = vlaneseq
    %v3362 = vshrl.u32 %v3361, 7
    %v3363 = vsub.s32 %v3360, %v3362
    %v3364 = vrot.slane %v3356, %v3363
    %3365 = vrot.lane.b32.xlu0 %v3364, 54
    %v3366 = vpop.permute.xlu0 %3365
    %vm3368 = vcmask 681392
    %3369 = vst.msk [vmem:[#allocation3 + $0x18] sm:$0x3] %vm3368, %v3366
    %v3370 = vld [vmem:[#allocation2 + $0x6c] sm:$0x3]
    %v3373 = vunpack.c.l.s4 1983009808
    %v3374 = vunpack.c.0.s8 %v3373
    %v3375 = vlaneseq
    %v3376 = vshrl.u32 %v3375, 7
    %v3377 = vsub.s32 %v3374, %v3376
    %v3378 = vrot.slane %v3370, %v3377
    %3379 = vrot.lane.b32.xlu0 %v3378, 84
    %v3380 = vpop.permute.xlu0 %3379
    %vm3382 = vcmask 927392
    %3383 = vst.msk [vmem:[#allocation3 + $0x18] sm:$0x3] %vm3382, %v3380
    %v3384 = vld [vmem:[#allocation2 + $0x6e] sm:$0x3]
    %v3387 = vunpack.c.l.s4 1983009808
    %v3388 = vunpack.c.0.s8 %v3387
    %v3389 = vlaneseq
    %v3390 = vshrl.u32 %v3389, 7
    %v3391 = vsub.s32 %v3388, %v3390
    %v3392 = vrot.slane %v3384, %v3391
    %3393 = vrot.lane.b32.xlu0 %v3392, 114
    %v3394 = vpop.permute.xlu0 %3393
    %v3395 = vrot.slane %v3394, 6
    %vm3396 = vcmask 932864
    %v3397 = vsel %vm3396, %v3395, %v3394
    %vm3399 = vcmask 1042320
    %vm3400 = vcmask 125954
    %vm3401 = vmor %vm3400, %vm3399
    %3402 = vst.msk [vmem:[#allocation3 + $0x18] sm:$0xf] %vm3401, %v3397
    %v3403 = vld [vmem:[#allocation2 + $0x70] sm:$0x3]
    %v3406 = vunpack.c.l.s4 1983009808
    %v3407 = vunpack.c.0.s8 %v3406
    %v3408 = vlaneseq
    %v3409 = vshrl.u32 %v3408, 7
    %v3410 = vsub.s32 %v3407, %v3409
    %v3411 = vrot.slane %v3403, %v3410
    %3412 = vrot.lane.b32.xlu0 %v3411, 16
    %v3413 = vpop.permute.xlu0 %3412
    %vm3415 = vcmask 369792
    %3416 = vst.msk [vmem:[#allocation3 + $0x1a] sm:$0x3] %vm3415, %v3413
    %v3417 = vld [vmem:[#allocation2 + $0x72] sm:$0x3]
    %v3420 = vunpack.c.l.s4 1983009808
    %v3421 = vunpack.c.0.s8 %v3420
    %v3422 = vlaneseq
    %v3423 = vshrl.u32 %v3422, 7
    %v3424 = vsub.s32 %v3421, %v3423
    %v3425 = vrot.slane %v3417, %v3424
    %3426 = vrot.lane.b32.xlu0 %v3425, 46
    %v3427 = vpop.permute.xlu0 %3426
    %vm3429 = vcmask 615792
    %3430 = vst.msk [vmem:[#allocation3 + $0x1a] sm:$0x3] %vm3429, %v3427
    %v3431 = vld [vmem:[#allocation2 + $0x74] sm:$0x3]
    %v3434 = vunpack.c.l.s4 1983009808
    %v3435 = vunpack.c.0.s8 %v3434
    %v3436 = vlaneseq
    %v3437 = vshrl.u32 %v3436, 7
    %v3438 = vsub.s32 %v3435, %v3437
    %v3439 = vrot.slane %v3431, %v3438
    %3440 = vrot.lane.b32.xlu0 %v3439, 76
    %v3441 = vpop.permute.xlu0 %3440
    %vm3443 = vcmask 861792
    %3444 = vst.msk [vmem:[#allocation3 + $0x1a] sm:$0x3] %vm3443, %v3441
    %v3445 = vld [vmem:[#allocation2 + $0x76] sm:$0x3]
    %v3448 = vunpack.c.l.s4 1983009808
    %v3449 = vunpack.c.0.s8 %v3448
    %v3450 = vlaneseq
    %v3451 = vshrl.u32 %v3450, 7
    %v3452 = vsub.s32 %v3449, %v3451
    %v3453 = vrot.slane %v3445, %v3452
    %3454 = vrot.lane.b32.xlu0 %v3453, 106
    %v3455 = vpop.permute.xlu0 %3454
    %v3456 = vrot.slane %v3455, 6
    %vm3457 = vcmask 867328
    %v3458 = vsel %vm3457, %v3456, %v3455
    %vm3460 = vcmask 1042256
    %vm3461 = vcmask 60418
    %vm3462 = vmor %vm3461, %vm3460
    %3463 = vst.msk [vmem:[#allocation3 + $0x1a] sm:$0xf] %vm3462, %v3458
    %v3464 = vld [vmem:[#allocation2 + $0x78] sm:$0x3]
    %v3467 = vunpack.c.l.s4 1983009808
    %v3468 = vunpack.c.0.s8 %v3467
    %v3469 = vlaneseq
    %v3470 = vshrl.u32 %v3469, 7
    %v3471 = vsub.s32 %v3468, %v3470
    %v3472 = vrot.slane %v3464, %v3471
    %3473 = vrot.lane.b32.xlu0 %v3472, 8
    %v3474 = vpop.permute.xlu0 %3473
    %vm3476 = vcmask 304192
    %3477 = vst.msk [vmem:[#allocation3 + $0x1c] sm:$0x3] %vm3476, %v3474
    %v3478 = vld [vmem:[#allocation2 + $0x7a] sm:$0x3]
    %v3481 = vunpack.c.l.s4 1983009808
    %v3482 = vunpack.c.0.s8 %v3481
    %v3483 = vlaneseq
    %v3484 = vshrl.u32 %v3483, 7
    %v3485 = vsub.s32 %v3482, %v3484
    %v3486 = vrot.slane %v3478, %v3485
    %3487 = vrot.lane.b32.xlu0 %v3486, 38
    %v3488 = vpop.permute.xlu0 %3487
    %vm3490 = vcmask 550192
    %3491 = vst.msk [vmem:[#allocation3 + $0x1c] sm:$0x3] %vm3490, %v3488
    %v3492 = vld [vmem:[#allocation2 + $0x7c] sm:$0x3]
    %v3495 = vunpack.c.l.s4 1983009808
    %v3496 = vunpack.c.0.s8 %v3495
    %v3497 = vlaneseq
    %v3498 = vshrl.u32 %v3497, 7
    %v3499 = vsub.s32 %v3496, %v3498
    %v3500 = vrot.slane %v3492, %v3499
    %3501 = vrot.lane.b32.xlu0 %v3500, 68
    %v3502 = vpop.permute.xlu0 %3501
    %vm3504 = vcmask 796192
    %3505 = vst.msk [vmem:[#allocation3 + $0x1c] sm:$0x3] %vm3504, %v3502
    %v3506 = vld [vmem:[#allocation2 + $0x7e] sm:$0x3]
    %v3509 = vunpack.c.l.s4 1983009808
    %v3510 = vunpack.c.0.s8 %v3509
    %v3511 = vlaneseq
    %v3512 = vshrl.u32 %v3511, 7
    %v3513 = vsub.s32 %v3510, %v3512
    %v3514 = vrot.slane %v3506, %v3513
    %3515 = vrot.lane.b32.xlu0 %v3514, 98
    %v3516 = vpop.permute.xlu0 %3515
    %vm3518 = vcmask 1042192
    %3519 = vst.msk [vmem:[#allocation3 + $0x1c] sm:$0x3] %vm3518, %v3516
    %v3520 = vld [vmem:[#allocation2 + $0x80] sm:$0x3]
    %3521 = vst.msk [vmem:[#allocation3 + $0x1e] sm:$0x3] %vm2567, %v3520
    %v3522 = vld [vmem:[#allocation2 + $0x82] sm:$0x3]
    %v3525 = vunpack.c.l.s4 1983009808
    %v3526 = vunpack.c.0.s8 %v3525
    %v3527 = vlaneseq
    %v3528 = vshrl.u32 %v3527, 7
    %v3529 = vsub.s32 %v3526, %v3528
    %v3530 = vrot.slane %v3522, %v3529
    %3531 = vrot.lane.b32.xlu0 %v3530, 30
    %v3532 = vpop.permute.xlu0 %3531
    %3534 = vst.msk [vmem:[#allocation3 + $0x1e] sm:$0x3] %vm2581, %v3532
    %v3535 = vld [vmem:[#allocation2 + $0x84] sm:$0x3]
    %v3538 = vunpack.c.l.s4 1983009808
    %v3539 = vunpack.c.0.s8 %v3538
    %v3540 = vlaneseq
    %v3541 = vshrl.u32 %v3540, 7
    %v3542 = vsub.s32 %v3539, %v3541
    %v3543 = vrot.slane %v3535, %v3542
    %3544 = vrot.lane.b32.xlu0 %v3543, 60
    %v3545 = vpop.permute.xlu0 %3544
    %3547 = vst.msk [vmem:[#allocation3 + $0x1e] sm:$0x3] %vm2595, %v3545
    %v3548 = vld [vmem:[#allocation2 + $0x86] sm:$0x3]
    %v3551 = vunpack.c.l.s4 1983009808
    %v3552 = vunpack.c.0.s8 %v3551
    %v3553 = vlaneseq
    %v3554 = vshrl.u32 %v3553, 7
    %v3555 = vsub.s32 %v3552, %v3554
    %v3556 = vrot.slane %v3548, %v3555
    %3557 = vrot.lane.b32.xlu0 %v3556, 90
    %v3558 = vpop.permute.xlu0 %3557
    %3560 = vst.msk [vmem:[#allocation3 + $0x1e] sm:$0x3] %vm2609, %v3558
    %v3561 = vld [vmem:[#allocation2 + $0x88] sm:$0x3]
    %v3564 = vunpack.c.l.s4 1983009808
    %v3565 = vunpack.c.0.s8 %v3564
    %v3566 = vlaneseq
    %v3567 = vshrl.u32 %v3566, 7
    %v3568 = vsub.s32 %v3565, %v3567
    %v3569 = vrot.slane %v3561, %v3568
    %3570 = vrot.lane.b32.xlu0 %v3569, 120
    %v3571 = vpop.permute.xlu0 %3570
    %v3572 = vrot.slane %v3571, 6
    %v3573 = vsel %vm2623, %v3572, %v3571
    %3575 = vst.msk [vmem:[#allocation3 + $0x1e] sm:$0xf] %vm2628, %v3573
    %v3576 = vld [vmem:[#allocation2 + $0x8a] sm:$0x3]
    %v3579 = vunpack.c.l.s4 1983009808
    %v3580 = vunpack.c.0.s8 %v3579
    %v3581 = vlaneseq
    %v3582 = vshrl.u32 %v3581, 7
    %v3583 = vsub.s32 %v3580, %v3582
    %v3584 = vrot.slane %v3576, %v3583
    %3585 = vrot.lane.b32.xlu0 %v3584, 22
    %v3586 = vpop.permute.xlu0 %3585
    %3588 = vst.msk [vmem:[#allocation3 + $0x20] sm:$0x3] %vm2642, %v3586
    %v3589 = vld [vmem:[#allocation2 + $0x8c] sm:$0x3]
    %v3592 = vunpack.c.l.s4 1983009808
    %v3593 = vunpack.c.0.s8 %v3592
    %v3594 = vlaneseq
    %v3595 = vshrl.u32 %v3594, 7
    %v3596 = vsub.s32 %v3593, %v3595
    %v3597 = vrot.slane %v3589, %v3596
    %3598 = vrot.lane.b32.xlu0 %v3597, 52
    %v3599 = vpop.permute.xlu0 %3598
    %3601 = vst.msk [vmem:[#allocation3 + $0x20] sm:$0x3] %vm2656, %v3599
    %v3602 = vld [vmem:[#allocation2 + $0x8e] sm:$0x3]
    %v3605 = vunpack.c.l.s4 1983009808
    %v3606 = vunpack.c.0.s8 %v3605
    %v3607 = vlaneseq
    %v3608 = vshrl.u32 %v3607, 7
    %v3609 = vsub.s32 %v3606, %v3608
    %v3610 = vrot.slane %v3602, %v3609
    %3611 = vrot.lane.b32.xlu0 %v3610, 82
    %v3612 = vpop.permute.xlu0 %3611
    %3614 = vst.msk [vmem:[#allocation3 + $0x20] sm:$0x3] %vm2670, %v3612
    %v3615 = vld [vmem:[#allocation2 + $0x90] sm:$0x3]
    %v3618 = vunpack.c.l.s4 1983009808
    %v3619 = vunpack.c.0.s8 %v3618
    %v3620 = vlaneseq
    %v3621 = vshrl.u32 %v3620, 7
    %v3622 = vsub.s32 %v3619, %v3621
    %v3623 = vrot.slane %v3615, %v3622
    %3624 = vrot.lane.b32.xlu0 %v3623, 112
    %v3625 = vpop.permute.xlu0 %3624
    %v3626 = vrot.slane %v3625, 6
    %v3627 = vsel %vm2684, %v3626, %v3625
    %3629 = vst.msk [vmem:[#allocation3 + $0x20] sm:$0xf] %vm2689, %v3627
    %v3630 = vld [vmem:[#allocation2 + $0x92] sm:$0x3]
    %v3633 = vunpack.c.l.s4 1983009808
    %v3634 = vunpack.c.0.s8 %v3633
    %v3635 = vlaneseq
    %v3636 = vshrl.u32 %v3635, 7
    %v3637 = vsub.s32 %v3634, %v3636
    %v3638 = vrot.slane %v3630, %v3637
    %3639 = vrot.lane.b32.xlu0 %v3638, 14
    %v3640 = vpop.permute.xlu0 %3639
    %3642 = vst.msk [vmem:[#allocation3 + $0x22] sm:$0x3] %vm2703, %v3640
    %v3643 = vld [vmem:[#allocation2 + $0x94] sm:$0x3]
    %v3646 = vunpack.c.l.s4 1983009808
    %v3647 = vunpack.c.0.s8 %v3646
    %v3648 = vlaneseq
    %v3649 = vshrl.u32 %v3648, 7
    %v3650 = vsub.s32 %v3647, %v3649
    %v3651 = vrot.slane %v3643, %v3650
    %3652 = vrot.lane.b32.xlu0 %v3651, 44
    %v3653 = vpop.permute.xlu0 %3652
    %3655 = vst.msk [vmem:[#allocation3 + $0x22] sm:$0x3] %vm2717, %v3653
    %v3656 = vld [vmem:[#allocation3] sm:$0xff]
    %v3657 = vld [vmem:[#allocation3 + $0x8] sm:$0xff]
    %v3658 = vld [vmem:[#allocation3 + $0x10] sm:$0xff]
    %v3659 = vld [vmem:[#allocation3 + $0x18] sm:$0xff]
    %v3660 = vld [vmem:[#allocation3 + $0x20] sm:$0xf]
    %v3661 = vld [vmem:[%s7] sm:$0xff]
    %v3662 = vld [vmem:[%s7 + $0x8] sm:$0xff]
    %v3663 = vld [vmem:[%s7 + $0x10] sm:$0xff]
    %v3664 = vld [vmem:[%s7 + $0x18] sm:$0xff]
    %v3665 = vld [vmem:[%s7 + $0x20] sm:$0xff]
    %v3666 = vld [vmem:[%s7 + $0x28] sm:$0xff]
    %v3667 = vld [vmem:[%s7 + $0x30] sm:$0xff]
    %v3668 = vld [vmem:[%s7 + $0x38] sm:$0xff]
    %v3669 = vld [vmem:[%s7 + $0x40] sm:$0xff]
    %v3670 = vld [vmem:[%s7 + $0x48] sm:$0xff]
    %v3671 = vld [vmem:[%s7 + $0x50] sm:$0xff]
    %v3672 = vld [vmem:[%s7 + $0x58] sm:$0xff]
    %v3673 = vld [vmem:[%s7 + $0x60] sm:$0xff]
    %v3674 = vld [vmem:[%s7 + $0x68] sm:$0xff]
    %v3675 = vld [vmem:[%s7 + $0x70] sm:$0xff]
    %v3676 = vld [vmem:[%s7 + $0x78] sm:$0xff]
    %v3677 = vld [vmem:[%s7 + $0x80] sm:$0xff]
    %v3678 = vld [vmem:[%s7 + $0x88] sm:$0xff]
    %v3679 = vld [vmem:[%s7 + $0x90] sm:$0xff]
    %v3680 = vld [vmem:[%s7 + $0x98] sm:$0xff]
    %v3681 = vld [vmem:[%s7 + $0xa0] sm:$0xff]
    %v3682 = vld [vmem:[%s7 + $0xa8] sm:$0xff]
    %v3683 = vld [vmem:[%s7 + $0xb0] sm:$0xff]
    %v3684 = vld [vmem:[%s7 + $0xb8] sm:$0xff]
    %v3685 = vld [vmem:[%s7 + $0xc0] sm:$0xff]
    %v3686 = vld [vmem:[%s7 + $0xc8] sm:$0xff]
    %v3687 = vld [vmem:[%s7 + $0xd0] sm:$0xff]
    %v3688 = vld [vmem:[%s7 + $0xd8] sm:$0xff]
    %v3689 = vld [vmem:[%s7 + $0xe0] sm:$0xff]
    %v3690 = vld [vmem:[%s7 + $0xe8] sm:$0xff]
    %v3691 = vld [vmem:[%s7 + $0xf0] sm:$0xff]
    %v3692 = vld [vmem:[%s7 + $0xf8] sm:$0xff]
    %v3693 = vld [vmem:[%s7 + $0x100] sm:$0xff]
    %v3694 = vld [vmem:[%s7 + $0x108] sm:$0xff]
    %v3695 = vld [vmem:[%s7 + $0x110] sm:$0xff]
    %v3696 = vld [vmem:[%s7 + $0x118] sm:$0xff]
    %v3697 = vld [vmem:[%s7 + $0x120] sm:$0xff]
    %v3698 = vld [vmem:[%s7 + $0x128] sm:$0xff]
    %v3699 = vld [vmem:[%s7 + $0x130] sm:$0xff]
    %v3700 = vld [vmem:[%s7 + $0x138] sm:$0xff]
    %v3701 = vld [vmem:[%s7 + $0x140] sm:$0xff]
    %v3702 = vld [vmem:[%s7 + $0x148] sm:$0xff]
    %v3703 = vld [vmem:[%s7 + $0x150] sm:$0xff]
    %v3704 = vld [vmem:[%s7 + $0x158] sm:$0xff]
    %v3705 = vld [vmem:[%s7 + $0x160] sm:$0xff]
    %v3706 = vld [vmem:[%s7 + $0x168] sm:$0xff]
    %v3707 = vld [vmem:[%s7 + $0x170] sm:$0xff]
    %v3708 = vld [vmem:[%s7 + $0x178] sm:$0xff]
    %v3709 = vld [vmem:[%s7 + $0x180] sm:$0xff]
    %v3710 = vld [vmem:[%s7 + $0x188] sm:$0xff]
    %v3711 = vld [vmem:[%s7 + $0x190] sm:$0xff]
    %v3712 = vld [vmem:[%s7 + $0x198] sm:$0xff]
    %v3713 = vld [vmem:[%s7 + $0x1a0] sm:$0xff]
    %v3714 = vld [vmem:[%s7 + $0x1a8] sm:$0xff]
    %v3715 = vld [vmem:[%s7 + $0x1b0] sm:$0xff]
    %v3716 = vld [vmem:[%s7 + $0x1b8] sm:$0xff]
    %v3717 = vld [vmem:[%s7 + $0x1c0] sm:$0xff]
    %v3718 = vld [vmem:[%s7 + $0x1c8] sm:$0xff]
    %v3719 = vld [vmem:[%s7 + $0x1d0] sm:$0xff]
    %v3720 = vld [vmem:[%s7 + $0x1d8] sm:$0xff]
    %v3721 = vld [vmem:[%s7 + $0x1e0] sm:$0xff]
    %v3722 = vld [vmem:[%s7 + $0x1e8] sm:$0xff]
    %v3723 = vld [vmem:[%s7 + $0x1f0] sm:$0xff]
    %v3724 = vld [vmem:[%s7 + $0x1f8] sm:$0xff]
    %v3725 = vld [vmem:[%s7 + $0x200] sm:$0xff]
    %v3726 = vld [vmem:[%s7 + $0x208] sm:$0xff]
    %v3727 = vld [vmem:[%s7 + $0x210] sm:$0xff]
    %v3728 = vld [vmem:[%s7 + $0x218] sm:$0xff]
    %v3729 = vld [vmem:[%s7 + $0x220] sm:$0xff]
    %v3730 = vld [vmem:[%s7 + $0x228] sm:$0xff]
    %v3731 = vld [vmem:[%s7 + $0x230] sm:$0xff]
    %v3732 = vld [vmem:[%s7 + $0x238] sm:$0xff]
    %v3733 = vld [vmem:[%s7 + $0x240] sm:$0xff]
    %v3734 = vld [vmem:[%s7 + $0x248] sm:$0xff]
    %v3735 = vld [vmem:[%s7 + $0x250] sm:$0xff]
    %v3736 = vld [vmem:[%s7 + $0x258] sm:$0xff]
    %v3737 = vld [vmem:[%s7 + $0x260] sm:$0xff]
    %v3738 = vld [vmem:[%s7 + $0x268] sm:$0xff]
    %v3739 = vld [vmem:[%s7 + $0x270] sm:$0xff]
    %v3740 = vld [vmem:[%s7 + $0x278] sm:$0xff]
    %v3741 = vld [vmem:[%s7 + $0x280] sm:$0xff]
    %v3742 = vld [vmem:[%s7 + $0x288] sm:$0xff]
    %v3743 = vld [vmem:[%s7 + $0x290] sm:$0xff]
    %v3744 = vld [vmem:[%s7 + $0x298] sm:$0xff]
    %v3745 = vld [vmem:[%s7 + $0x2a0] sm:$0xff]
    %v3746 = vld [vmem:[%s7 + $0x2a8] sm:$0xff]
    %v3747 = vld [vmem:[%s7 + $0x2b0] sm:$0xff]
    %v3748 = vld [vmem:[%s7 + $0x2b8] sm:$0xff]
    %v3749 = vld [vmem:[%s7 + $0x2c0] sm:$0xff]
    %v3750 = vld [vmem:[%s7 + $0x2c8] sm:$0xff]
    %v3751 = vld [vmem:[%s7 + $0x2d0] sm:$0xff]
    %v3752 = vld [vmem:[%s7 + $0x2d8] sm:$0xff]
    %v3753 = vld [vmem:[%s7 + $0x2e0] sm:$0xff]
    %v3754 = vld [vmem:[%s7 + $0x2e8] sm:$0xff]
    %v3755 = vld [vmem:[%s7 + $0x2f0] sm:$0xff]
    %v3756 = vld [vmem:[%s7 + $0x2f8] sm:$0xff]
    %v3757 = vld [vmem:[%s7 + $0x300] sm:$0xff]
    %v3758 = vld [vmem:[%s7 + $0x308] sm:$0xff]
    %v3759 = vld [vmem:[%s7 + $0x310] sm:$0xff]
    %v3760 = vld [vmem:[%s7 + $0x318] sm:$0xff]
    %v3761 = vld [vmem:[%s7 + $0x320] sm:$0xff]
    %v3762 = vld [vmem:[%s7 + $0x328] sm:$0xff]
    %v3763 = vld [vmem:[%s7 + $0x330] sm:$0xff]
    %v3764 = vld [vmem:[%s7 + $0x338] sm:$0xff]
    %v3765 = vld [vmem:[%s7 + $0x340] sm:$0xff]
    %v3766 = vld [vmem:[%s7 + $0x348] sm:$0xff]
    %v3767 = vld [vmem:[%s7 + $0x350] sm:$0xff]
    %v3768 = vld [vmem:[%s7 + $0x358] sm:$0xff]
    %v3769 = vld [vmem:[%s7 + $0x360] sm:$0xff]
    %v3770 = vld [vmem:[%s7 + $0x368] sm:$0xff]
    %v3771 = vld [vmem:[%s7 + $0x370] sm:$0xff]
    %v3772 = vld [vmem:[%s7 + $0x378] sm:$0xff]
    %v3773 = vld [vmem:[%s7 + $0x380] sm:$0xff]
    %v3774 = vld [vmem:[%s7 + $0x388] sm:$0xff]
    %v3775 = vld [vmem:[%s7 + $0x390] sm:$0xff]
    %v3776 = vld [vmem:[%s7 + $0x398] sm:$0xff]
    %v3777 = vld [vmem:[%s7 + $0x3a0] sm:$0xff]
    %v3778 = vld [vmem:[%s7 + $0x3a8] sm:$0xff]
    %v3779 = vld [vmem:[%s7 + $0x3b0] sm:$0xff]
    %v3780 = vld [vmem:[%s7 + $0x3b8] sm:$0xff]
    %v3781 = vld [vmem:[%s7 + $0x3c0] sm:$0xff]
    %v3782 = vld [vmem:[%s7 + $0x3c8] sm:$0xff]
    %v3783 = vld [vmem:[%s7 + $0x3d0] sm:$0xff]
    %v3784 = vld [vmem:[%s7 + $0x3d8] sm:$0xff]
    %v3785 = vld [vmem:[%s7 + $0x3e0] sm:$0xff]
    %v3786 = vld [vmem:[%s7 + $0x3e8] sm:$0xff]
    %v3787 = vld [vmem:[%s7 + $0x3f0] sm:$0xff]
    %v3788 = vld [vmem:[%s7 + $0x3f8] sm:$0xff]
    %v3789 = vld [vmem:[%s7 + $0x400] sm:$0xff]
    %v3790 = vld [vmem:[%s7 + $0x408] sm:$0xff]
    %v3791 = vld [vmem:[%s7 + $0x410] sm:$0xff]
    %v3792 = vld [vmem:[%s7 + $0x418] sm:$0xff]
    %v3793 = vld [vmem:[%s7 + $0x420] sm:$0xff]
    %v3794 = vld [vmem:[%s7 + $0x428] sm:$0xff]
    %v3795 = vld [vmem:[%s7 + $0x430] sm:$0xff]
    %v3796 = vld [vmem:[%s7 + $0x438] sm:$0xff]
    %v3797 = vld [vmem:[%s7 + $0x440] sm:$0xff]
    %v3798 = vld [vmem:[%s7 + $0x448] sm:$0xff]
    %v3799 = vld [vmem:[%s7 + $0x450] sm:$0xff]
    %v3800 = vld [vmem:[%s7 + $0x458] sm:$0xff]
    %v3801 = vld [vmem:[%s7 + $0x460] sm:$0xff]
    %v3802 = vld [vmem:[%s7 + $0x468] sm:$0xff]
    %v3803 = vld [vmem:[%s7 + $0x470] sm:$0xff]
    %v3804 = vld [vmem:[%s7 + $0x478] sm:$0xff]
    %v3805 = vld [vmem:[%s7 + $0x480] sm:$0xff]
    %v3806 = vld [vmem:[%s7 + $0x488] sm:$0xff]
    %v3807 = vld [vmem:[%s7 + $0x490] sm:$0xff]
    %v3808 = vld [vmem:[%s7 + $0x498] sm:$0xff]
    %v3809 = vld [vmem:[%s7 + $0x4a0] sm:$0xff]
    %v3810 = vld [vmem:[%s7 + $0x4a8] sm:$0xff]
    %v3811 = vld [vmem:[%s7 + $0x4b0] sm:$0xff]
    %v3812 = vld [vmem:[%s7 + $0x4b8] sm:$0xff]
    %v3813 = vld [vmem:[%s7 + $0x4c0] sm:$0xff]
    %v3814 = vld [vmem:[%s7 + $0x4c8] sm:$0xff]
    %v3815 = vld [vmem:[%s7 + $0x4d0] sm:$0xff]
    %v3816 = vld [vmem:[%s7 + $0x4d8] sm:$0xff]
    %v3817 = vld [vmem:[%s7 + $0x4e0] sm:$0xff]
    %v3818 = vld [vmem:[%s7 + $0x4e8] sm:$0xff]
    %v3819 = vld [vmem:[%s7 + $0x4f0] sm:$0xff]
    %v3820 = vld [vmem:[%s7 + $0x4f8] sm:$0xff]
    %v3821 = vld [vmem:[%s7 + $0x500] sm:$0xff]
    %v3822 = vld [vmem:[%s7 + $0x508] sm:$0xff]
    %v3823 = vld [vmem:[%s7 + $0x510] sm:$0xff]
    %v3824 = vld [vmem:[%s7 + $0x518] sm:$0xff]
    %v3825 = vld [vmem:[%s7 + $0x520] sm:$0xff]
    %v3826 = vld [vmem:[%s7 + $0x528] sm:$0xff]
    %v3827 = vld [vmem:[%s7 + $0x530] sm:$0xff]
    %v3828 = vld [vmem:[%s7 + $0x538] sm:$0xff]
    %v3829 = vld [vmem:[%s7 + $0x540] sm:$0xff]
    %v3830 = vld [vmem:[%s7 + $0x548] sm:$0xff]
    %v3831 = vld [vmem:[%s7 + $0x550] sm:$0xff]
    %v3832 = vld [vmem:[%s7 + $0x558] sm:$0xff]
    %v3833 = vld [vmem:[%s7 + $0x560] sm:$0xff]
    %v3834 = vld [vmem:[%s7 + $0x568] sm:$0xff]
    %v3835 = vld [vmem:[%s7 + $0x570] sm:$0xff]
    %v3836 = vld [vmem:[%s7 + $0x578] sm:$0xff]
    %v3837 = vld [vmem:[%s7 + $0x580] sm:$0xff]
    %v3838 = vld [vmem:[%s7 + $0x588] sm:$0xff]
    %v3839 = vld [vmem:[%s7 + $0x590] sm:$0xff]
    %v3840 = vld [vmem:[%s7 + $0x598] sm:$0xff]
    %v3841 = vld [vmem:[%s7 + $0x5a0] sm:$0xff]
    %v3842 = vld [vmem:[%s7 + $0x5a8] sm:$0xff]
    %v3843 = vld [vmem:[%s7 + $0x5b0] sm:$0xff]
    %v3844 = vld [vmem:[%s7 + $0x5b8] sm:$0xff]
    %v3845 = vld [vmem:[%s7 + $0x5c0] sm:$0xff]
    %v3846 = vld [vmem:[%s7 + $0x5c8] sm:$0xff]
    %v3847 = vld [vmem:[%s7 + $0x5d0] sm:$0xff]
    %v3848 = vld [vmem:[%s7 + $0x5d8] sm:$0xff]
    %v3849 = vld [vmem:[%s7 + $0x5e0] sm:$0xff]
    %v3850 = vld [vmem:[%s7 + $0x5e8] sm:$0xff]
    %v3851 = vld [vmem:[%s7 + $0x5f0] sm:$0xff]
    %v3852 = vld [vmem:[%s7 + $0x5f8] sm:$0xff]
    %v3853 = vld [vmem:[%s7 + $0x600] sm:$0xff]
    %v3854 = vld [vmem:[%s7 + $0x608] sm:$0xff]
    %v3855 = vld [vmem:[%s7 + $0x610] sm:$0xff]
    %v3856 = vld [vmem:[%s7 + $0x618] sm:$0xff]
    %v3857 = vld [vmem:[%s7 + $0x620] sm:$0xff]
    %v3858 = vld [vmem:[%s7 + $0x628] sm:$0xff]
    %v3859 = vld [vmem:[%s7 + $0x630] sm:$0xff]
    %v3860 = vld [vmem:[%s7 + $0x638] sm:$0xff]
    %v3861 = vld [vmem:[%s7 + $0x640] sm:$0xff]
    %v3862 = vld [vmem:[%s7 + $0x648] sm:$0xff]
    %v3863 = vld [vmem:[%s7 + $0x650] sm:$0xff]
    %v3864 = vld [vmem:[%s7 + $0x658] sm:$0xff]
    %v3865 = vld [vmem:[%s7 + $0x660] sm:$0xff]
    %v3866 = vld [vmem:[%s7 + $0x668] sm:$0xff]
    %v3867 = vld [vmem:[%s7 + $0x670] sm:$0xff]
    %v3868 = vld [vmem:[%s7 + $0x678] sm:$0xff]
    %v3869 = vld [vmem:[%s7 + $0x680] sm:$0xff]
    %v3870 = vld [vmem:[%s7 + $0x688] sm:$0xff]
    %v3871 = vld [vmem:[%s7 + $0x690] sm:$0xff]
    %v3872 = vld [vmem:[%s7 + $0x698] sm:$0xff]
    %v3873 = vld [vmem:[%s7 + $0x6a0] sm:$0xff]
    %v3874 = vld [vmem:[%s7 + $0x6a8] sm:$0xff]
    %v3875 = vld [vmem:[%s7 + $0x6b0] sm:$0xff]
    %v3876 = vld [vmem:[%s7 + $0x6b8] sm:$0xff]
    %v3877 = vld [vmem:[%s7 + $0x6c0] sm:$0xff]
    %v3878 = vld [vmem:[%s7 + $0x6c8] sm:$0xff]
    %v3879 = vld [vmem:[%s7 + $0x6d0] sm:$0xff]
    %v3880 = vld [vmem:[%s7 + $0x6d8] sm:$0xff]
    %v3881 = vld [vmem:[%s7 + $0x6e0] sm:$0xff]
    %v3882 = vld [vmem:[%s7 + $0x6e8] sm:$0xff]
    %v3883 = vld [vmem:[%s7 + $0x6f0] sm:$0xff]
    %v3884 = vld [vmem:[%s7 + $0x6f8] sm:$0xff]
    %v3885 = vld [vmem:[%s7 + $0x700] sm:$0xff]
    %v3886 = vld [vmem:[%s7 + $0x708] sm:$0xff]
    %v3887 = vld [vmem:[%s7 + $0x710] sm:$0xff]
    %v3888 = vld [vmem:[%s7 + $0x718] sm:$0xff]
    %v3889 = vld [vmem:[%s7 + $0x720] sm:$0xff]
    %v3890 = vld [vmem:[%s7 + $0x728] sm:$0xff]
    %v3891 = vld [vmem:[%s7 + $0x730] sm:$0xff]
    %v3892 = vld [vmem:[%s7 + $0x738] sm:$0xff]
    %v3893 = vld [vmem:[%s7 + $0x740] sm:$0xff]
    %v3894 = vld [vmem:[%s7 + $0x748] sm:$0xff]
    %v3895 = vld [vmem:[%s7 + $0x750] sm:$0xff]
    %v3896 = vld [vmem:[%s7 + $0x758] sm:$0xff]
    %v3897 = vld [vmem:[%s7 + $0x760] sm:$0xff]
    %v3898 = vld [vmem:[%s7 + $0x768] sm:$0xff]
    %v3899 = vld [vmem:[%s7 + $0x770] sm:$0xff]
    %v3900 = vld [vmem:[%s7 + $0x778] sm:$0xff]
    %v3901 = vld [vmem:[%s7 + $0x780] sm:$0xff]
    %v3902 = vld [vmem:[%s7 + $0x788] sm:$0xff]
    %v3903 = vld [vmem:[%s7 + $0x790] sm:$0xff]
    %v3904 = vld [vmem:[%s7 + $0x798] sm:$0xff]
    %v3905 = vld [vmem:[%s7 + $0x7a0] sm:$0xff]
    %v3906 = vld [vmem:[%s7 + $0x7a8] sm:$0xff]
    %v3907 = vld [vmem:[%s7 + $0x7b0] sm:$0xff]
    %v3908 = vld [vmem:[%s7 + $0x7b8] sm:$0xff]
    %v3909 = vld [vmem:[%s7 + $0x7c0] sm:$0xff]
    %v3910 = vld [vmem:[%s7 + $0x7c8] sm:$0xff]
    %v3911 = vld [vmem:[%s7 + $0x7d0] sm:$0xff]
    %v3912 = vld [vmem:[%s7 + $0x7d8] sm:$0xff]
    %v3913 = vld [vmem:[%s7 + $0x7e0] sm:$0xff]
    %v3914 = vld [vmem:[%s7 + $0x7e8] sm:$0xff]
    %v3915 = vld [vmem:[%s7 + $0x7f0] sm:$0xff]
    %v3916 = vld [vmem:[%s7 + $0x7f8] sm:$0xff]
    %v3917 = vld [vmem:[%s7 + $0x800] sm:$0xff]
    %v3918 = vld [vmem:[%s7 + $0x808] sm:$0xff]
    %v3919 = vld [vmem:[%s7 + $0x810] sm:$0xff]
    %v3920 = vld [vmem:[%s7 + $0x818] sm:$0xff]
    %v3921 = vld [vmem:[%s7 + $0x820] sm:$0xff]
    %v3922 = vld [vmem:[%s7 + $0x828] sm:$0xff]
    %v3923 = vld [vmem:[%s7 + $0x830] sm:$0xff]
    %v3924 = vld [vmem:[%s7 + $0x838] sm:$0xff]
    %v3925 = vld [vmem:[%s7 + $0x840] sm:$0xff]
    %v3926 = vld [vmem:[%s7 + $0x848] sm:$0xff]
    %v3927 = vld [vmem:[%s7 + $0x850] sm:$0xff]
    %v3928 = vld [vmem:[%s7 + $0x858] sm:$0xff]
    %v3929 = vld [vmem:[%s7 + $0x860] sm:$0xff]
    %v3930 = vld [vmem:[%s7 + $0x868] sm:$0xff]
    %v3931 = vld [vmem:[%s7 + $0x870] sm:$0xff]
    %v3932 = vld [vmem:[%s7 + $0x878] sm:$0xff]
    %v3933 = vld [vmem:[%s7 + $0x880] sm:$0xff]
    %v3934 = vld [vmem:[%s7 + $0x888] sm:$0xff]
    %v3935 = vld [vmem:[%s7 + $0x890] sm:$0xff]
    %v3936 = vld [vmem:[%s7 + $0x898] sm:$0xff]
    %v3937 = vld [vmem:[%s7 + $0x8a0] sm:$0xff]
    %v3938 = vld [vmem:[%s7 + $0x8a8] sm:$0xff]
    %v3939 = vld [vmem:[%s7 + $0x8b0] sm:$0xff]
    %v3940 = vld [vmem:[%s7 + $0x8b8] sm:$0xff]
    %v3941 = vld [vmem:[%s7 + $0x8c0] sm:$0xff]
    %v3942 = vld [vmem:[%s7 + $0x8c8] sm:$0x3]
    %v3943 = vld [vmem:[%s8] sm:$0x1]
    %v3945 = vlaneseq
    %v3946 = vshrl.u32 %v3945, 7
    %v3947 = vsub.s32 0, %v3946
    %v3948 = vrot.slane %v3943, %v3947
    %v3955 = vcombine.high %v3656, %v3656
    %v3957 = vunpack.c.l.s4 1983009808
    %v3958 = vunpack.c.0.s8 %v3957
    %v3959 = vlaneseq
    %v3960 = vshrl.u32 %v3959, 7
    %v3961 = vsub.s32 %v3958, %v3960
    %v3962 = vrot.slane %v3656, %v3961
    %v3964 = vunpack.c.l.s4 1983009808
    %v3965 = vunpack.c.0.s8 %v3964
    %v3966 = vlaneseq
    %v3967 = vshrl.u32 %v3966, 7
    %v3968 = vsub.s32 %v3965, %v3967
    %v3969 = vrot.slane %v3955, %v3968
    %v3970 = vcombine.high %v3962, %v3962
    %v3971 = vcombine.high %v3969, %v3969
    %v3972 = vcombine.high %v3657, %v3657
    %v3974 = vunpack.c.l.s4 1983009808
    %v3975 = vunpack.c.0.s8 %v3974
    %v3976 = vlaneseq
    %v3977 = vshrl.u32 %v3976, 7
    %v3978 = vsub.s32 %v3975, %v3977
    %v3979 = vrot.slane %v3657, %v3978
    %v3981 = vunpack.c.l.s4 1983009808
    %v3982 = vunpack.c.0.s8 %v3981
    %v3983 = vlaneseq
    %v3984 = vshrl.u32 %v3983, 7
    %v3985 = vsub.s32 %v3982, %v3984
    %v3986 = vrot.slane %v3972, %v3985
    %v3987 = vcombine.high %v3979, %v3979
    %v3988 = vcombine.high %v3986, %v3986
    %v3989 = vcombine.high %v3658, %v3658
    %v3991 = vunpack.c.l.s4 1983009808
    %v3992 = vunpack.c.0.s8 %v3991
    %v3993 = vlaneseq
    %v3994 = vshrl.u32 %v3993, 7
    %v3995 = vsub.s32 %v3992, %v3994
    %v3996 = vrot.slane %v3658, %v3995
    %v3998 = vunpack.c.l.s4 1983009808
    %v3999 = vunpack.c.0.s8 %v3998
    %v4000 = vlaneseq
    %v4001 = vshrl.u32 %v4000, 7
    %v4002 = vsub.s32 %v3999, %v4001
    %v4003 = vrot.slane %v3989, %v4002
    %v4004 = vcombine.high %v3996, %v3996
    %v4005 = vcombine.high %v4003, %v4003
    %v4006 = vcombine.high %v3659, %v3659
    %v4008 = vunpack.c.l.s4 1983009808
    %v4009 = vunpack.c.0.s8 %v4008
    %v4010 = vlaneseq
    %v4011 = vshrl.u32 %v4010, 7
    %v4012 = vsub.s32 %v4009, %v4011
    %v4013 = vrot.slane %v3659, %v4012
    %v4015 = vunpack.c.l.s4 1983009808
    %v4016 = vunpack.c.0.s8 %v4015
    %v4017 = vlaneseq
    %v4018 = vshrl.u32 %v4017, 7
    %v4019 = vsub.s32 %v4016, %v4018
    %v4020 = vrot.slane %v4006, %v4019
    %v4021 = vcombine.high %v4013, %v4013
    %v4022 = vcombine.high %v4020, %v4020
    %v4024 = vunpack.c.l.s4 1983009808
    %v4025 = vunpack.c.0.s8 %v4024
    %v4026 = vlaneseq
    %v4027 = vshrl.u32 %v4026, 7
    %v4028 = vsub.s32 %v4025, %v4027
    %v4029 = vrot.slane %v3660, %v4028
    %v4030 = vcombine.high %v4029, %v4029
    %vm4048 = vcmask 605184
    %v4049 = vsel %vm4048, %v4030, 0
    %vm4051 = vcmask 1041408
    %v4053 = vsel %vm4051, %v3942, 0
    %4055 = vmatprep.subr.mxu0 0.0
    %4056 = vmatpush1.msra.mxu0 %v3676
    %4057 = vmatprep.subr.mxu0 0.0
    %4058 = vmatpush1.msra.mxu0 %v3675
    %4059 = vmatprep.subr.mxu0 0.0
    %4060 = vmatpush1.msra.mxu0 %v3674
    %4061 = vmatprep.subr.mxu0 0.0
    %4062 = vmatpush1.msra.mxu0 %v3673
    %4063 = vmatprep.subr.mxu0 0.0
    %4064 = vmatpush1.msra.mxu0 %v3672
    %4065 = vmatprep.subr.mxu0 0.0
    %4066 = vmatpush1.msra.mxu0 %v3671
    %4067 = vmatprep.subr.mxu0 0.0
    %4068 = vmatpush1.msra.mxu0 %v3670
    %4069 = vmatprep.subr.mxu0 0.0
    %4070 = vmatpush1.msra.mxu0 %v3669
    %4071 = vmatprep.subr.mxu0 0.0
    %4072 = vmatpush1.msra.mxu0 %v3668
    %4073 = vmatprep.subr.mxu0 0.0
    %4074 = vmatpush1.msra.mxu0 %v3667
    %4075 = vmatprep.subr.mxu0 0.0
    %4076 = vmatpush1.msra.mxu0 %v3666
    %4077 = vmatprep.subr.mxu0 0.0
    %4078 = vmatpush1.msra.mxu0 %v3665
    %4079 = vmatprep.subr.mxu0 0.0
    %4080 = vmatpush1.msra.mxu0 %v3664
    %4081 = vmatprep.subr.mxu0 0.0
    %4082 = vmatpush1.msra.mxu0 %v3663
    %4083 = vmatprep.subr.mxu0 0.0
    %4084 = vmatpush1.msra.mxu0 %v3662
    %4085 = vmatprep.subr.mxu0 0.0
    %4086 = vmatpush1.msra.mxu0 %v3661
    %4087 = vmatprep.subr.mxu0 0.0
    %4088 = vmatpush2.msra.mxu0 %v3692
    %4089 = vmatprep.subr.mxu0 0.0
    %4090 = vmatpush2.msra.mxu0 %v3691
    %4091 = vmatprep.subr.mxu0 0.0
    %4092 = vmatpush2.msra.mxu0 %v3690
    %4093 = vmatprep.subr.mxu0 0.0
    %4094 = vmatpush2.msra.mxu0 %v3689
    %4095 = vmatprep.subr.mxu0 0.0
    %4096 = vmatpush2.msra.mxu0 %v3688
    %4097 = vmatprep.subr.mxu0 0.0
    %4098 = vmatpush2.msra.mxu0 %v3687
    %4099 = vmatprep.subr.mxu0 0.0
    %4100 = vmatpush2.msra.mxu0 %v3686
    %4101 = vmatprep.subr.mxu0 0.0
    %4102 = vmatpush2.msra.mxu0 %v3685
    %4103 = vmatprep.subr.mxu0 0.0
    %4104 = vmatpush2.msra.mxu0 %v3684
    %4105 = vmatprep.subr.mxu0 0.0
    %4106 = vmatpush2.msra.mxu0 %v3683
    %4107 = vmatprep.subr.mxu0 0.0
    %4108 = vmatpush2.msra.mxu0 %v3682
    %4109 = vmatprep.subr.mxu0 0.0
    %4110 = vmatpush2.msra.mxu0 %v3681
    %4111 = vmatprep.subr.mxu0 0.0
    %4112 = vmatpush2.msra.mxu0 %v3680
    %4113 = vmatprep.subr.mxu0 0.0
    %4114 = vmatpush2.msra.mxu0 %v3679
    %4115 = vmatprep.subr.mxu0 0.0
    %4116 = vmatpush2.msra.mxu0 %v3678
    %4117 = vmatprep.subr.mxu0 0.0
    %4118 = vmatpush2.msra.mxu0 %v3677
    %4119 = vmatprep.mubr.f32.mxu0 %v3970
    %4120 = vmatmul.mubr.f32.gmra.mxu0 %v3962
    %v4121 = vpop.f32.mrf.mxu0
    %v4122 = vadd.f32 %v3948, %v4121
    %v4123 = vpop.f32.mrf.mxu0
    %4124 = vdwg.mxu0
    %4125 = vmatprep.subr.mxu0 0.0
    %4126 = vmatpush1.msra.mxu0 %v3708
    %4127 = vmatprep.subr.mxu0 0.0
    %4128 = vmatpush1.msra.mxu0 %v3707
    %4129 = vmatprep.subr.mxu0 0.0
    %4130 = vmatpush1.msra.mxu0 %v3706
    %4131 = vmatprep.subr.mxu0 0.0
    %4132 = vmatpush1.msra.mxu0 %v3705
    %4133 = vmatprep.subr.mxu0 0.0
    %4134 = vmatpush1.msra.mxu0 %v3704
    %4135 = vmatprep.subr.mxu0 0.0
    %4136 = vmatpush1.msra.mxu0 %v3703
    %4137 = vmatprep.subr.mxu0 0.0
    %4138 = vmatpush1.msra.mxu0 %v3702
    %4139 = vmatprep.subr.mxu0 0.0
    %4140 = vmatpush1.msra.mxu0 %v3701
    %4141 = vmatprep.subr.mxu0 0.0
    %4142 = vmatpush1.msra.mxu0 %v3700
    %4143 = vmatprep.subr.mxu0 0.0
    %4144 = vmatpush1.msra.mxu0 %v3699
    %4145 = vmatprep.subr.mxu0 0.0
    %4146 = vmatpush1.msra.mxu0 %v3698
    %4147 = vmatprep.subr.mxu0 0.0
    %4148 = vmatpush1.msra.mxu0 %v3697
    %4149 = vmatprep.subr.mxu0 0.0
    %4150 = vmatpush1.msra.mxu0 %v3696
    %4151 = vmatprep.subr.mxu0 0.0
    %4152 = vmatpush1.msra.mxu0 %v3695
    %4153 = vmatprep.subr.mxu0 0.0
    %4154 = vmatpush1.msra.mxu0 %v3694
    %4155 = vmatprep.subr.mxu0 0.0
    %4156 = vmatpush1.msra.mxu0 %v3693
    %4157 = vmatprep.subr.mxu0 0.0
    %4158 = vmatpush2.msra.mxu0 %v3724
    %4159 = vmatprep.subr.mxu0 0.0
    %4160 = vmatpush2.msra.mxu0 %v3723
    %4161 = vmatprep.subr.mxu0 0.0
    %4162 = vmatpush2.msra.mxu0 %v3722
    %4163 = vmatprep.subr.mxu0 0.0
    %4164 = vmatpush2.msra.mxu0 %v3721
    %4165 = vmatprep.subr.mxu0 0.0
    %4166 = vmatpush2.msra.mxu0 %v3720
    %4167 = vmatprep.subr.mxu0 0.0
    %4168 = vmatpush2.msra.mxu0 %v3719
    %4169 = vmatprep.subr.mxu0 0.0
    %4170 = vmatpush2.msra.mxu0 %v3718
    %4171 = vmatprep.subr.mxu0 0.0
    %4172 = vmatpush2.msra.mxu0 %v3717
    %4173 = vmatprep.subr.mxu0 0.0
    %4174 = vmatpush2.msra.mxu0 %v3716
    %4175 = vmatprep.subr.mxu0 0.0
    %4176 = vmatpush2.msra.mxu0 %v3715
    %4177 = vmatprep.subr.mxu0 0.0
    %4178 = vmatpush2.msra.mxu0 %v3714
    %4179 = vmatprep.subr.mxu0 0.0
    %4180 = vmatpush2.msra.mxu0 %v3713
    %4181 = vmatprep.subr.mxu0 0.0
    %4182 = vmatpush2.msra.mxu0 %v3712
    %4183 = vmatprep.subr.mxu0 0.0
    %4184 = vmatpush2.msra.mxu0 %v3711
    %4185 = vmatprep.subr.mxu0 0.0
    %4186 = vmatpush2.msra.mxu0 %v3710
    %4187 = vmatprep.subr.mxu0 0.0
    %4188 = vmatpush2.msra.mxu0 %v3709
    %4189 = vmatprep.mubr.f32.mxu0 %v3971
    %4190 = vmatmul.mubr.f32.gmra.mxu0 %v3969
    %v4191 = vpop.f32.mrf.mxu0
    %v4192 = vadd.f32 %v4122, %v4191
    %v4193 = vpop.f32.mrf.mxu0
    %4194 = vdwg.mxu0
    %4195 = vmatprep.subr.mxu0 0.0
    %4196 = vmatpush1.msra.mxu0 %v3740
    %4197 = vmatprep.subr.mxu0 0.0
    %4198 = vmatpush1.msra.mxu0 %v3739
    %4199 = vmatprep.subr.mxu0 0.0
    %4200 = vmatpush1.msra.mxu0 %v3738
    %4201 = vmatprep.subr.mxu0 0.0
    %4202 = vmatpush1.msra.mxu0 %v3737
    %4203 = vmatprep.subr.mxu0 0.0
    %4204 = vmatpush1.msra.mxu0 %v3736
    %4205 = vmatprep.subr.mxu0 0.0
    %4206 = vmatpush1.msra.mxu0 %v3735
    %4207 = vmatprep.subr.mxu0 0.0
    %4208 = vmatpush1.msra.mxu0 %v3734
    %4209 = vmatprep.subr.mxu0 0.0
    %4210 = vmatpush1.msra.mxu0 %v3733
    %4211 = vmatprep.subr.mxu0 0.0
    %4212 = vmatpush1.msra.mxu0 %v3732
    %4213 = vmatprep.subr.mxu0 0.0
    %4214 = vmatpush1.msra.mxu0 %v3731
    %4215 = vmatprep.subr.mxu0 0.0
    %4216 = vmatpush1.msra.mxu0 %v3730
    %4217 = vmatprep.subr.mxu0 0.0
    %4218 = vmatpush1.msra.mxu0 %v3729
    %4219 = vmatprep.subr.mxu0 0.0
    %4220 = vmatpush1.msra.mxu0 %v3728
    %4221 = vmatprep.subr.mxu0 0.0
    %4222 = vmatpush1.msra.mxu0 %v3727
    %4223 = vmatprep.subr.mxu0 0.0
    %4224 = vmatpush1.msra.mxu0 %v3726
    %4225 = vmatprep.subr.mxu0 0.0
    %4226 = vmatpush1.msra.mxu0 %v3725
    %4227 = vmatprep.subr.mxu0 0.0
    %4228 = vmatpush2.msra.mxu0 %v3756
    %4229 = vmatprep.subr.mxu0 0.0
    %4230 = vmatpush2.msra.mxu0 %v3755
    %4231 = vmatprep.subr.mxu0 0.0
    %4232 = vmatpush2.msra.mxu0 %v3754
    %4233 = vmatprep.subr.mxu0 0.0
    %4234 = vmatpush2.msra.mxu0 %v3753
    %4235 = vmatprep.subr.mxu0 0.0
    %4236 = vmatpush2.msra.mxu0 %v3752
    %4237 = vmatprep.subr.mxu0 0.0
    %4238 = vmatpush2.msra.mxu0 %v3751
    %4239 = vmatprep.subr.mxu0 0.0
    %4240 = vmatpush2.msra.mxu0 %v3750
    %4241 = vmatprep.subr.mxu0 0.0
    %4242 = vmatpush2.msra.mxu0 %v3749
    %4243 = vmatprep.subr.mxu0 0.0
    %4244 = vmatpush2.msra.mxu0 %v3748
    %4245 = vmatprep.subr.mxu0 0.0
    %4246 = vmatpush2.msra.mxu0 %v3747
    %4247 = vmatprep.subr.mxu0 0.0
    %4248 = vmatpush2.msra.mxu0 %v3746
    %4249 = vmatprep.subr.mxu0 0.0
    %4250 = vmatpush2.msra.mxu0 %v3745
    %4251 = vmatprep.subr.mxu0 0.0
    %4252 = vmatpush2.msra.mxu0 %v3744
    %4253 = vmatprep.subr.mxu0 0.0
    %4254 = vmatpush2.msra.mxu0 %v3743
    %4255 = vmatprep.subr.mxu0 0.0
    %4256 = vmatpush2.msra.mxu0 %v3742
    %4257 = vmatprep.subr.mxu0 0.0
    %4258 = vmatpush2.msra.mxu0 %v3741
    %4259 = vmatprep.mubr.f32.mxu0 %v3987
    %4260 = vmatmul.mubr.f32.gmra.mxu0 %v3979
    %v4261 = vpop.f32.mrf.mxu0
    %v4262 = vadd.f32 %v4192, %v4261
    %v4263 = vpop.f32.mrf.mxu0
    %4264 = vdwg.mxu0
    %4265 = vmatprep.subr.mxu0 0.0
    %4266 = vmatpush1.msra.mxu0 %v3772
    %4267 = vmatprep.subr.mxu0 0.0
    %4268 = vmatpush1.msra.mxu0 %v3771
    %4269 = vmatprep.subr.mxu0 0.0
    %4270 = vmatpush1.msra.mxu0 %v3770
    %4271 = vmatprep.subr.mxu0 0.0
    %4272 = vmatpush1.msra.mxu0 %v3769
    %4273 = vmatprep.subr.mxu0 0.0
    %4274 = vmatpush1.msra.mxu0 %v3768
    %4275 = vmatprep.subr.mxu0 0.0
    %4276 = vmatpush1.msra.mxu0 %v3767
    %4277 = vmatprep.subr.mxu0 0.0
    %4278 = vmatpush1.msra.mxu0 %v3766
    %4279 = vmatprep.subr.mxu0 0.0
    %4280 = vmatpush1.msra.mxu0 %v3765
    %4281 = vmatprep.subr.mxu0 0.0
    %4282 = vmatpush1.msra.mxu0 %v3764
    %4283 = vmatprep.subr.mxu0 0.0
    %4284 = vmatpush1.msra.mxu0 %v3763
    %4285 = vmatprep.subr.mxu0 0.0
    %4286 = vmatpush1.msra.mxu0 %v3762
    %4287 = vmatprep.subr.mxu0 0.0
    %4288 = vmatpush1.msra.mxu0 %v3761
    %4289 = vmatprep.subr.mxu0 0.0
    %4290 = vmatpush1.msra.mxu0 %v3760
    %4291 = vmatprep.subr.mxu0 0.0
    %4292 = vmatpush1.msra.mxu0 %v3759
    %4293 = vmatprep.subr.mxu0 0.0
    %4294 = vmatpush1.msra.mxu0 %v3758
    %4295 = vmatprep.subr.mxu0 0.0
    %4296 = vmatpush1.msra.mxu0 %v3757
    %4297 = vmatprep.subr.mxu0 0.0
    %4298 = vmatpush2.msra.mxu0 %v3788
    %4299 = vmatprep.subr.mxu0 0.0
    %4300 = vmatpush2.msra.mxu0 %v3787
    %4301 = vmatprep.subr.mxu0 0.0
    %4302 = vmatpush2.msra.mxu0 %v3786
    %4303 = vmatprep.subr.mxu0 0.0
    %4304 = vmatpush2.msra.mxu0 %v3785
    %4305 = vmatprep.subr.mxu0 0.0
    %4306 = vmatpush2.msra.mxu0 %v3784
    %4307 = vmatprep.subr.mxu0 0.0
    %4308 = vmatpush2.msra.mxu0 %v3783
    %4309 = vmatprep.subr.mxu0 0.0
    %4310 = vmatpush2.msra.mxu0 %v3782
    %4311 = vmatprep.subr.mxu0 0.0
    %4312 = vmatpush2.msra.mxu0 %v3781
    %4313 = vmatprep.subr.mxu0 0.0
    %4314 = vmatpush2.msra.mxu0 %v3780
    %4315 = vmatprep.subr.mxu0 0.0
    %4316 = vmatpush2.msra.mxu0 %v3779
    %4317 = vmatprep.subr.mxu0 0.0
    %4318 = vmatpush2.msra.mxu0 %v3778
    %4319 = vmatprep.subr.mxu0 0.0
    %4320 = vmatpush2.msra.mxu0 %v3777
    %4321 = vmatprep.subr.mxu0 0.0
    %4322 = vmatpush2.msra.mxu0 %v3776
    %4323 = vmatprep.subr.mxu0 0.0
    %4324 = vmatpush2.msra.mxu0 %v3775
    %4325 = vmatprep.subr.mxu0 0.0
    %4326 = vmatpush2.msra.mxu0 %v3774
    %4327 = vmatprep.subr.mxu0 0.0
    %4328 = vmatpush2.msra.mxu0 %v3773
    %4329 = vmatprep.mubr.f32.mxu0 %v3988
    %4330 = vmatmul.mubr.f32.gmra.mxu0 %v3986
    %v4331 = vpop.f32.mrf.mxu0
    %v4332 = vadd.f32 %v4262, %v4331
    %v4333 = vpop.f32.mrf.mxu0
    %4334 = vdwg.mxu0
    %4335 = vmatprep.subr.mxu0 0.0
    %4336 = vmatpush1.msra.mxu0 %v3804
    %4337 = vmatprep.subr.mxu0 0.0
    %4338 = vmatpush1.msra.mxu0 %v3803
    %4339 = vmatprep.subr.mxu0 0.0
    %4340 = vmatpush1.msra.mxu0 %v3802
    %4341 = vmatprep.subr.mxu0 0.0
    %4342 = vmatpush1.msra.mxu0 %v3801
    %4343 = vmatprep.subr.mxu0 0.0
    %4344 = vmatpush1.msra.mxu0 %v3800
    %4345 = vmatprep.subr.mxu0 0.0
    %4346 = vmatpush1.msra.mxu0 %v3799
    %4347 = vmatprep.subr.mxu0 0.0
    %4348 = vmatpush1.msra.mxu0 %v3798
    %4349 = vmatprep.subr.mxu0 0.0
    %4350 = vmatpush1.msra.mxu0 %v3797
    %4351 = vmatprep.subr.mxu0 0.0
    %4352 = vmatpush1.msra.mxu0 %v3796
    %4353 = vmatprep.subr.mxu0 0.0
    %4354 = vmatpush1.msra.mxu0 %v3795
    %4355 = vmatprep.subr.mxu0 0.0
    %4356 = vmatpush1.msra.mxu0 %v3794
    %4357 = vmatprep.subr.mxu0 0.0
    %4358 = vmatpush1.msra.mxu0 %v3793
    %4359 = vmatprep.subr.mxu0 0.0
    %4360 = vmatpush1.msra.mxu0 %v3792
    %4361 = vmatprep.subr.mxu0 0.0
    %4362 = vmatpush1.msra.mxu0 %v3791
    %4363 = vmatprep.subr.mxu0 0.0
    %4364 = vmatpush1.msra.mxu0 %v3790
    %4365 = vmatprep.subr.mxu0 0.0
    %4366 = vmatpush1.msra.mxu0 %v3789
    %4367 = vmatprep.subr.mxu0 0.0
    %4368 = vmatpush2.msra.mxu0 %v3820
    %4369 = vmatprep.subr.mxu0 0.0
    %4370 = vmatpush2.msra.mxu0 %v3819
    %4371 = vmatprep.subr.mxu0 0.0
    %4372 = vmatpush2.msra.mxu0 %v3818
    %4373 = vmatprep.subr.mxu0 0.0
    %4374 = vmatpush2.msra.mxu0 %v3817
    %4375 = vmatprep.subr.mxu0 0.0
    %4376 = vmatpush2.msra.mxu0 %v3816
    %4377 = vmatprep.subr.mxu0 0.0
    %4378 = vmatpush2.msra.mxu0 %v3815
    %4379 = vmatprep.subr.mxu0 0.0
    %4380 = vmatpush2.msra.mxu0 %v3814
    %4381 = vmatprep.subr.mxu0 0.0
    %4382 = vmatpush2.msra.mxu0 %v3813
    %4383 = vmatprep.subr.mxu0 0.0
    %4384 = vmatpush2.msra.mxu0 %v3812
    %4385 = vmatprep.subr.mxu0 0.0
    %4386 = vmatpush2.msra.mxu0 %v3811
    %4387 = vmatprep.subr.mxu0 0.0
    %4388 = vmatpush2.msra.mxu0 %v3810
    %4389 = vmatprep.subr.mxu0 0.0
    %4390 = vmatpush2.msra.mxu0 %v3809
    %4391 = vmatprep.subr.mxu0 0.0
    %4392 = vmatpush2.msra.mxu0 %v3808
    %4393 = vmatprep.subr.mxu0 0.0
    %4394 = vmatpush2.msra.mxu0 %v3807
    %4395 = vmatprep.subr.mxu0 0.0
    %4396 = vmatpush2.msra.mxu0 %v3806
    %4397 = vmatprep.subr.mxu0 0.0
    %4398 = vmatpush2.msra.mxu0 %v3805
    %4399 = vmatprep.mubr.f32.mxu0 %v4004
    %4400 = vmatmul.mubr.f32.gmra.mxu0 %v3996
    %v4401 = vpop.f32.mrf.mxu0
    %v4402 = vadd.f32 %v4332, %v4401
    %v4403 = vpop.f32.mrf.mxu0
    %4404 = vdwg.mxu0
    %4405 = vmatprep.subr.mxu0 0.0
    %4406 = vmatpush1.msra.mxu0 %v3836
    %4407 = vmatprep.subr.mxu0 0.0
    %4408 = vmatpush1.msra.mxu0 %v3835
    %4409 = vmatprep.subr.mxu0 0.0
    %4410 = vmatpush1.msra.mxu0 %v3834
    %4411 = vmatprep.subr.mxu0 0.0
    %4412 = vmatpush1.msra.mxu0 %v3833
    %4413 = vmatprep.subr.mxu0 0.0
    %4414 = vmatpush1.msra.mxu0 %v3832
    %4415 = vmatprep.subr.mxu0 0.0
    %4416 = vmatpush1.msra.mxu0 %v3831
    %4417 = vmatprep.subr.mxu0 0.0
    %4418 = vmatpush1.msra.mxu0 %v3830
    %4419 = vmatprep.subr.mxu0 0.0
    %4420 = vmatpush1.msra.mxu0 %v3829
    %4421 = vmatprep.subr.mxu0 0.0
    %4422 = vmatpush1.msra.mxu0 %v3828
    %4423 = vmatprep.subr.mxu0 0.0
    %4424 = vmatpush1.msra.mxu0 %v3827
    %4425 = vmatprep.subr.mxu0 0.0
    %4426 = vmatpush1.msra.mxu0 %v3826
    %4427 = vmatprep.subr.mxu0 0.0
    %4428 = vmatpush1.msra.mxu0 %v3825
    %4429 = vmatprep.subr.mxu0 0.0
    %4430 = vmatpush1.msra.mxu0 %v3824
    %4431 = vmatprep.subr.mxu0 0.0
    %4432 = vmatpush1.msra.mxu0 %v3823
    %4433 = vmatprep.subr.mxu0 0.0
    %4434 = vmatpush1.msra.mxu0 %v3822
    %4435 = vmatprep.subr.mxu0 0.0
    %4436 = vmatpush1.msra.mxu0 %v3821
    %4437 = vmatprep.subr.mxu0 0.0
    %4438 = vmatpush2.msra.mxu0 %v3852
    %4439 = vmatprep.subr.mxu0 0.0
    %4440 = vmatpush2.msra.mxu0 %v3851
    %4441 = vmatprep.subr.mxu0 0.0
    %4442 = vmatpush2.msra.mxu0 %v3850
    %4443 = vmatprep.subr.mxu0 0.0
    %4444 = vmatpush2.msra.mxu0 %v3849
    %4445 = vmatprep.subr.mxu0 0.0
    %4446 = vmatpush2.msra.mxu0 %v3848
    %4447 = vmatprep.subr.mxu0 0.0
    %4448 = vmatpush2.msra.mxu0 %v3847
    %4449 = vmatprep.subr.mxu0 0.0
    %4450 = vmatpush2.msra.mxu0 %v3846
    %4451 = vmatprep.subr.mxu0 0.0
    %4452 = vmatpush2.msra.mxu0 %v3845
    %4453 = vmatprep.subr.mxu0 0.0
    %4454 = vmatpush2.msra.mxu0 %v3844
    %4455 = vmatprep.subr.mxu0 0.0
    %4456 = vmatpush2.msra.mxu0 %v3843
    %4457 = vmatprep.subr.mxu0 0.0
    %4458 = vmatpush2.msra.mxu0 %v3842
    %4459 = vmatprep.subr.mxu0 0.0
    %4460 = vmatpush2.msra.mxu0 %v3841
    %4461 = vmatprep.subr.mxu0 0.0
    %4462 = vmatpush2.msra.mxu0 %v3840
    %4463 = vmatprep.subr.mxu0 0.0
    %4464 = vmatpush2.msra.mxu0 %v3839
    %4465 = vmatprep.subr.mxu0 0.0
    %4466 = vmatpush2.msra.mxu0 %v3838
    %4467 = vmatprep.subr.mxu0 0.0
    %4468 = vmatpush2.msra.mxu0 %v3837
    %4469 = vmatprep.mubr.f32.mxu0 %v4005
    %4470 = vmatmul.mubr.f32.gmra.mxu0 %v4003
    %v4471 = vpop.f32.mrf.mxu0
    %v4472 = vadd.f32 %v4402, %v4471
    %v4473 = vpop.f32.mrf.mxu0
    %4474 = vdwg.mxu0
    %4475 = vmatprep.subr.mxu0 0.0
    %4476 = vmatpush1.msra.mxu0 %v3868
    %4477 = vmatprep.subr.mxu0 0.0
    %4478 = vmatpush1.msra.mxu0 %v3867
    %4479 = vmatprep.subr.mxu0 0.0
    %4480 = vmatpush1.msra.mxu0 %v3866
    %4481 = vmatprep.subr.mxu0 0.0
    %4482 = vmatpush1.msra.mxu0 %v3865
    %4483 = vmatprep.subr.mxu0 0.0
    %4484 = vmatpush1.msra.mxu0 %v3864
    %4485 = vmatprep.subr.mxu0 0.0
    %4486 = vmatpush1.msra.mxu0 %v3863
    %4487 = vmatprep.subr.mxu0 0.0
    %4488 = vmatpush1.msra.mxu0 %v3862
    %4489 = vmatprep.subr.mxu0 0.0
    %4490 = vmatpush1.msra.mxu0 %v3861
    %4491 = vmatprep.subr.mxu0 0.0
    %4492 = vmatpush1.msra.mxu0 %v3860
    %4493 = vmatprep.subr.mxu0 0.0
    %4494 = vmatpush1.msra.mxu0 %v3859
    %4495 = vmatprep.subr.mxu0 0.0
    %4496 = vmatpush1.msra.mxu0 %v3858
    %4497 = vmatprep.subr.mxu0 0.0
    %4498 = vmatpush1.msra.mxu0 %v3857
    %4499 = vmatprep.subr.mxu0 0.0
    %4500 = vmatpush1.msra.mxu0 %v3856
    %4501 = vmatprep.subr.mxu0 0.0
    %4502 = vmatpush1.msra.mxu0 %v3855
    %4503 = vmatprep.subr.mxu0 0.0
    %4504 = vmatpush1.msra.mxu0 %v3854
    %4505 = vmatprep.subr.mxu0 0.0
    %4506 = vmatpush1.msra.mxu0 %v3853
    %4507 = vmatprep.subr.mxu0 0.0
    %4508 = vmatpush2.msra.mxu0 %v3884
    %4509 = vmatprep.subr.mxu0 0.0
    %4510 = vmatpush2.msra.mxu0 %v3883
    %4511 = vmatprep.subr.mxu0 0.0
    %4512 = vmatpush2.msra.mxu0 %v3882
    %4513 = vmatprep.subr.mxu0 0.0
    %4514 = vmatpush2.msra.mxu0 %v3881
    %4515 = vmatprep.subr.mxu0 0.0
    %4516 = vmatpush2.msra.mxu0 %v3880
    %4517 = vmatprep.subr.mxu0 0.0
    %4518 = vmatpush2.msra.mxu0 %v3879
    %4519 = vmatprep.subr.mxu0 0.0
    %4520 = vmatpush2.msra.mxu0 %v3878
    %4521 = vmatprep.subr.mxu0 0.0
    %4522 = vmatpush2.msra.mxu0 %v3877
    %4523 = vmatprep.subr.mxu0 0.0
    %4524 = vmatpush2.msra.mxu0 %v3876
    %4525 = vmatprep.subr.mxu0 0.0
    %4526 = vmatpush2.msra.mxu0 %v3875
    %4527 = vmatprep.subr.mxu0 0.0
    %4528 = vmatpush2.msra.mxu0 %v3874
    %4529 = vmatprep.subr.mxu0 0.0
    %4530 = vmatpush2.msra.mxu0 %v3873
    %4531 = vmatprep.subr.mxu0 0.0
    %4532 = vmatpush2.msra.mxu0 %v3872
    %4533 = vmatprep.subr.mxu0 0.0
    %4534 = vmatpush2.msra.mxu0 %v3871
    %4535 = vmatprep.subr.mxu0 0.0
    %4536 = vmatpush2.msra.mxu0 %v3870
    %4537 = vmatprep.subr.mxu0 0.0
    %4538 = vmatpush2.msra.mxu0 %v3869
    %4539 = vmatprep.mubr.f32.mxu0 %v4021
    %4540 = vmatmul.mubr.f32.gmra.mxu0 %v4013
    %v4541 = vpop.f32.mrf.mxu0
    %v4542 = vadd.f32 %v4472, %v4541
    %v4543 = vpop.f32.mrf.mxu0
    %4544 = vdwg.mxu0
    %4545 = vmatprep.subr.mxu0 0.0
    %4546 = vmatpush1.msra.mxu0 %v3900
    %4547 = vmatprep.subr.mxu0 0.0
    %4548 = vmatpush1.msra.mxu0 %v3899
    %4549 = vmatprep.subr.mxu0 0.0
    %4550 = vmatpush1.msra.mxu0 %v3898
    %4551 = vmatprep.subr.mxu0 0.0
    %4552 = vmatpush1.msra.mxu0 %v3897
    %4553 = vmatprep.subr.mxu0 0.0
    %4554 = vmatpush1.msra.mxu0 %v3896
    %4555 = vmatprep.subr.mxu0 0.0
    %4556 = vmatpush1.msra.mxu0 %v3895
    %4557 = vmatprep.subr.mxu0 0.0
    %4558 = vmatpush1.msra.mxu0 %v3894
    %4559 = vmatprep.subr.mxu0 0.0
    %4560 = vmatpush1.msra.mxu0 %v3893
    %4561 = vmatprep.subr.mxu0 0.0
    %4562 = vmatpush1.msra.mxu0 %v3892
    %4563 = vmatprep.subr.mxu0 0.0
    %4564 = vmatpush1.msra.mxu0 %v3891
    %4565 = vmatprep.subr.mxu0 0.0
    %4566 = vmatpush1.msra.mxu0 %v3890
    %4567 = vmatprep.subr.mxu0 0.0
    %4568 = vmatpush1.msra.mxu0 %v3889
    %4569 = vmatprep.subr.mxu0 0.0
    %4570 = vmatpush1.msra.mxu0 %v3888
    %4571 = vmatprep.subr.mxu0 0.0
    %4572 = vmatpush1.msra.mxu0 %v3887
    %4573 = vmatprep.subr.mxu0 0.0
    %4574 = vmatpush1.msra.mxu0 %v3886
    %4575 = vmatprep.subr.mxu0 0.0
    %4576 = vmatpush1.msra.mxu0 %v3885
    %4577 = vmatprep.subr.mxu0 0.0
    %4578 = vmatpush2.msra.mxu0 %v3916
    %4579 = vmatprep.subr.mxu0 0.0
    %4580 = vmatpush2.msra.mxu0 %v3915
    %4581 = vmatprep.subr.mxu0 0.0
    %4582 = vmatpush2.msra.mxu0 %v3914
    %4583 = vmatprep.subr.mxu0 0.0
    %4584 = vmatpush2.msra.mxu0 %v3913
    %4585 = vmatprep.subr.mxu0 0.0
    %4586 = vmatpush2.msra.mxu0 %v3912
    %4587 = vmatprep.subr.mxu0 0.0
    %4588 = vmatpush2.msra.mxu0 %v3911
    %4589 = vmatprep.subr.mxu0 0.0
    %4590 = vmatpush2.msra.mxu0 %v3910
    %4591 = vmatprep.subr.mxu0 0.0
    %4592 = vmatpush2.msra.mxu0 %v3909
    %4593 = vmatprep.subr.mxu0 0.0
    %4594 = vmatpush2.msra.mxu0 %v3908
    %4595 = vmatprep.subr.mxu0 0.0
    %4596 = vmatpush2.msra.mxu0 %v3907
    %4597 = vmatprep.subr.mxu0 0.0
    %4598 = vmatpush2.msra.mxu0 %v3906
    %4599 = vmatprep.subr.mxu0 0.0
    %4600 = vmatpush2.msra.mxu0 %v3905
    %4601 = vmatprep.subr.mxu0 0.0
    %4602 = vmatpush2.msra.mxu0 %v3904
    %4603 = vmatprep.subr.mxu0 0.0
    %4604 = vmatpush2.msra.mxu0 %v3903
    %4605 = vmatprep.subr.mxu0 0.0
    %4606 = vmatpush2.msra.mxu0 %v3902
    %4607 = vmatprep.subr.mxu0 0.0
    %4608 = vmatpush2.msra.mxu0 %v3901
    %4609 = vmatprep.mubr.f32.mxu0 %v4022
    %4610 = vmatmul.mubr.f32.gmra.mxu0 %v4020
    %v4611 = vpop.f32.mrf.mxu0
    %v4612 = vadd.f32 %v4542, %v4611
    %v4613 = vpop.f32.mrf.mxu0
    %4614 = vdwg.mxu0
    %4615 = vmatprep.subr.mxu0 0.0
    %4616 = vmatpush1.msra.mxu0 %v3932
    %4617 = vmatprep.subr.mxu0 0.0
    %4618 = vmatpush1.msra.mxu0 %v3931
    %4619 = vmatprep.subr.mxu0 0.0
    %4620 = vmatpush1.msra.mxu0 %v3930
    %4621 = vmatprep.subr.mxu0 0.0
    %4622 = vmatpush1.msra.mxu0 %v3929
    %4623 = vmatprep.subr.mxu0 0.0
    %4624 = vmatpush1.msra.mxu0 %v3928
    %4625 = vmatprep.subr.mxu0 0.0
    %4626 = vmatpush1.msra.mxu0 %v3927
    %4627 = vmatprep.subr.mxu0 0.0
    %4628 = vmatpush1.msra.mxu0 %v3926
    %4629 = vmatprep.subr.mxu0 0.0
    %4630 = vmatpush1.msra.mxu0 %v3925
    %4631 = vmatprep.subr.mxu0 0.0
    %4632 = vmatpush1.msra.mxu0 %v3924
    %4633 = vmatprep.subr.mxu0 0.0
    %4634 = vmatpush1.msra.mxu0 %v3923
    %4635 = vmatprep.subr.mxu0 0.0
    %4636 = vmatpush1.msra.mxu0 %v3922
    %4637 = vmatprep.subr.mxu0 0.0
    %4638 = vmatpush1.msra.mxu0 %v3921
    %4639 = vmatprep.subr.mxu0 0.0
    %4640 = vmatpush1.msra.mxu0 %v3920
    %4641 = vmatprep.subr.mxu0 0.0
    %4642 = vmatpush1.msra.mxu0 %v3919
    %4643 = vmatprep.subr.mxu0 0.0
    %4644 = vmatpush1.msra.mxu0 %v3918
    %4645 = vmatprep.subr.mxu0 0.0
    %4646 = vmatpush1.msra.mxu0 %v3917
    %4647 = vmatprep.subr.mxu0 0.0
    %4648 = vmatpush2.msra.mxu0 0.0
    %4649 = vmatprep.subr.mxu0 0.0
    %4650 = vmatpush2.msra.mxu0 0.0
    %4651 = vmatprep.subr.mxu0 0.0
    %4652 = vmatpush2.msra.mxu0 0.0
    %4653 = vmatprep.subr.mxu0 0.0
    %4654 = vmatpush2.msra.mxu0 0.0
    %4655 = vmatprep.subr.mxu0 0.0
    %4656 = vmatpush2.msra.mxu0 0.0
    %4657 = vmatprep.subr.mxu0 0.0
    %4658 = vmatpush2.msra.mxu0 0.0
    %4659 = vmatprep.subr.mxu0 0.0
    %4660 = vmatpush2.msra.mxu0 %v4053
    %4661 = vmatprep.subr.mxu0 0.0
    %4662 = vmatpush2.msra.mxu0 %v3941
    %4663 = vmatprep.subr.mxu0 0.0
    %4664 = vmatpush2.msra.mxu0 %v3940
    %4665 = vmatprep.subr.mxu0 0.0
    %4666 = vmatpush2.msra.mxu0 %v3939
    %4667 = vmatprep.subr.mxu0 0.0
    %4668 = vmatpush2.msra.mxu0 %v3938
    %4669 = vmatprep.subr.mxu0 0.0
    %4670 = vmatpush2.msra.mxu0 %v3937
    %4671 = vmatprep.subr.mxu0 0.0
    %4672 = vmatpush2.msra.mxu0 %v3936
    %4673 = vmatprep.subr.mxu0 0.0
    %4674 = vmatpush2.msra.mxu0 %v3935
    %4675 = vmatprep.subr.mxu0 0.0
    %4676 = vmatpush2.msra.mxu0 %v3934
    %4677 = vmatprep.subr.mxu0 0.0
    %4678 = vmatpush2.msra.mxu0 %v3933
    %4679 = vmatprep.mubr.f32.mxu0 %v4049
    %4680 = vmatmul.mubr.f32.gmra.mxu0 %v4029
    %v4681 = vpop.f32.mrf.mxu0
    %v4682 = vadd.f32 %v4612, %v4681
    %v4683 = vpop.f32.mrf.mxu0
    %4684 = vdwg.mxu0
    %v4685 = vmax.f32 %v4682, 0.0
    %vm4686 = vcmask 492544
    %4687 = vst.msk [vmem:[#allocation4] sm:$0x3] %vm4686, %v4685
    // Predicated region
    $region38: #{model1_forward.1} parent=1 // pred_check
      _
    $region39: #{model1_forward.1} parent=1 // pred_check_branch
      %4689 = sbr.rel (0) target = $region41
    $region40: #{model1_forward.1} parent=1 // pred_region
      %s4691 = ssub.s32 32, 32
      %4692 = vsyncadd [#allocation5], %s4691
      %s4694 = sshll.u32 [#allocation4], 4
      %s4695 = int_to_ptr.vmem [resolvable:$true] %s4694
      %4697 = dma.vmem_to_hbm [thread:$0]  %s4695, 32, %s9, [#allocation5]
    $region41: #{model1_forward.1} parent=1 // pred_fallthru
      _
    // Predicated region
    $region42: #{model1_forward.1} parent=1 // pred_check
      _
    $region43: #{model1_forward.1} parent=1 // pred_check_branch
      %4699 = sbr.rel (0) target = $region45
    $region44: #{model1_forward.1} parent=1 // pred_region
      %4700 = dma.done [#allocation5], 32
    $region45: #{model1_forward.1} parent=1 // pred_fallthru
      _
    %4701 = vsyncpa [#allocation5], 1

</llo_original>
